<compile_context>
chip_gen: v7x
topology: tpu7x:2x2x1
jax: 0.10.0
libtpu: 0.0.40
codegen_flags: <defaults>
</compile_context>

<pallas_src>
import functools

import jax
import jax.numpy as jnp
from jax.experimental import pallas as pl
from jax.experimental.pallas import tpu as pltpu

# ----------------------- small BERT config (synthetic) -----------------------
VOCAB = 50          # TODO(synk): toy vocab; a real bert-base vocab needs a DMA-gather embedding
MAX_POS = 16
HIDDEN = 32
N_HEADS = 2
HEAD_DIM = HIDDEN // N_HEADS
FFN = 64
N_LAYERS = 2
N_LABELS = 5
NL_PAD = 128        # classifier padded to a full lane tile -> unmasked stores
LN_EPS = 1e-12
NEG_INF = -1e30     # f32-safe mask value (masking/softmax stay in f32)

_VMEM = pl.BlockSpec(memory_space=pltpu.MemorySpace.VMEM)
_SMEM = pl.BlockSpec(memory_space=pltpu.MemorySpace.SMEM)


# --------------------------- in-kernel math helpers ---------------------------
def _layernorm(x, g, b):
    # var = E[x^2] - mu^2 : both cross-lane reductions issue directly from x.
    mu = jnp.mean(x, axis=-1, keepdims=True)
    var = jnp.maximum(jnp.mean(x * x, axis=-1, keepdims=True) - mu * mu, 0.0)
    return (x - mu) * jax.lax.rsqrt(var + LN_EPS) * g + b


# ------------------------------ fused kernel ----------------------------------
def _bert_fused_kernel(*refs, n_layers, with_loss):
    it = iter(refs)
    text_ref = next(it)                          # (M, 1)  int32
    labels_ref = next(it) if with_loss else None  # (M, 1)  int32
    word_emb_ref = next(it)                      # (VOCAB, H)         bf16
    pos_type_ref = next(it)                      # (M, H)             f32  (host-tiled pos+type)
    attn_bias_ref = next(it)                     # (M, M)             f32  (block-diag mask)
    emb_ln_ref = next(it)                        # (2, 1, H)          f32  [gamma, beta]
    qkv_w_ref = next(it)                         # (L, 3, NH, H, HD)  bf16
    qkv_b_ref = next(it)                         # (L, 3, NH, 1, HD)  f32
    wo_ref = next(it)                            # (L, NH, HD, H)     bf16
    vecs_ref = next(it)                          # (L, 6, 1, H)       f32  [bo,ln1g,ln1b,bo2,ln2g,ln2b]
    wi_ref = next(it)                            # (L, H, FFN)        bf16
    bi_ref = next(it)                            # (L, 1, FFN)        f32
    wo2_ref = next(it)                           # (L, FFN, H)        bf16
    cls_w_ref = next(it)                         # (H, NL_PAD)        bf16
    cls_b_ref = next(it)                         # (1, NL_PAD)        f32
    probs_ref = next(it)                         # out (M, NL_PAD)    f32
    loss_ref = next(it) if with_loss else None   # out (1, 1) SMEM    f32

    M = probs_ref.shape[0]

    # ---- embeddings: one-hot @ table keeps the toy-vocab gather on the MXU ----
    tok = text_ref[...]                                                  # (M, 1)
    vocab_lane = jax.lax.broadcasted_iota(jnp.int32, (M, VOCAB), 1)
    onehot = (tok == vocab_lane).astype(jnp.bfloat16)
    h = jnp.dot(onehot, word_emb_ref[...], preferred_element_type=jnp.float32)
    h = h + pos_type_ref[...]                     # positions + token-type, host-precomputed
    h = _layernorm(h, emb_ln_ref[0], emb_ln_ref[1])

    attn_bias = attn_bias_ref[...]                # keeps batches from attending to each other
    scale = 1.0 / (HEAD_DIM ** 0.5)

    # --------------------------- transformer layers ---------------------------
    for l in range(n_layers):                     # tiny static unroll (2 layers)
        h_b = h.astype(jnp.bfloat16)
        attn_acc = jnp.zeros((M, HIDDEN), jnp.float32)
        for hh in range(N_HEADS):
            # per-head projections straight off h: no lane-axis slicing / concats
            qh = jnp.dot(h_b, qkv_w_ref[l, 0, hh],
                         preferred_element_type=jnp.float32) + qkv_b_ref[l, 0, hh]
            kh = jnp.dot(h_b, qkv_w_ref[l, 1, hh],
                         preferred_element_type=jnp.float32) + qkv_b_ref[l, 1, hh]
            vh = jnp.dot(h_b, qkv_w_ref[l, 2, hh],
                         preferred_element_type=jnp.float32) + qkv_b_ref[l, 2, hh]
            # all-batch scores with block-diagonal bias: no per-batch row slicing
            s = jax.lax.dot_general(
                qh.astype(jnp.bfloat16), kh.astype(jnp.bfloat16),
                (((1,), (1,)), ((), ())),
                preferred_element_type=jnp.float32) * scale + attn_bias
            s = s - jnp.max(s, axis=-1, keepdims=True)
            e = jnp.exp(s)
            p = e * pl.reciprocal(jnp.sum(e, axis=-1, keepdims=True), approx=True)
            ctx_h = jnp.dot(p.astype(jnp.bfloat16), vh.astype(jnp.bfloat16),
                            preferred_element_type=jnp.float32)
            # fold the head concat into the output projection (per-head row block of W_o)
            attn_acc = attn_acc + jnp.dot(ctx_h.astype(jnp.bfloat16), wo_ref[l, hh],
                                          preferred_element_type=jnp.float32)
        attn_out = attn_acc + vecs_ref[l, 0]                               # + b_o
        h = _layernorm(attn_out + h, vecs_ref[l, 1], vecs_ref[l, 2])

        # FFN: wi -> gelu -> wo2 -> residual + LayerNorm
        # TODO(synk): HF bert uses exact erf GELU; tanh approximation used here.
        inter = jax.nn.gelu(
            jnp.dot(h.astype(jnp.bfloat16), wi_ref[l],
                    preferred_element_type=jnp.float32) + bi_ref[l],
            approximate=True)
        ffn_out = jnp.dot(inter.astype(jnp.bfloat16), wo2_ref[l],
                          preferred_element_type=jnp.float32) + vecs_ref[l, 3]
        h = _layernorm(ffn_out + h, vecs_ref[l, 4], vecs_ref[l, 5])

    # ---- classifier + softmax on a full 128-lane tile (unmasked output store) ----
    logits = jnp.dot(h.astype(jnp.bfloat16), cls_w_ref[...],
                     preferred_element_type=jnp.float32) + cls_b_ref[...]
    lane = jax.lax.broadcasted_iota(jnp.int32, (M, NL_PAD), 1)
    logits = jnp.where(lane < N_LABELS, logits, jnp.float32(NEG_INF))
    m = jnp.max(logits, axis=-1, keepdims=True)
    e = jnp.exp(logits - m)
    denom = jnp.sum(e, axis=-1, keepdims=True)
    probs_ref[...] = (e * pl.reciprocal(denom, approx=True)).astype(probs_ref.dtype)

    if with_loss:
        labels = labels_ref[...]                                           # (M, 1)
        onehot_l = (labels == lane).astype(jnp.float32)                    # (M, NL_PAD)
        logp = (logits - m) - jnp.log(denom)                               # exact log for loss
        per_tok = -jnp.sum(onehot_l * logp, axis=-1, keepdims=True)        # (M, 1)
        # TODO(synk): ignore_index / attention-mask weighting of padded tokens not modeled.
        loss_ref[0, 0] = jnp.sum(per_tok) * (1.0 / M)


# ------------------------------ parameters -----------------------------------
def init_params(key, n_layers=N_LAYERS):
    def nrm(k, shape, std=0.02):
        return (std * jax.random.normal(k, shape)).astype(jnp.float32)

    ks = jax.random.split(key, 8)
    ones_h = jnp.ones((n_layers, 1, 1, HIDDEN), jnp.float32)
    zeros_h = jnp.zeros((n_layers, 1, 1, HIDDEN), jnp.float32)
    return {
        "word_emb": nrm(ks[0], (VOCAB, HIDDEN)).astype(jnp.bfloat16),
        "pos_emb": nrm(ks[1], (MAX_POS, HIDDEN)),
        "type_emb": nrm(ks[2], (2, HIDDEN)),
        "emb_ln": jnp.stack([jnp.ones((1, HIDDEN), jnp.float32),
                             jnp.zeros((1, HIDDEN), jnp.float32)]),          # (2,1,H)
        # per-head Q/K/V weights, stacked across layers: (L, 3, NH, H, HD)
        "qkv_w": nrm(ks[3], (n_layers, 3, N_HEADS, HIDDEN, HEAD_DIM)).astype(jnp.bfloat16),
        "qkv_b": jnp.zeros((n_layers, 3, N_HEADS, 1, HEAD_DIM), jnp.float32),
        # per-head row blocks of W_o: (L, NH, HD, H)
        "wo": nrm(ks[4], (n_layers, N_HEADS, HEAD_DIM, HIDDEN)).astype(jnp.bfloat16),
        # bias/LN slab [b_o, ln1_g, ln1_b, b_o2, ln2_g, ln2_b]: (L, 6, 1, H)
        "vecs": jnp.concatenate([zeros_h, ones_h, zeros_h, zeros_h, ones_h, zeros_h], axis=1),
        "wi": nrm(ks[5], (n_layers, HIDDEN, FFN)).astype(jnp.bfloat16),
        "bi": jnp.zeros((n_layers, 1, FFN), jnp.float32),
        "wo2": nrm(ks[6], (n_layers, FFN, HIDDEN)).astype(jnp.bfloat16),
        "cls_w": jnp.pad(nrm(ks[7], (HIDDEN, N_LABELS)),
                         ((0, 0), (0, NL_PAD - N_LABELS))).astype(jnp.bfloat16),
        "cls_b": jnp.zeros((1, NL_PAD), jnp.float32),
    }


# ------------------------------ forward pass ----------------------------------
def bert_token_forward(params, text, labels=None):
    """Mirrors forward_wrapper: (loss, probs) if labels given, else (probs,)."""
    B, S = text.shape
    M = B * S
    with_loss = labels is not None
    n_layers = params["qkv_w"].shape[0]

    text_flat = text.reshape(M, 1).astype(jnp.int32)
    # host-side constants: tiled positional + token-type embedding, block-diag attn bias
    pos_type = (jnp.tile(params["pos_emb"][:S], (B, 1)) +
                params["type_emb"][0:1]).astype(jnp.float32)
    seg = jnp.repeat(jnp.arange(B, dtype=jnp.int32), S)
    attn_bias = jnp.where(seg[:, None] == seg[None, :], 0.0, NEG_INF).astype(jnp.float32)

    weights = [params["word_emb"], pos_type, attn_bias, params["emb_ln"],
               params["qkv_w"], params["qkv_b"], params["wo"], params["vecs"],
               params["wi"], params["bi"], params["wo2"],
               params["cls_w"], params["cls_b"]]

    kern = functools.partial(_bert_fused_kernel,
                             n_layers=n_layers, with_loss=with_loss)
    # TODO(synk): at real bert-base sizes, move to a grid over layers/batch with stacked-weight
    # BlockSpecs (pipelined weight DMA), a DMA-gather embedding, and an explicit
    # pltpu.CompilerParams(vmem_limit_bytes=...); not needed at this toy scale (<200 KB resident).

    if with_loss:
        labels_flat = labels.reshape(M, 1).astype(jnp.int32)
        inputs = [text_flat, labels_flat] + weights
        probs_pad, loss = pl.pallas_call(
            kern,
            out_shape=(jax.ShapeDtypeStruct((M, NL_PAD), jnp.float32),
                       jax.ShapeDtypeStruct((1, 1), jnp.float32)),
            in_specs=[_VMEM] * len(inputs),
            out_specs=(_VMEM, _SMEM),
        )(*inputs)
        probs = probs_pad[:, :N_LABELS].reshape(B, S, N_LABELS)
        return (loss[0, 0], probs)

    inputs = [text_flat] + weights
    probs_pad = pl.pallas_call(
        kern,
        out_shape=jax.ShapeDtypeStruct((M, NL_PAD), jnp.float32),
        in_specs=[_VMEM] * len(inputs),
        out_specs=_VMEM,
    )(*inputs)
    probs = probs_pad[:, :N_LABELS].reshape(B, S, N_LABELS)
    return (probs,)


# ----------------------------------- main -------------------------------------
if __name__ == "__main__":
    key = jax.random.PRNGKey(0)
    kp, kt, kl = jax.random.split(key, 3)

    params = init_params(kp)
    B, S = 2, 8
    text = jax.random.randint(kt, (B, S), 0, VOCAB, dtype=jnp.int32)
    labels = jax.random.randint(kl, (B, S), 0, N_LABELS, dtype=jnp.int32)

    # with labels -> (loss, probs)
    loss, probs = bert_token_forward(params, text, labels)
    # without labels -> (probs,)
    probs_only = bert_token_forward(params, text, None)[0]

    jax.block_until_ready((loss, probs, probs_only))
    assert probs.shape == (B, S, N_LABELS)
    assert probs_only.shape == (B, S, N_LABELS)
    print("KERNEL_OK")
</pallas_src>

<mosaic_0001>
module attributes {stable_mosaic.version = 11 : i64} {
  func.func @_bert_fused_kernel(%arg0: memref<16x1xi32, #tpu.memory_space<vmem>>, %arg1: memref<16x1xi32, #tpu.memory_space<vmem>>, %arg2: memref<50x32xbf16, #tpu.memory_space<vmem>>, %arg3: memref<16x32xf32, #tpu.memory_space<vmem>>, %arg4: memref<16x16xf32, #tpu.memory_space<vmem>>, %arg5: memref<2x1x32xf32, #tpu.memory_space<vmem>>, %arg6: memref<2x3x2x32x16xbf16, #tpu.memory_space<vmem>>, %arg7: memref<2x3x2x1x16xf32, #tpu.memory_space<vmem>>, %arg8: memref<2x2x16x32xbf16, #tpu.memory_space<vmem>>, %arg9: memref<2x6x1x32xf32, #tpu.memory_space<vmem>>, %arg10: memref<2x32x64xbf16, #tpu.memory_space<vmem>>, %arg11: memref<2x1x64xf32, #tpu.memory_space<vmem>>, %arg12: memref<2x64x32xbf16, #tpu.memory_space<vmem>>, %arg13: memref<32x128xbf16, #tpu.memory_space<vmem>>, %arg14: memref<1x128xf32, #tpu.memory_space<vmem>>, %arg15: memref<16x128xf32, #tpu.memory_space<vmem>>, %arg16: memref<1x1xf32, #tpu.memory_space<smem>>) attributes {dimension_semantics = [], scalar_prefetch = 0 : i64, scratch_operands = 0 : i64, tpu.core_type = #tpu.core_type<tc>} {
    %c0 = arith.constant 0 : index
    %c0_0 = arith.constant 0 : index
    %0 = vector.load %arg0[%c0, %c0_0] : memref<16x1xi32, #tpu.memory_space<vmem>>, vector<16x1xi32>
    %1 = tpu.iota {dimensions = array<i32: 1>} : vector<16x50xi32>
    %2 = vector.broadcast %0 : vector<16x1xi32> to vector<16x50xi32>
    %3 = arith.cmpi eq, %2, %1 : vector<16x50xi32>
    %4 = arith.extui %3 : vector<16x50xi1> to vector<16x50xi32>
    %5 = arith.sitofp %4 : vector<16x50xi32> to vector<16x50xf32>
    %6 = arith.truncf %5 : vector<16x50xf32> to vector<16x50xbf16>
    %c0_1 = arith.constant 0 : index
    %c0_2 = arith.constant 0 : index
    %7 = vector.load %arg2[%c0_1, %c0_2] : memref<50x32xbf16, #tpu.memory_space<vmem>>, vector<50x32xbf16>
    %cst = arith.constant dense<0.000000e+00> : vector<16x32xf32>
    %8 = tpu.matmul %6, %7, %cst {dimension_numbers = #tpu.dot_dimension_numbers<[1], [0], [0], [1], [0, 0, 1, 1], [], []>} : vector<16x50xbf16>, vector<50x32xbf16>, vector<16x32xf32> -> vector<16x32xf32>
    %c0_3 = arith.constant 0 : index
    %c0_4 = arith.constant 0 : index
    %9 = vector.load %arg3[%c0_3, %c0_4] : memref<16x32xf32, #tpu.memory_space<vmem>>, vector<16x32xf32>
    %10 = arith.addf %8, %9 : vector<16x32xf32>
    %c0_5 = arith.constant 0 : index
    %c0_6 = arith.constant 0 : index
    %c0_7 = arith.constant 0 : index
    %11 = vector.load %arg5[%c0_5, %c0_6, %c0_7] : memref<2x1x32xf32, #tpu.memory_space<vmem>>, vector<1x1x32xf32>
    %12 = vector.shape_cast %11 : vector<1x1x32xf32> to vector<1x32xf32>
    %c1 = arith.constant 1 : index
    %c0_8 = arith.constant 0 : index
    %c0_9 = arith.constant 0 : index
    %13 = vector.load %arg5[%c1, %c0_8, %c0_9] : memref<2x1x32xf32, #tpu.memory_space<vmem>>, vector<1x1x32xf32>
    %14 = vector.shape_cast %13 : vector<1x1x32xf32> to vector<1x32xf32>
    %cst_10 = arith.constant dense<0.000000e+00> : vector<16xf32>
    %15 = vector.multi_reduction <add>, %10, %cst_10 [1] : vector<16x32xf32> to vector<16xf32>
    %16 = vector.shape_cast %15 : vector<16xf32> to vector<16x1xf32>
    %cst_11 = arith.constant 3.200000e+01 : f32
    %17 = vector.broadcast %cst_11 : f32 to vector<16x1xf32>
    %18 = arith.divf %16, %17 : vector<16x1xf32>
    %19 = arith.mulf %10, %10 : vector<16x32xf32>
    %cst_12 = arith.constant dense<0.000000e+00> : vector<16xf32>
    %20 = vector.multi_reduction <add>, %19, %cst_12 [1] : vector<16x32xf32> to vector<16xf32>
    %21 = vector.shape_cast %20 : vector<16xf32> to vector<16x1xf32>
    %cst_13 = arith.constant 3.200000e+01 : f32
    %22 = vector.broadcast %cst_13 : f32 to vector<16x1xf32>
    %23 = arith.divf %21, %22 : vector<16x1xf32>
    %24 = arith.mulf %18, %18 : vector<16x1xf32>
    %25 = arith.subf %23, %24 : vector<16x1xf32>
    %cst_14 = arith.constant 0.000000e+00 : f32
    %26 = vector.broadcast %cst_14 : f32 to vector<16x1xf32>
    %27 = arith.maximumf %25, %26 : vector<16x1xf32>
    %28 = vector.broadcast %18 : vector<16x1xf32> to vector<16x32xf32>
    %29 = arith.subf %10, %28 : vector<16x32xf32>
    %cst_15 = arith.constant 9.99999996E-13 : f32
    %30 = vector.broadcast %cst_15 : f32 to vector<16x1xf32>
    %31 = arith.addf %27, %30 : vector<16x1xf32>
    %32 = math.rsqrt %31 : vector<16x1xf32>
    %33 = vector.broadcast %32 : vector<16x1xf32> to vector<16x32xf32>
    %34 = arith.mulf %29, %33 : vector<16x32xf32>
    %35 = vector.broadcast %12 : vector<1x32xf32> to vector<16x32xf32>
    %36 = arith.mulf %34, %35 : vector<16x32xf32>
    %37 = vector.broadcast %14 : vector<1x32xf32> to vector<16x32xf32>
    %38 = arith.addf %36, %37 : vector<16x32xf32>
    %c0_16 = arith.constant 0 : index
    %c0_17 = arith.constant 0 : index
    %39 = vector.load %arg4[%c0_16, %c0_17] : memref<16x16xf32, #tpu.memory_space<vmem>>, vector<16x16xf32>
    %40 = arith.truncf %38 : vector<16x32xf32> to vector<16x32xbf16>
    %cst_18 = arith.constant 0.000000e+00 : f32
    %41 = vector.broadcast %cst_18 : f32 to vector<16x32xf32>
    %c0_19 = arith.constant 0 : index
    %c0_20 = arith.constant 0 : index
    %c0_21 = arith.constant 0 : index
    %c0_22 = arith.constant 0 : index
    %c0_23 = arith.constant 0 : index
    %42 = vector.load %arg6[%c0_19, %c0_20, %c0_21, %c0_22, %c0_23] : memref<2x3x2x32x16xbf16, #tpu.memory_space<vmem>>, vector<1x1x1x32x16xbf16>
    %43 = vector.shape_cast %42 : vector<1x1x1x32x16xbf16> to vector<32x16xbf16>
    %cst_24 = arith.constant dense<0.000000e+00> : vector<16x16xf32>
    %44 = tpu.matmul %40, %43, %cst_24 {dimension_numbers = #tpu.dot_dimension_numbers<[1], [0], [0], [1], [0, 0, 1, 1], [], []>} : vector<16x32xbf16>, vector<32x16xbf16>, vector<16x16xf32> -> vector<16x16xf32>
    %c0_25 = arith.constant 0 : index
    %c0_26 = arith.constant 0 : index
    %c0_27 = arith.constant 0 : index
    %c0_28 = arith.constant 0 : index
    %c0_29 = arith.constant 0 : index
    %45 = vector.load %arg7[%c0_25, %c0_26, %c0_27, %c0_28, %c0_29] : memref<2x3x2x1x16xf32, #tpu.memory_space<vmem>>, vector<1x1x1x1x16xf32>
    %46 = vector.shape_cast %45 : vector<1x1x1x1x16xf32> to vector<1x16xf32>
    %47 = vector.broadcast %46 : vector<1x16xf32> to vector<16x16xf32>
    %48 = arith.addf %44, %47 : vector<16x16xf32>
    %c0_30 = arith.constant 0 : index
    %c1_31 = arith.constant 1 : index
    %c0_32 = arith.constant 0 : index
    %c0_33 = arith.constant 0 : index
    %c0_34 = arith.constant 0 : index
    %49 = vector.load %arg6[%c0_30, %c1_31, %c0_32, %c0_33, %c0_34] : memref<2x3x2x32x16xbf16, #tpu.memory_space<vmem>>, vector<1x1x1x32x16xbf16>
    %50 = vector.shape_cast %49 : vector<1x1x1x32x16xbf16> to vector<32x16xbf16>
    %cst_35 = arith.constant dense<0.000000e+00> : vector<16x16xf32>
    %51 = tpu.matmul %40, %50, %cst_35 {dimension_numbers = #tpu.dot_dimension_numbers<[1], [0], [0], [1], [0, 0, 1, 1], [], []>} : vector<16x32xbf16>, vector<32x16xbf16>, vector<16x16xf32> -> vector<16x16xf32>
    %c0_36 = arith.constant 0 : index
    %c1_37 = arith.constant 1 : index
    %c0_38 = arith.constant 0 : index
    %c0_39 = arith.constant 0 : index
    %c0_40 = arith.constant 0 : index
    %52 = vector.load %arg7[%c0_36, %c1_37, %c0_38, %c0_39, %c0_40] : memref<2x3x2x1x16xf32, #tpu.memory_space<vmem>>, vector<1x1x1x1x16xf32>
    %53 = vector.shape_cast %52 : vector<1x1x1x1x16xf32> to vector<1x16xf32>
    %54 = vector.broadcast %53 : vector<1x16xf32> to vector<16x16xf32>
    %55 = arith.addf %51, %54 : vector<16x16xf32>
    %c0_41 = arith.constant 0 : index
    %c2 = arith.constant 2 : index
    %c0_42 = arith.constant 0 : index
    %c0_43 = arith.constant 0 : index
    %c0_44 = arith.constant 0 : index
    %56 = vector.load %arg6[%c0_41, %c2, %c0_42, %c0_43, %c0_44] : memref<2x3x2x32x16xbf16, #tpu.memory_space<vmem>>, vector<1x1x1x32x16xbf16>
    %57 = vector.shape_cast %56 : vector<1x1x1x32x16xbf16> to vector<32x16xbf16>
    %cst_45 = arith.constant dense<0.000000e+00> : vector<16x16xf32>
    %58 = tpu.matmul %40, %57, %cst_45 {dimension_numbers = #tpu.dot_dimension_numbers<[1], [0], [0], [1], [0, 0, 1, 1], [], []>} : vector<16x32xbf16>, vector<32x16xbf16>, vector<16x16xf32> -> vector<16x16xf32>
    %c0_46 = arith.constant 0 : index
    %c2_47 = arith.constant 2 : index
    %c0_48 = arith.constant 0 : index
    %c0_49 = arith.constant 0 : index
    %c0_50 = arith.constant 0 : index
    %59 = vector.load %arg7[%c0_46, %c2_47, %c0_48, %c0_49, %c0_50] : memref<2x3x2x1x16xf32, #tpu.memory_space<vmem>>, vector<1x1x1x1x16xf32>
    %60 = vector.shape_cast %59 : vector<1x1x1x1x16xf32> to vector<1x16xf32>
    %61 = vector.broadcast %60 : vector<1x16xf32> to vector<16x16xf32>
    %62 = arith.addf %58, %61 : vector<16x16xf32>
    %63 = arith.truncf %48 : vector<16x16xf32> to vector<16x16xbf16>
    %64 = arith.truncf %55 : vector<16x16xf32> to vector<16x16xbf16>
    %cst_51 = arith.constant dense<0.000000e+00> : vector<16x16xf32>
    %65 = tpu.matmul %63, %64, %cst_51 {dimension_numbers = #tpu.dot_dimension_numbers<[1], [1], [0], [0], [0, 0, 1, 0], [], []>} : vector<16x16xbf16>, vector<16x16xbf16>, vector<16x16xf32> -> vector<16x16xf32>
    %cst_52 = arith.constant 2.500000e-01 : f32
    %66 = vector.broadcast %cst_52 : f32 to vector<16x16xf32>
    %67 = arith.mulf %65, %66 : vector<16x16xf32>
    %68 = arith.addf %67, %39 : vector<16x16xf32>
    %cst_53 = arith.constant dense<0xFF800000> : vector<16xf32>
    %69 = vector.multi_reduction <maximumf>, %68, %cst_53 [1] : vector<16x16xf32> to vector<16xf32>
    %70 = vector.shape_cast %69 : vector<16xf32> to vector<16x1xf32>
    %71 = vector.broadcast %70 : vector<16x1xf32> to vector<16x16xf32>
    %72 = arith.subf %68, %71 : vector<16x16xf32>
    %73 = math.exp %72 : vector<16x16xf32>
    %cst_54 = arith.constant dense<0.000000e+00> : vector<16xf32>
    %74 = vector.multi_reduction <add>, %73, %cst_54 [1] : vector<16x16xf32> to vector<16xf32>
    %75 = vector.shape_cast %74 : vector<16xf32> to vector<16x1xf32>
    %76 = tpu.reciprocal %75 {approx = true} : vector<16x1xf32> -> vector<16x1xf32>
    %77 = vector.broadcast %76 : vector<16x1xf32> to vector<16x16xf32>
    %78 = arith.mulf %73, %77 : vector<16x16xf32>
    %79 = arith.truncf %78 : vector<16x16xf32> to vector<16x16xbf16>
    %80 = arith.truncf %62 : vector<16x16xf32> to vector<16x16xbf16>
    %cst_55 = arith.constant dense<0.000000e+00> : vector<16x16xf32>
    %81 = tpu.matmul %79, %80, %cst_55 {dimension_numbers = #tpu.dot_dimension_numbers<[1], [0], [0], [1], [0, 0, 1, 1], [], []>} : vector<16x16xbf16>, vector<16x16xbf16>, vector<16x16xf32> -> vector<16x16xf32>
    %82 = arith.truncf %81 : vector<16x16xf32> to vector<16x16xbf16>
    %c0_56 = arith.constant 0 : index
    %c0_57 = arith.constant 0 : index
    %c0_58 = arith.constant 0 : index
    %c0_59 = arith.constant 0 : index
    %83 = vector.load %arg8[%c0_56, %c0_57, %c0_58, %c0_59] : memref<2x2x16x32xbf16, #tpu.memory_space<vmem>>, vector<1x1x16x32xbf16>
    %84 = vector.shape_cast %83 : vector<1x1x16x32xbf16> to vector<16x32xbf16>
    %cst_60 = arith.constant dense<0.000000e+00> : vector<16x32xf32>
    %85 = tpu.matmul %82, %84, %cst_60 {dimension_numbers = #tpu.dot_dimension_numbers<[1], [0], [0], [1], [0, 0, 1, 1], [], []>} : vector<16x16xbf16>, vector<16x32xbf16>, vector<16x32xf32> -> vector<16x32xf32>
    %86 = arith.addf %41, %85 : vector<16x32xf32>
    %c0_61 = arith.constant 0 : index
    %c0_62 = arith.constant 0 : index
    %c1_63 = arith.constant 1 : index
    %c0_64 = arith.constant 0 : index
    %c0_65 = arith.constant 0 : index
    %87 = vector.load %arg6[%c0_61, %c0_62, %c1_63, %c0_64, %c0_65] : memref<2x3x2x32x16xbf16, #tpu.memory_space<vmem>>, vector<1x1x1x32x16xbf16>
    %88 = vector.shape_cast %87 : vector<1x1x1x32x16xbf16> to vector<32x16xbf16>
    %cst_66 = arith.constant dense<0.000000e+00> : vector<16x16xf32>
    %89 = tpu.matmul %40, %88, %cst_66 {dimension_numbers = #tpu.dot_dimension_numbers<[1], [0], [0], [1], [0, 0, 1, 1], [], []>} : vector<16x32xbf16>, vector<32x16xbf16>, vector<16x16xf32> -> vector<16x16xf32>
    %c0_67 = arith.constant 0 : index
    %c0_68 = arith.constant 0 : index
    %c1_69 = arith.constant 1 : index
    %c0_70 = arith.constant 0 : index
    %c0_71 = arith.constant 0 : index
    %90 = vector.load %arg7[%c0_67, %c0_68, %c1_69, %c0_70, %c0_71] : memref<2x3x2x1x16xf32, #tpu.memory_space<vmem>>, vector<1x1x1x1x16xf32>
    %91 = vector.shape_cast %90 : vector<1x1x1x1x16xf32> to vector<1x16xf32>
    %92 = vector.broadcast %91 : vector<1x16xf32> to vector<16x16xf32>
    %93 = arith.addf %89, %92 : vector<16x16xf32>
    %c0_72 = arith.constant 0 : index
    %c1_73 = arith.constant 1 : index
    %c1_74 = arith.constant 1 : index
    %c0_75 = arith.constant 0 : index
    %c0_76 = arith.constant 0 : index
    %94 = vector.load %arg6[%c0_72, %c1_73, %c1_74, %c0_75, %c0_76] : memref<2x3x2x32x16xbf16, #tpu.memory_space<vmem>>, vector<1x1x1x32x16xbf16>
    %95 = vector.shape_cast %94 : vector<1x1x1x32x16xbf16> to vector<32x16xbf16>
    %cst_77 = arith.constant dense<0.000000e+00> : vector<16x16xf32>
    %96 = tpu.matmul %40, %95, %cst_77 {dimension_numbers = #tpu.dot_dimension_numbers<[1], [0], [0], [1], [0, 0, 1, 1], [], []>} : vector<16x32xbf16>, vector<32x16xbf16>, vector<16x16xf32> -> vector<16x16xf32>
    %c0_78 = arith.constant 0 : index
    %c1_79 = arith.constant 1 : index
    %c1_80 = arith.constant 1 : index
    %c0_81 = arith.constant 0 : index
    %c0_82 = arith.constant 0 : index
    %97 = vector.load %arg7[%c0_78, %c1_79, %c1_80, %c0_81, %c0_82] : memref<2x3x2x1x16xf32, #tpu.memory_space<vmem>>, vector<1x1x1x1x16xf32>
    %98 = vector.shape_cast %97 : vector<1x1x1x1x16xf32> to vector<1x16xf32>
    %99 = vector.broadcast %98 : vector<1x16xf32> to vector<16x16xf32>
    %100 = arith.addf %96, %99 : vector<16x16xf32>
    %c0_83 = arith.constant 0 : index
    %c2_84 = arith.constant 2 : index
    %c1_85 = arith.constant 1 : index
    %c0_86 = arith.constant 0 : index
    %c0_87 = arith.constant 0 : index
    %101 = vector.load %arg6[%c0_83, %c2_84, %c1_85, %c0_86, %c0_87] : memref<2x3x2x32x16xbf16, #tpu.memory_space<vmem>>, vector<1x1x1x32x16xbf16>
    %102 = vector.shape_cast %101 : vector<1x1x1x32x16xbf16> to vector<32x16xbf16>
    %cst_88 = arith.constant dense<0.000000e+00> : vector<16x16xf32>
    %103 = tpu.matmul %40, %102, %cst_88 {dimension_numbers = #tpu.dot_dimension_numbers<[1], [0], [0], [1], [0, 0, 1, 1], [], []>} : vector<16x32xbf16>, vector<32x16xbf16>, vector<16x16xf32> -> vector<16x16xf32>
    %c0_89 = arith.constant 0 : index
    %c2_90 = arith.constant 2 : index
    %c1_91 = arith.constant 1 : index
    %c0_92 = arith.constant 0 : index
    %c0_93 = arith.constant 0 : index
    %104 = vector.load %arg7[%c0_89, %c2_90, %c1_91, %c0_92, %c0_93] : memref<2x3x2x1x16xf32, #tpu.memory_space<vmem>>, vector<1x1x1x1x16xf32>
    %105 = vector.shape_cast %104 : vector<1x1x1x1x16xf32> to vector<1x16xf32>
    %106 = vector.broadcast %105 : vector<1x16xf32> to vector<16x16xf32>
    %107 = arith.addf %103, %106 : vector<16x16xf32>
    %108 = arith.truncf %93 : vector<16x16xf32> to vector<16x16xbf16>
    %109 = arith.truncf %100 : vector<16x16xf32> to vector<16x16xbf16>
    %cst_94 = arith.constant dense<0.000000e+00> : vector<16x16xf32>
    %110 = tpu.matmul %108, %109, %cst_94 {dimension_numbers = #tpu.dot_dimension_numbers<[1], [1], [0], [0], [0, 0, 1, 0], [], []>} : vector<16x16xbf16>, vector<16x16xbf16>, vector<16x16xf32> -> vector<16x16xf32>
    %cst_95 = arith.constant 2.500000e-01 : f32
    %111 = vector.broadcast %cst_95 : f32 to vector<16x16xf32>
    %112 = arith.mulf %110, %111 : vector<16x16xf32>
    %113 = arith.addf %112, %39 : vector<16x16xf32>
    %cst_96 = arith.constant dense<0xFF800000> : vector<16xf32>
    %114 = vector.multi_reduction <maximumf>, %113, %cst_96 [1] : vector<16x16xf32> to vector<16xf32>
    %115 = vector.shape_cast %114 : vector<16xf32> to vector<16x1xf32>
    %116 = vector.broadcast %115 : vector<16x1xf32> to vector<16x16xf32>
    %117 = arith.subf %113, %116 : vector<16x16xf32>
    %118 = math.exp %117 : vector<16x16xf32>
    %cst_97 = arith.constant dense<0.000000e+00> : vector<16xf32>
    %119 = vector.multi_reduction <add>, %118, %cst_97 [1] : vector<16x16xf32> to vector<16xf32>
    %120 = vector.shape_cast %119 : vector<16xf32> to vector<16x1xf32>
    %121 = tpu.reciprocal %120 {approx = true} : vector<16x1xf32> -> vector<16x1xf32>
    %122 = vector.broadcast %121 : vector<16x1xf32> to vector<16x16xf32>
    %123 = arith.mulf %118, %122 : vector<16x16xf32>
    %124 = arith.truncf %123 : vector<16x16xf32> to vector<16x16xbf16>
    %125 = arith.truncf %107 : vector<16x16xf32> to vector<16x16xbf16>
    %cst_98 = arith.constant dense<0.000000e+00> : vector<16x16xf32>
    %126 = tpu.matmul %124, %125, %cst_98 {dimension_numbers = #tpu.dot_dimension_numbers<[1], [0], [0], [1], [0, 0, 1, 1], [], []>} : vector<16x16xbf16>, vector<16x16xbf16>, vector<16x16xf32> -> vector<16x16xf32>
    %127 = arith.truncf %126 : vector<16x16xf32> to vector<16x16xbf16>
    %c0_99 = arith.constant 0 : index
    %c1_100 = arith.constant 1 : index
    %c0_101 = arith.constant 0 : index
    %c0_102 = arith.constant 0 : index
    %128 = vector.load %arg8[%c0_99, %c1_100, %c0_101, %c0_102] : memref<2x2x16x32xbf16, #tpu.memory_space<vmem>>, vector<1x1x16x32xbf16>
    %129 = vector.shape_cast %128 : vector<1x1x16x32xbf16> to vector<16x32xbf16>
    %cst_103 = arith.constant dense<0.000000e+00> : vector<16x32xf32>
    %130 = tpu.matmul %127, %129, %cst_103 {dimension_numbers = #tpu.dot_dimension_numbers<[1], [0], [0], [1], [0, 0, 1, 1], [], []>} : vector<16x16xbf16>, vector<16x32xbf16>, vector<16x32xf32> -> vector<16x32xf32>
    %131 = arith.addf %86, %130 : vector<16x32xf32>
    %c0_104 = arith.constant 0 : index
    %c0_105 = arith.constant 0 : index
    %c0_106 = arith.constant 0 : index
    %c0_107 = arith.constant 0 : index
    %132 = vector.load %arg9[%c0_104, %c0_105, %c0_106, %c0_107] : memref<2x6x1x32xf32, #tpu.memory_space<vmem>>, vector<1x1x1x32xf32>
    %133 = vector.shape_cast %132 : vector<1x1x1x32xf32> to vector<1x32xf32>
    %134 = vector.broadcast %133 : vector<1x32xf32> to vector<16x32xf32>
    %135 = arith.addf %131, %134 : vector<16x32xf32>
    %136 = arith.addf %135, %38 : vector<16x32xf32>
    %c0_108 = arith.constant 0 : index
    %c1_109 = arith.constant 1 : index
    %c0_110 = arith.constant 0 : index
    %c0_111 = arith.constant 0 : index
    %137 = vector.load %arg9[%c0_108, %c1_109, %c0_110, %c0_111] : memref<2x6x1x32xf32, #tpu.memory_space<vmem>>, vector<1x1x1x32xf32>
    %138 = vector.shape_cast %137 : vector<1x1x1x32xf32> to vector<1x32xf32>
    %c0_112 = arith.constant 0 : index
    %c2_113 = arith.constant 2 : index
    %c0_114 = arith.constant 0 : index
    %c0_115 = arith.constant 0 : index
    %139 = vector.load %arg9[%c0_112, %c2_113, %c0_114, %c0_115] : memref<2x6x1x32xf32, #tpu.memory_space<vmem>>, vector<1x1x1x32xf32>
    %140 = vector.shape_cast %139 : vector<1x1x1x32xf32> to vector<1x32xf32>
    %cst_116 = arith.constant dense<0.000000e+00> : vector<16xf32>
    %141 = vector.multi_reduction <add>, %136, %cst_116 [1] : vector<16x32xf32> to vector<16xf32>
    %142 = vector.shape_cast %141 : vector<16xf32> to vector<16x1xf32>
    %cst_117 = arith.constant 3.200000e+01 : f32
    %143 = vector.broadcast %cst_117 : f32 to vector<16x1xf32>
    %144 = arith.divf %142, %143 : vector<16x1xf32>
    %145 = arith.mulf %136, %136 : vector<16x32xf32>
    %cst_118 = arith.constant dense<0.000000e+00> : vector<16xf32>
    %146 = vector.multi_reduction <add>, %145, %cst_118 [1] : vector<16x32xf32> to vector<16xf32>
    %147 = vector.shape_cast %146 : vector<16xf32> to vector<16x1xf32>
    %cst_119 = arith.constant 3.200000e+01 : f32
    %148 = vector.broadcast %cst_119 : f32 to vector<16x1xf32>
    %149 = arith.divf %147, %148 : vector<16x1xf32>
    %150 = arith.mulf %144, %144 : vector<16x1xf32>
    %151 = arith.subf %149, %150 : vector<16x1xf32>
    %cst_120 = arith.constant 0.000000e+00 : f32
    %152 = vector.broadcast %cst_120 : f32 to vector<16x1xf32>
    %153 = arith.maximumf %151, %152 : vector<16x1xf32>
    %154 = vector.broadcast %144 : vector<16x1xf32> to vector<16x32xf32>
    %155 = arith.subf %136, %154 : vector<16x32xf32>
    %cst_121 = arith.constant 9.99999996E-13 : f32
    %156 = vector.broadcast %cst_121 : f32 to vector<16x1xf32>
    %157 = arith.addf %153, %156 : vector<16x1xf32>
    %158 = math.rsqrt %157 : vector<16x1xf32>
    %159 = vector.broadcast %158 : vector<16x1xf32> to vector<16x32xf32>
    %160 = arith.mulf %155, %159 : vector<16x32xf32>
    %161 = vector.broadcast %138 : vector<1x32xf32> to vector<16x32xf32>
    %162 = arith.mulf %160, %161 : vector<16x32xf32>
    %163 = vector.broadcast %140 : vector<1x32xf32> to vector<16x32xf32>
    %164 = arith.addf %162, %163 : vector<16x32xf32>
    %165 = arith.truncf %164 : vector<16x32xf32> to vector<16x32xbf16>
    %c0_122 = arith.constant 0 : index
    %c0_123 = arith.constant 0 : index
    %c0_124 = arith.constant 0 : index
    %166 = vector.load %arg10[%c0_122, %c0_123, %c0_124] : memref<2x32x64xbf16, #tpu.memory_space<vmem>>, vector<1x32x64xbf16>
    %167 = vector.shape_cast %166 : vector<1x32x64xbf16> to vector<32x64xbf16>
    %cst_125 = arith.constant dense<0.000000e+00> : vector<16x64xf32>
    %168 = tpu.matmul %165, %167, %cst_125 {dimension_numbers = #tpu.dot_dimension_numbers<[1], [0], [0], [1], [0, 0, 1, 1], [], []>} : vector<16x32xbf16>, vector<32x64xbf16>, vector<16x64xf32> -> vector<16x64xf32>
    %c0_126 = arith.constant 0 : index
    %c0_127 = arith.constant 0 : index
    %c0_128 = arith.constant 0 : index
    %169 = vector.load %arg11[%c0_126, %c0_127, %c0_128] : memref<2x1x64xf32, #tpu.memory_space<vmem>>, vector<1x1x64xf32>
    %170 = vector.shape_cast %169 : vector<1x1x64xf32> to vector<1x64xf32>
    %171 = vector.broadcast %170 : vector<1x64xf32> to vector<16x64xf32>
    %172 = arith.addf %168, %171 : vector<16x64xf32>
    %173 = arith.mulf %172, %172 : vector<16x64xf32>
    %174 = arith.mulf %172, %173 : vector<16x64xf32>
    %cst_129 = arith.constant 4.471500e-02 : f32
    %175 = vector.broadcast %cst_129 : f32 to vector<16x64xf32>
    %176 = arith.mulf %175, %174 : vector<16x64xf32>
    %177 = arith.addf %172, %176 : vector<16x64xf32>
    %cst_130 = arith.constant 0.797884583 : f32
    %178 = vector.broadcast %cst_130 : f32 to vector<16x64xf32>
    %179 = arith.mulf %178, %177 : vector<16x64xf32>
    %180 = math.tanh %179 : vector<16x64xf32>
    %cst_131 = arith.constant 1.000000e+00 : f32
    %181 = vector.broadcast %cst_131 : f32 to vector<16x64xf32>
    %182 = arith.addf %181, %180 : vector<16x64xf32>
    %cst_132 = arith.constant 5.000000e-01 : f32
    %183 = vector.broadcast %cst_132 : f32 to vector<16x64xf32>
    %184 = arith.mulf %183, %182 : vector<16x64xf32>
    %185 = arith.mulf %172, %184 : vector<16x64xf32>
    %186 = arith.truncf %185 : vector<16x64xf32> to vector<16x64xbf16>
    %c0_133 = arith.constant 0 : index
    %c0_134 = arith.constant 0 : index
    %c0_135 = arith.constant 0 : index
    %187 = vector.load %arg12[%c0_133, %c0_134, %c0_135] : memref<2x64x32xbf16, #tpu.memory_space<vmem>>, vector<1x64x32xbf16>
    %188 = vector.shape_cast %187 : vector<1x64x32xbf16> to vector<64x32xbf16>
    %cst_136 = arith.constant dense<0.000000e+00> : vector<16x32xf32>
    %189 = tpu.matmul %186, %188, %cst_136 {dimension_numbers = #tpu.dot_dimension_numbers<[1], [0], [0], [1], [0, 0, 1, 1], [], []>} : vector<16x64xbf16>, vector<64x32xbf16>, vector<16x32xf32> -> vector<16x32xf32>
    %c0_137 = arith.constant 0 : index
    %c3 = arith.constant 3 : index
    %c0_138 = arith.constant 0 : index
    %c0_139 = arith.constant 0 : index
    %190 = vector.load %arg9[%c0_137, %c3, %c0_138, %c0_139] : memref<2x6x1x32xf32, #tpu.memory_space<vmem>>, vector<1x1x1x32xf32>
    %191 = vector.shape_cast %190 : vector<1x1x1x32xf32> to vector<1x32xf32>
    %192 = vector.broadcast %191 : vector<1x32xf32> to vector<16x32xf32>
    %193 = arith.addf %189, %192 : vector<16x32xf32>
    %194 = arith.addf %193, %164 : vector<16x32xf32>
    %c0_140 = arith.constant 0 : index
    %c4 = arith.constant 4 : index
    %c0_141 = arith.constant 0 : index
    %c0_142 = arith.constant 0 : index
    %195 = vector.load %arg9[%c0_140, %c4, %c0_141, %c0_142] : memref<2x6x1x32xf32, #tpu.memory_space<vmem>>, vector<1x1x1x32xf32>
    %196 = vector.shape_cast %195 : vector<1x1x1x32xf32> to vector<1x32xf32>
    %c0_143 = arith.constant 0 : index
    %c5 = arith.constant 5 : index
    %c0_144 = arith.constant 0 : index
    %c0_145 = arith.constant 0 : index
    %197 = vector.load %arg9[%c0_143, %c5, %c0_144, %c0_145] : memref<2x6x1x32xf32, #tpu.memory_space<vmem>>, vector<1x1x1x32xf32>
    %198 = vector.shape_cast %197 : vector<1x1x1x32xf32> to vector<1x32xf32>
    %cst_146 = arith.constant dense<0.000000e+00> : vector<16xf32>
    %199 = vector.multi_reduction <add>, %194, %cst_146 [1] : vector<16x32xf32> to vector<16xf32>
    %200 = vector.shape_cast %199 : vector<16xf32> to vector<16x1xf32>
    %cst_147 = arith.constant 3.200000e+01 : f32
    %201 = vector.broadcast %cst_147 : f32 to vector<16x1xf32>
    %202 = arith.divf %200, %201 : vector<16x1xf32>
    %203 = arith.mulf %194, %194 : vector<16x32xf32>
    %cst_148 = arith.constant dense<0.000000e+00> : vector<16xf32>
    %204 = vector.multi_reduction <add>, %203, %cst_148 [1] : vector<16x32xf32> to vector<16xf32>
    %205 = vector.shape_cast %204 : vector<16xf32> to vector<16x1xf32>
    %cst_149 = arith.constant 3.200000e+01 : f32
    %206 = vector.broadcast %cst_149 : f32 to vector<16x1xf32>
    %207 = arith.divf %205, %206 : vector<16x1xf32>
    %208 = arith.mulf %202, %202 : vector<16x1xf32>
    %209 = arith.subf %207, %208 : vector<16x1xf32>
    %cst_150 = arith.constant 0.000000e+00 : f32
    %210 = vector.broadcast %cst_150 : f32 to vector<16x1xf32>
    %211 = arith.maximumf %209, %210 : vector<16x1xf32>
    %212 = vector.broadcast %202 : vector<16x1xf32> to vector<16x32xf32>
    %213 = arith.subf %194, %212 : vector<16x32xf32>
    %cst_151 = arith.constant 9.99999996E-13 : f32
    %214 = vector.broadcast %cst_151 : f32 to vector<16x1xf32>
    %215 = arith.addf %211, %214 : vector<16x1xf32>
    %216 = math.rsqrt %215 : vector<16x1xf32>
    %217 = vector.broadcast %216 : vector<16x1xf32> to vector<16x32xf32>
    %218 = arith.mulf %213, %217 : vector<16x32xf32>
    %219 = vector.broadcast %196 : vector<1x32xf32> to vector<16x32xf32>
    %220 = arith.mulf %218, %219 : vector<16x32xf32>
    %221 = vector.broadcast %198 : vector<1x32xf32> to vector<16x32xf32>
    %222 = arith.addf %220, %221 : vector<16x32xf32>
    %223 = arith.truncf %222 : vector<16x32xf32> to vector<16x32xbf16>
    %cst_152 = arith.constant 0.000000e+00 : f32
    %224 = vector.broadcast %cst_152 : f32 to vector<16x32xf32>
    %c1_153 = arith.constant 1 : index
    %c0_154 = arith.constant 0 : index
    %c0_155 = arith.constant 0 : index
    %c0_156 = arith.constant 0 : index
    %c0_157 = arith.constant 0 : index
    %225 = vector.load %arg6[%c1_153, %c0_154, %c0_155, %c0_156, %c0_157] : memref<2x3x2x32x16xbf16, #tpu.memory_space<vmem>>, vector<1x1x1x32x16xbf16>
    %226 = vector.shape_cast %225 : vector<1x1x1x32x16xbf16> to vector<32x16xbf16>
    %cst_158 = arith.constant dense<0.000000e+00> : vector<16x16xf32>
    %227 = tpu.matmul %223, %226, %cst_158 {dimension_numbers = #tpu.dot_dimension_numbers<[1], [0], [0], [1], [0, 0, 1, 1], [], []>} : vector<16x32xbf16>, vector<32x16xbf16>, vector<16x16xf32> -> vector<16x16xf32>
    %c1_159 = arith.constant 1 : index
    %c0_160 = arith.constant 0 : index
    %c0_161 = arith.constant 0 : index
    %c0_162 = arith.constant 0 : index
    %c0_163 = arith.constant 0 : index
    %228 = vector.load %arg7[%c1_159, %c0_160, %c0_161, %c0_162, %c0_163] : memref<2x3x2x1x16xf32, #tpu.memory_space<vmem>>, vector<1x1x1x1x16xf32>
    %229 = vector.shape_cast %228 : vector<1x1x1x1x16xf32> to vector<1x16xf32>
    %230 = vector.broadcast %229 : vector<1x16xf32> to vector<16x16xf32>
    %231 = arith.addf %227, %230 : vector<16x16xf32>
    %c1_164 = arith.constant 1 : index
    %c1_165 = arith.constant 1 : index
    %c0_166 = arith.constant 0 : index
    %c0_167 = arith.constant 0 : index
    %c0_168 = arith.constant 0 : index
    %232 = vector.load %arg6[%c1_164, %c1_165, %c0_166, %c0_167, %c0_168] : memref<2x3x2x32x16xbf16, #tpu.memory_space<vmem>>, vector<1x1x1x32x16xbf16>
    %233 = vector.shape_cast %232 : vector<1x1x1x32x16xbf16> to vector<32x16xbf16>
    %cst_169 = arith.constant dense<0.000000e+00> : vector<16x16xf32>
    %234 = tpu.matmul %223, %233, %cst_169 {dimension_numbers = #tpu.dot_dimension_numbers<[1], [0], [0], [1], [0, 0, 1, 1], [], []>} : vector<16x32xbf16>, vector<32x16xbf16>, vector<16x16xf32> -> vector<16x16xf32>
    %c1_170 = arith.constant 1 : index
    %c1_171 = arith.constant 1 : index
    %c0_172 = arith.constant 0 : index
    %c0_173 = arith.constant 0 : index
    %c0_174 = arith.constant 0 : index
    %235 = vector.load %arg7[%c1_170, %c1_171, %c0_172, %c0_173, %c0_174] : memref<2x3x2x1x16xf32, #tpu.memory_space<vmem>>, vector<1x1x1x1x16xf32>
    %236 = vector.shape_cast %235 : vector<1x1x1x1x16xf32> to vector<1x16xf32>
    %237 = vector.broadcast %236 : vector<1x16xf32> to vector<16x16xf32>
    %238 = arith.addf %234, %237 : vector<16x16xf32>
    %c1_175 = arith.constant 1 : index
    %c2_176 = arith.constant 2 : index
    %c0_177 = arith.constant 0 : index
    %c0_178 = arith.constant 0 : index
    %c0_179 = arith.constant 0 : index
    %239 = vector.load %arg6[%c1_175, %c2_176, %c0_177, %c0_178, %c0_179] : memref<2x3x2x32x16xbf16, #tpu.memory_space<vmem>>, vector<1x1x1x32x16xbf16>
    %240 = vector.shape_cast %239 : vector<1x1x1x32x16xbf16> to vector<32x16xbf16>
    %cst_180 = arith.constant dense<0.000000e+00> : vector<16x16xf32>
    %241 = tpu.matmul %223, %240, %cst_180 {dimension_numbers = #tpu.dot_dimension_numbers<[1], [0], [0], [1], [0, 0, 1, 1], [], []>} : vector<16x32xbf16>, vector<32x16xbf16>, vector<16x16xf32> -> vector<16x16xf32>
    %c1_181 = arith.constant 1 : index
    %c2_182 = arith.constant 2 : index
    %c0_183 = arith.constant 0 : index
    %c0_184 = arith.constant 0 : index
    %c0_185 = arith.constant 0 : index
    %242 = vector.load %arg7[%c1_181, %c2_182, %c0_183, %c0_184, %c0_185] : memref<2x3x2x1x16xf32, #tpu.memory_space<vmem>>, vector<1x1x1x1x16xf32>
    %243 = vector.shape_cast %242 : vector<1x1x1x1x16xf32> to vector<1x16xf32>
    %244 = vector.broadcast %243 : vector<1x16xf32> to vector<16x16xf32>
    %245 = arith.addf %241, %244 : vector<16x16xf32>
    %246 = arith.truncf %231 : vector<16x16xf32> to vector<16x16xbf16>
    %247 = arith.truncf %238 : vector<16x16xf32> to vector<16x16xbf16>
    %cst_186 = arith.constant dense<0.000000e+00> : vector<16x16xf32>
    %248 = tpu.matmul %246, %247, %cst_186 {dimension_numbers = #tpu.dot_dimension_numbers<[1], [1], [0], [0], [0, 0, 1, 0], [], []>} : vector<16x16xbf16>, vector<16x16xbf16>, vector<16x16xf32> -> vector<16x16xf32>
    %cst_187 = arith.constant 2.500000e-01 : f32
    %249 = vector.broadcast %cst_187 : f32 to vector<16x16xf32>
    %250 = arith.mulf %248, %249 : vector<16x16xf32>
    %251 = arith.addf %250, %39 : vector<16x16xf32>
    %cst_188 = arith.constant dense<0xFF800000> : vector<16xf32>
    %252 = vector.multi_reduction <maximumf>, %251, %cst_188 [1] : vector<16x16xf32> to vector<16xf32>
    %253 = vector.shape_cast %252 : vector<16xf32> to vector<16x1xf32>
    %254 = vector.broadcast %253 : vector<16x1xf32> to vector<16x16xf32>
    %255 = arith.subf %251, %254 : vector<16x16xf32>
    %256 = math.exp %255 : vector<16x16xf32>
    %cst_189 = arith.constant dense<0.000000e+00> : vector<16xf32>
    %257 = vector.multi_reduction <add>, %256, %cst_189 [1] : vector<16x16xf32> to vector<16xf32>
    %258 = vector.shape_cast %257 : vector<16xf32> to vector<16x1xf32>
    %259 = tpu.reciprocal %258 {approx = true} : vector<16x1xf32> -> vector<16x1xf32>
    %260 = vector.broadcast %259 : vector<16x1xf32> to vector<16x16xf32>
    %261 = arith.mulf %256, %260 : vector<16x16xf32>
    %262 = arith.truncf %261 : vector<16x16xf32> to vector<16x16xbf16>
    %263 = arith.truncf %245 : vector<16x16xf32> to vector<16x16xbf16>
    %cst_190 = arith.constant dense<0.000000e+00> : vector<16x16xf32>
    %264 = tpu.matmul %262, %263, %cst_190 {dimension_numbers = #tpu.dot_dimension_numbers<[1], [0], [0], [1], [0, 0, 1, 1], [], []>} : vector<16x16xbf16>, vector<16x16xbf16>, vector<16x16xf32> -> vector<16x16xf32>
    %265 = arith.truncf %264 : vector<16x16xf32> to vector<16x16xbf16>
    %c1_191 = arith.constant 1 : index
    %c0_192 = arith.constant 0 : index
    %c0_193 = arith.constant 0 : index
    %c0_194 = arith.constant 0 : index
    %266 = vector.load %arg8[%c1_191, %c0_192, %c0_193, %c0_194] : memref<2x2x16x32xbf16, #tpu.memory_space<vmem>>, vector<1x1x16x32xbf16>
    %267 = vector.shape_cast %266 : vector<1x1x16x32xbf16> to vector<16x32xbf16>
    %cst_195 = arith.constant dense<0.000000e+00> : vector<16x32xf32>
    %268 = tpu.matmul %265, %267, %cst_195 {dimension_numbers = #tpu.dot_dimension_numbers<[1], [0], [0], [1], [0, 0, 1, 1], [], []>} : vector<16x16xbf16>, vector<16x32xbf16>, vector<16x32xf32> -> vector<16x32xf32>
    %269 = arith.addf %224, %268 : vector<16x32xf32>
    %c1_196 = arith.constant 1 : index
    %c0_197 = arith.constant 0 : index
    %c1_198 = arith.constant 1 : index
    %c0_199 = arith.constant 0 : index
    %c0_200 = arith.constant 0 : index
    %270 = vector.load %arg6[%c1_196, %c0_197, %c1_198, %c0_199, %c0_200] : memref<2x3x2x32x16xbf16, #tpu.memory_space<vmem>>, vector<1x1x1x32x16xbf16>
    %271 = vector.shape_cast %270 : vector<1x1x1x32x16xbf16> to vector<32x16xbf16>
    %cst_201 = arith.constant dense<0.000000e+00> : vector<16x16xf32>
    %272 = tpu.matmul %223, %271, %cst_201 {dimension_numbers = #tpu.dot_dimension_numbers<[1], [0], [0], [1], [0, 0, 1, 1], [], []>} : vector<16x32xbf16>, vector<32x16xbf16>, vector<16x16xf32> -> vector<16x16xf32>
    %c1_202 = arith.constant 1 : index
    %c0_203 = arith.constant 0 : index
    %c1_204 = arith.constant 1 : index
    %c0_205 = arith.constant 0 : index
    %c0_206 = arith.constant 0 : index
    %273 = vector.load %arg7[%c1_202, %c0_203, %c1_204, %c0_205, %c0_206] : memref<2x3x2x1x16xf32, #tpu.memory_space<vmem>>, vector<1x1x1x1x16xf32>
    %274 = vector.shape_cast %273 : vector<1x1x1x1x16xf32> to vector<1x16xf32>
    %275 = vector.broadcast %274 : vector<1x16xf32> to vector<16x16xf32>
    %276 = arith.addf %272, %275 : vector<16x16xf32>
    %c1_207 = arith.constant 1 : index
    %c1_208 = arith.constant 1 : index
    %c1_209 = arith.constant 1 : index
    %c0_210 = arith.constant 0 : index
    %c0_211 = arith.constant 0 : index
    %277 = vector.load %arg6[%c1_207, %c1_208, %c1_209, %c0_210, %c0_211] : memref<2x3x2x32x16xbf16, #tpu.memory_space<vmem>>, vector<1x1x1x32x16xbf16>
    %278 = vector.shape_cast %277 : vector<1x1x1x32x16xbf16> to vector<32x16xbf16>
    %cst_212 = arith.constant dense<0.000000e+00> : vector<16x16xf32>
    %279 = tpu.matmul %223, %278, %cst_212 {dimension_numbers = #tpu.dot_dimension_numbers<[1], [0], [0], [1], [0, 0, 1, 1], [], []>} : vector<16x32xbf16>, vector<32x16xbf16>, vector<16x16xf32> -> vector<16x16xf32>
    %c1_213 = arith.constant 1 : index
    %c1_214 = arith.constant 1 : index
    %c1_215 = arith.constant 1 : index
    %c0_216 = arith.constant 0 : index
    %c0_217 = arith.constant 0 : index
    %280 = vector.load %arg7[%c1_213, %c1_214, %c1_215, %c0_216, %c0_217] : memref<2x3x2x1x16xf32, #tpu.memory_space<vmem>>, vector<1x1x1x1x16xf32>
    %281 = vector.shape_cast %280 : vector<1x1x1x1x16xf32> to vector<1x16xf32>
    %282 = vector.broadcast %281 : vector<1x16xf32> to vector<16x16xf32>
    %283 = arith.addf %279, %282 : vector<16x16xf32>
    %c1_218 = arith.constant 1 : index
    %c2_219 = arith.constant 2 : index
    %c1_220 = arith.constant 1 : index
    %c0_221 = arith.constant 0 : index
    %c0_222 = arith.constant 0 : index
    %284 = vector.load %arg6[%c1_218, %c2_219, %c1_220, %c0_221, %c0_222] : memref<2x3x2x32x16xbf16, #tpu.memory_space<vmem>>, vector<1x1x1x32x16xbf16>
    %285 = vector.shape_cast %284 : vector<1x1x1x32x16xbf16> to vector<32x16xbf16>
    %cst_223 = arith.constant dense<0.000000e+00> : vector<16x16xf32>
    %286 = tpu.matmul %223, %285, %cst_223 {dimension_numbers = #tpu.dot_dimension_numbers<[1], [0], [0], [1], [0, 0, 1, 1], [], []>} : vector<16x32xbf16>, vector<32x16xbf16>, vector<16x16xf32> -> vector<16x16xf32>
    %c1_224 = arith.constant 1 : index
    %c2_225 = arith.constant 2 : index
    %c1_226 = arith.constant 1 : index
    %c0_227 = arith.constant 0 : index
    %c0_228 = arith.constant 0 : index
    %287 = vector.load %arg7[%c1_224, %c2_225, %c1_226, %c0_227, %c0_228] : memref<2x3x2x1x16xf32, #tpu.memory_space<vmem>>, vector<1x1x1x1x16xf32>
    %288 = vector.shape_cast %287 : vector<1x1x1x1x16xf32> to vector<1x16xf32>
    %289 = vector.broadcast %288 : vector<1x16xf32> to vector<16x16xf32>
    %290 = arith.addf %286, %289 : vector<16x16xf32>
    %291 = arith.truncf %276 : vector<16x16xf32> to vector<16x16xbf16>
    %292 = arith.truncf %283 : vector<16x16xf32> to vector<16x16xbf16>
    %cst_229 = arith.constant dense<0.000000e+00> : vector<16x16xf32>
    %293 = tpu.matmul %291, %292, %cst_229 {dimension_numbers = #tpu.dot_dimension_numbers<[1], [1], [0], [0], [0, 0, 1, 0], [], []>} : vector<16x16xbf16>, vector<16x16xbf16>, vector<16x16xf32> -> vector<16x16xf32>
    %cst_230 = arith.constant 2.500000e-01 : f32
    %294 = vector.broadcast %cst_230 : f32 to vector<16x16xf32>
    %295 = arith.mulf %293, %294 : vector<16x16xf32>
    %296 = arith.addf %295, %39 : vector<16x16xf32>
    %cst_231 = arith.constant dense<0xFF800000> : vector<16xf32>
    %297 = vector.multi_reduction <maximumf>, %296, %cst_231 [1] : vector<16x16xf32> to vector<16xf32>
    %298 = vector.shape_cast %297 : vector<16xf32> to vector<16x1xf32>
    %299 = vector.broadcast %298 : vector<16x1xf32> to vector<16x16xf32>
    %300 = arith.subf %296, %299 : vector<16x16xf32>
    %301 = math.exp %300 : vector<16x16xf32>
    %cst_232 = arith.constant dense<0.000000e+00> : vector<16xf32>
    %302 = vector.multi_reduction <add>, %301, %cst_232 [1] : vector<16x16xf32> to vector<16xf32>
    %303 = vector.shape_cast %302 : vector<16xf32> to vector<16x1xf32>
    %304 = tpu.reciprocal %303 {approx = true} : vector<16x1xf32> -> vector<16x1xf32>
    %305 = vector.broadcast %304 : vector<16x1xf32> to vector<16x16xf32>
    %306 = arith.mulf %301, %305 : vector<16x16xf32>
    %307 = arith.truncf %306 : vector<16x16xf32> to vector<16x16xbf16>
    %308 = arith.truncf %290 : vector<16x16xf32> to vector<16x16xbf16>
    %cst_233 = arith.constant dense<0.000000e+00> : vector<16x16xf32>
    %309 = tpu.matmul %307, %308, %cst_233 {dimension_numbers = #tpu.dot_dimension_numbers<[1], [0], [0], [1], [0, 0, 1, 1], [], []>} : vector<16x16xbf16>, vector<16x16xbf16>, vector<16x16xf32> -> vector<16x16xf32>
    %310 = arith.truncf %309 : vector<16x16xf32> to vector<16x16xbf16>
    %c1_234 = arith.constant 1 : index
    %c1_235 = arith.constant 1 : index
    %c0_236 = arith.constant 0 : index
    %c0_237 = arith.constant 0 : index
    %311 = vector.load %arg8[%c1_234, %c1_235, %c0_236, %c0_237] : memref<2x2x16x32xbf16, #tpu.memory_space<vmem>>, vector<1x1x16x32xbf16>
    %312 = vector.shape_cast %311 : vector<1x1x16x32xbf16> to vector<16x32xbf16>
    %cst_238 = arith.constant dense<0.000000e+00> : vector<16x32xf32>
    %313 = tpu.matmul %310, %312, %cst_238 {dimension_numbers = #tpu.dot_dimension_numbers<[1], [0], [0], [1], [0, 0, 1, 1], [], []>} : vector<16x16xbf16>, vector<16x32xbf16>, vector<16x32xf32> -> vector<16x32xf32>
    %314 = arith.addf %269, %313 : vector<16x32xf32>
    %c1_239 = arith.constant 1 : index
    %c0_240 = arith.constant 0 : index
    %c0_241 = arith.constant 0 : index
    %c0_242 = arith.constant 0 : index
    %315 = vector.load %arg9[%c1_239, %c0_240, %c0_241, %c0_242] : memref<2x6x1x32xf32, #tpu.memory_space<vmem>>, vector<1x1x1x32xf32>
    %316 = vector.shape_cast %315 : vector<1x1x1x32xf32> to vector<1x32xf32>
    %317 = vector.broadcast %316 : vector<1x32xf32> to vector<16x32xf32>
    %318 = arith.addf %314, %317 : vector<16x32xf32>
    %319 = arith.addf %318, %222 : vector<16x32xf32>
    %c1_243 = arith.constant 1 : index
    %c1_244 = arith.constant 1 : index
    %c0_245 = arith.constant 0 : index
    %c0_246 = arith.constant 0 : index
    %320 = vector.load %arg9[%c1_243, %c1_244, %c0_245, %c0_246] : memref<2x6x1x32xf32, #tpu.memory_space<vmem>>, vector<1x1x1x32xf32>
    %321 = vector.shape_cast %320 : vector<1x1x1x32xf32> to vector<1x32xf32>
    %c1_247 = arith.constant 1 : index
    %c2_248 = arith.constant 2 : index
    %c0_249 = arith.constant 0 : index
    %c0_250 = arith.constant 0 : index
    %322 = vector.load %arg9[%c1_247, %c2_248, %c0_249, %c0_250] : memref<2x6x1x32xf32, #tpu.memory_space<vmem>>, vector<1x1x1x32xf32>
    %323 = vector.shape_cast %322 : vector<1x1x1x32xf32> to vector<1x32xf32>
    %cst_251 = arith.constant dense<0.000000e+00> : vector<16xf32>
    %324 = vector.multi_reduction <add>, %319, %cst_251 [1] : vector<16x32xf32> to vector<16xf32>
    %325 = vector.shape_cast %324 : vector<16xf32> to vector<16x1xf32>
    %cst_252 = arith.constant 3.200000e+01 : f32
    %326 = vector.broadcast %cst_252 : f32 to vector<16x1xf32>
    %327 = arith.divf %325, %326 : vector<16x1xf32>
    %328 = arith.mulf %319, %319 : vector<16x32xf32>
    %cst_253 = arith.constant dense<0.000000e+00> : vector<16xf32>
    %329 = vector.multi_reduction <add>, %328, %cst_253 [1] : vector<16x32xf32> to vector<16xf32>
    %330 = vector.shape_cast %329 : vector<16xf32> to vector<16x1xf32>
    %cst_254 = arith.constant 3.200000e+01 : f32
    %331 = vector.broadcast %cst_254 : f32 to vector<16x1xf32>
    %332 = arith.divf %330, %331 : vector<16x1xf32>
    %333 = arith.mulf %327, %327 : vector<16x1xf32>
    %334 = arith.subf %332, %333 : vector<16x1xf32>
    %cst_255 = arith.constant 0.000000e+00 : f32
    %335 = vector.broadcast %cst_255 : f32 to vector<16x1xf32>
    %336 = arith.maximumf %334, %335 : vector<16x1xf32>
    %337 = vector.broadcast %327 : vector<16x1xf32> to vector<16x32xf32>
    %338 = arith.subf %319, %337 : vector<16x32xf32>
    %cst_256 = arith.constant 9.99999996E-13 : f32
    %339 = vector.broadcast %cst_256 : f32 to vector<16x1xf32>
    %340 = arith.addf %336, %339 : vector<16x1xf32>
    %341 = math.rsqrt %340 : vector<16x1xf32>
    %342 = vector.broadcast %341 : vector<16x1xf32> to vector<16x32xf32>
    %343 = arith.mulf %338, %342 : vector<16x32xf32>
    %344 = vector.broadcast %321 : vector<1x32xf32> to vector<16x32xf32>
    %345 = arith.mulf %343, %344 : vector<16x32xf32>
    %346 = vector.broadcast %323 : vector<1x32xf32> to vector<16x32xf32>
    %347 = arith.addf %345, %346 : vector<16x32xf32>
    %348 = arith.truncf %347 : vector<16x32xf32> to vector<16x32xbf16>
    %c1_257 = arith.constant 1 : index
    %c0_258 = arith.constant 0 : index
    %c0_259 = arith.constant 0 : index
    %349 = vector.load %arg10[%c1_257, %c0_258, %c0_259] : memref<2x32x64xbf16, #tpu.memory_space<vmem>>, vector<1x32x64xbf16>
    %350 = vector.shape_cast %349 : vector<1x32x64xbf16> to vector<32x64xbf16>
    %cst_260 = arith.constant dense<0.000000e+00> : vector<16x64xf32>
    %351 = tpu.matmul %348, %350, %cst_260 {dimension_numbers = #tpu.dot_dimension_numbers<[1], [0], [0], [1], [0, 0, 1, 1], [], []>} : vector<16x32xbf16>, vector<32x64xbf16>, vector<16x64xf32> -> vector<16x64xf32>
    %c1_261 = arith.constant 1 : index
    %c0_262 = arith.constant 0 : index
    %c0_263 = arith.constant 0 : index
    %352 = vector.load %arg11[%c1_261, %c0_262, %c0_263] : memref<2x1x64xf32, #tpu.memory_space<vmem>>, vector<1x1x64xf32>
    %353 = vector.shape_cast %352 : vector<1x1x64xf32> to vector<1x64xf32>
    %354 = vector.broadcast %353 : vector<1x64xf32> to vector<16x64xf32>
    %355 = arith.addf %351, %354 : vector<16x64xf32>
    %356 = arith.mulf %355, %355 : vector<16x64xf32>
    %357 = arith.mulf %355, %356 : vector<16x64xf32>
    %cst_264 = arith.constant 4.471500e-02 : f32
    %358 = vector.broadcast %cst_264 : f32 to vector<16x64xf32>
    %359 = arith.mulf %358, %357 : vector<16x64xf32>
    %360 = arith.addf %355, %359 : vector<16x64xf32>
    %cst_265 = arith.constant 0.797884583 : f32
    %361 = vector.broadcast %cst_265 : f32 to vector<16x64xf32>
    %362 = arith.mulf %361, %360 : vector<16x64xf32>
    %363 = math.tanh %362 : vector<16x64xf32>
    %cst_266 = arith.constant 1.000000e+00 : f32
    %364 = vector.broadcast %cst_266 : f32 to vector<16x64xf32>
    %365 = arith.addf %364, %363 : vector<16x64xf32>
    %cst_267 = arith.constant 5.000000e-01 : f32
    %366 = vector.broadcast %cst_267 : f32 to vector<16x64xf32>
    %367 = arith.mulf %366, %365 : vector<16x64xf32>
    %368 = arith.mulf %355, %367 : vector<16x64xf32>
    %369 = arith.truncf %368 : vector<16x64xf32> to vector<16x64xbf16>
    %c1_268 = arith.constant 1 : index
    %c0_269 = arith.constant 0 : index
    %c0_270 = arith.constant 0 : index
    %370 = vector.load %arg12[%c1_268, %c0_269, %c0_270] : memref<2x64x32xbf16, #tpu.memory_space<vmem>>, vector<1x64x32xbf16>
    %371 = vector.shape_cast %370 : vector<1x64x32xbf16> to vector<64x32xbf16>
    %cst_271 = arith.constant dense<0.000000e+00> : vector<16x32xf32>
    %372 = tpu.matmul %369, %371, %cst_271 {dimension_numbers = #tpu.dot_dimension_numbers<[1], [0], [0], [1], [0, 0, 1, 1], [], []>} : vector<16x64xbf16>, vector<64x32xbf16>, vector<16x32xf32> -> vector<16x32xf32>
    %c1_272 = arith.constant 1 : index
    %c3_273 = arith.constant 3 : index
    %c0_274 = arith.constant 0 : index
    %c0_275 = arith.constant 0 : index
    %373 = vector.load %arg9[%c1_272, %c3_273, %c0_274, %c0_275] : memref<2x6x1x32xf32, #tpu.memory_space<vmem>>, vector<1x1x1x32xf32>
    %374 = vector.shape_cast %373 : vector<1x1x1x32xf32> to vector<1x32xf32>
    %375 = vector.broadcast %374 : vector<1x32xf32> to vector<16x32xf32>
    %376 = arith.addf %372, %375 : vector<16x32xf32>
    %377 = arith.addf %376, %347 : vector<16x32xf32>
    %c1_276 = arith.constant 1 : index
    %c4_277 = arith.constant 4 : index
    %c0_278 = arith.constant 0 : index
    %c0_279 = arith.constant 0 : index
    %378 = vector.load %arg9[%c1_276, %c4_277, %c0_278, %c0_279] : memref<2x6x1x32xf32, #tpu.memory_space<vmem>>, vector<1x1x1x32xf32>
    %379 = vector.shape_cast %378 : vector<1x1x1x32xf32> to vector<1x32xf32>
    %c1_280 = arith.constant 1 : index
    %c5_281 = arith.constant 5 : index
    %c0_282 = arith.constant 0 : index
    %c0_283 = arith.constant 0 : index
    %380 = vector.load %arg9[%c1_280, %c5_281, %c0_282, %c0_283] : memref<2x6x1x32xf32, #tpu.memory_space<vmem>>, vector<1x1x1x32xf32>
    %381 = vector.shape_cast %380 : vector<1x1x1x32xf32> to vector<1x32xf32>
    %cst_284 = arith.constant dense<0.000000e+00> : vector<16xf32>
    %382 = vector.multi_reduction <add>, %377, %cst_284 [1] : vector<16x32xf32> to vector<16xf32>
    %383 = vector.shape_cast %382 : vector<16xf32> to vector<16x1xf32>
    %cst_285 = arith.constant 3.200000e+01 : f32
    %384 = vector.broadcast %cst_285 : f32 to vector<16x1xf32>
    %385 = arith.divf %383, %384 : vector<16x1xf32>
    %386 = arith.mulf %377, %377 : vector<16x32xf32>
    %cst_286 = arith.constant dense<0.000000e+00> : vector<16xf32>
    %387 = vector.multi_reduction <add>, %386, %cst_286 [1] : vector<16x32xf32> to vector<16xf32>
    %388 = vector.shape_cast %387 : vector<16xf32> to vector<16x1xf32>
    %cst_287 = arith.constant 3.200000e+01 : f32
    %389 = vector.broadcast %cst_287 : f32 to vector<16x1xf32>
    %390 = arith.divf %388, %389 : vector<16x1xf32>
    %391 = arith.mulf %385, %385 : vector<16x1xf32>
    %392 = arith.subf %390, %391 : vector<16x1xf32>
    %cst_288 = arith.constant 0.000000e+00 : f32
    %393 = vector.broadcast %cst_288 : f32 to vector<16x1xf32>
    %394 = arith.maximumf %392, %393 : vector<16x1xf32>
    %395 = vector.broadcast %385 : vector<16x1xf32> to vector<16x32xf32>
    %396 = arith.subf %377, %395 : vector<16x32xf32>
    %cst_289 = arith.constant 9.99999996E-13 : f32
    %397 = vector.broadcast %cst_289 : f32 to vector<16x1xf32>
    %398 = arith.addf %394, %397 : vector<16x1xf32>
    %399 = math.rsqrt %398 : vector<16x1xf32>
    %400 = vector.broadcast %399 : vector<16x1xf32> to vector<16x32xf32>
    %401 = arith.mulf %396, %400 : vector<16x32xf32>
    %402 = vector.broadcast %379 : vector<1x32xf32> to vector<16x32xf32>
    %403 = arith.mulf %401, %402 : vector<16x32xf32>
    %404 = vector.broadcast %381 : vector<1x32xf32> to vector<16x32xf32>
    %405 = arith.addf %403, %404 : vector<16x32xf32>
    %406 = arith.truncf %405 : vector<16x32xf32> to vector<16x32xbf16>
    %c0_290 = arith.constant 0 : index
    %c0_291 = arith.constant 0 : index
    %407 = vector.load %arg13[%c0_290, %c0_291] : memref<32x128xbf16, #tpu.memory_space<vmem>>, vector<32x128xbf16>
    %cst_292 = arith.constant dense<0.000000e+00> : vector<16x128xf32>
    %408 = tpu.matmul %406, %407, %cst_292 {dimension_numbers = #tpu.dot_dimension_numbers<[1], [0], [0], [1], [0, 0, 1, 1], [], []>} : vector<16x32xbf16>, vector<32x128xbf16>, vector<16x128xf32> -> vector<16x128xf32>
    %c0_293 = arith.constant 0 : index
    %c0_294 = arith.constant 0 : index
    %409 = vector.load %arg14[%c0_293, %c0_294] : memref<1x128xf32, #tpu.memory_space<vmem>>, vector<1x128xf32>
    %410 = vector.broadcast %409 : vector<1x128xf32> to vector<16x128xf32>
    %411 = arith.addf %408, %410 : vector<16x128xf32>
    %412 = tpu.iota {dimensions = array<i32: 1>} : vector<16x128xi32>
    %c5_i32 = arith.constant 5 : i32
    %413 = vector.broadcast %c5_i32 : i32 to vector<16x128xi32>
    %414 = arith.cmpi slt, %412, %413 : vector<16x128xi32>
    %cst_295 = arith.constant -1.000000e+30 : f32
    %415 = vector.broadcast %cst_295 : f32 to vector<16x128xf32>
    %416 = arith.select %414, %411, %415 : vector<16x128xi1>, vector<16x128xf32>
    %cst_296 = arith.constant dense<0xFF800000> : vector<16xf32>
    %417 = vector.multi_reduction <maximumf>, %416, %cst_296 [1] : vector<16x128xf32> to vector<16xf32>
    %418 = vector.shape_cast %417 : vector<16xf32> to vector<16x1xf32>
    %419 = vector.broadcast %418 : vector<16x1xf32> to vector<16x128xf32>
    %420 = arith.subf %416, %419 : vector<16x128xf32>
    %421 = math.exp %420 : vector<16x128xf32>
    %cst_297 = arith.constant dense<0.000000e+00> : vector<16xf32>
    %422 = vector.multi_reduction <add>, %421, %cst_297 [1] : vector<16x128xf32> to vector<16xf32>
    %423 = vector.shape_cast %422 : vector<16xf32> to vector<16x1xf32>
    %424 = tpu.reciprocal %423 {approx = true} : vector<16x1xf32> -> vector<16x1xf32>
    %425 = vector.broadcast %424 : vector<16x1xf32> to vector<16x128xf32>
    %426 = arith.mulf %421, %425 : vector<16x128xf32>
    %c0_298 = arith.constant 0 : index
    %c0_299 = arith.constant 0 : index
    %427 = vector.load %arg15[%c0_298, %c0_299] : memref<16x128xf32, #tpu.memory_space<vmem>>, vector<16x128xf32>
    tpu.vector_store %arg15[%c0_298, %c0_299], %426 {strides = array<i32>} : memref<16x128xf32, #tpu.memory_space<vmem>>, vector<16x128xf32>,
    %c0_300 = arith.constant 0 : index
    %c0_301 = arith.constant 0 : index
    %428 = vector.load %arg1[%c0_300, %c0_301] : memref<16x1xi32, #tpu.memory_space<vmem>>, vector<16x1xi32>
    %429 = vector.broadcast %428 : vector<16x1xi32> to vector<16x128xi32>
    %430 = arith.cmpi eq, %429, %412 : vector<16x128xi32>
    %431 = arith.extui %430 : vector<16x128xi1> to vector<16x128xi32>
    %432 = arith.sitofp %431 : vector<16x128xi32> to vector<16x128xf32>
    %433 = vector.broadcast %418 : vector<16x1xf32> to vector<16x128xf32>
    %434 = arith.subf %416, %433 : vector<16x128xf32>
    %435 = math.log %423 : vector<16x1xf32>
    %436 = vector.broadcast %435 : vector<16x1xf32> to vector<16x128xf32>
    %437 = arith.subf %434, %436 : vector<16x128xf32>
    %438 = arith.mulf %432, %437 : vector<16x128xf32>
    %cst_302 = arith.constant dense<0.000000e+00> : vector<16xf32>
    %439 = vector.multi_reduction <add>, %438, %cst_302 [1] : vector<16x128xf32> to vector<16xf32>
    %440 = vector.shape_cast %439 : vector<16xf32> to vector<16x1xf32>
    %cst_303 = arith.constant 0.000000e+00 : f32
    %441 = vector.broadcast %cst_303 : f32 to vector<16x1xf32>
    %442 = arith.subf %441, %440 : vector<16x1xf32>
    %443 = vector.shape_cast %442 : vector<16x1xf32> to vector<1x16x1xf32>
    %cst_304 = arith.constant dense<0.000000e+00> : vector<1xf32>
    %444 = vector.multi_reduction <add>, %443, %cst_304 [1, 2] : vector<1x16x1xf32> to vector<1xf32>
    %445 = vector.shape_cast %444 : vector<1xf32> to vector<1x1x1xf32>
    %446 = vector.extract %445[0, 0, 0] : f32 from vector<1x1x1xf32>
    %cst_305 = arith.constant 6.250000e-02 : f32
    %447 = arith.mulf %446, %cst_305 : f32
    %c0_306 = arith.constant 0 : index
    %c0_307 = arith.constant 0 : index
    %448 = memref.load %arg16[%c0_306, %c0_307] : memref<1x1xf32, #tpu.memory_space<smem>>
    memref.store %447, %arg16[%c0_306, %c0_307] : memref<1x1xf32, #tpu.memory_space<smem>>
    return
  }
}

</mosaic_0001>

<llo_original>
// kernel: tpu_custom_call.1
$region0: #{tpu_custom_call.1}
  #allocation0 [shape = 'u32[]', space=smem, size = 0x4, offset = 0x4, fixed_abs, tag = 'smem constant byte address 0x4 - core index']
  #allocation1 [shape = 'u32[144,128]{1,0:T(1,128)}', space=vmem, size = 0x12000, scoped, tag = 'internal scratch']
  %s0 = inlined_call_operand.vmem [shape: s32[16,1], index: 0, kind: input, shape index: {}]
  %s1 = inlined_call_operand.vmem [shape: s32[16,1], index: 1, kind: input, shape index: {}]
  %s2 = inlined_call_operand.vmem [shape: bf16[50,32], index: 2, kind: input, shape index: {}]
  %s3 = inlined_call_operand.vmem [shape: f32[16,32], index: 3, kind: input, shape index: {}]
  %s4 = inlined_call_operand.vmem [shape: f32[16,16], index: 4, kind: input, shape index: {}]
  %s5 = inlined_call_operand.vmem [shape: f32[2,1,32], index: 5, kind: input, shape index: {}]
  %s6 = inlined_call_operand.vmem [shape: bf16[2,3,2,32,16], index: 6, kind: input, shape index: {}]
  %s7 = inlined_call_operand.vmem [shape: f32[2,3,2,1,16], index: 7, kind: input, shape index: {}]
  %s8 = inlined_call_operand.vmem [shape: bf16[2,2,16,32], index: 8, kind: input, shape index: {}]
  %s9 = inlined_call_operand.vmem [shape: f32[2,6,1,32], index: 9, kind: input, shape index: {}]
  %s10 = inlined_call_operand.vmem [shape: bf16[2,32,64], index: 10, kind: input, shape index: {}]
  %s11 = inlined_call_operand.vmem [shape: f32[2,1,64], index: 11, kind: input, shape index: {}]
  %s12 = inlined_call_operand.vmem [shape: bf16[2,64,32], index: 12, kind: input, shape index: {}]
  %s13 = inlined_call_operand.vmem [shape: bf16[32,128], index: 13, kind: input, shape index: {}]
  %s14 = inlined_call_operand.vmem [shape: f32[1,128], index: 14, kind: input, shape index: {}]
  %s15 = inlined_call_operand.hbm [shape: f32[16,128], index: 15, kind: output, shape index: {0}]
  %s16 = inlined_call_operand.hbm [shape: f32[1,1], index: 16, kind: output, shape index: {1}]
  %17 = xla_tuple %s15, %s16
  %s18 = sld [smem:[#allocation0]]
  $region78: #{tpu_custom_call.1} parent=0
    _
  %s20 = ssub.s32 1, %s18
  %s21 = scalar_select 0, %s20, %s18
  $region1: #{tpu_custom_call.1} parent=0
    #allocation2 [shape = 'u8[8192]{0}', space=vmem, size = 0x2000, scoped, tag = 'output window, operand 0, single buffered']
    #allocation3 [shape = 's32[1]{0}', space=sflag, size = 0x4, scoped, tag = 'scoped memory for tpu_custom_call.1']
    #allocation4 [shape = 's32[1]{0}', space=sflag, size = 0x4, scoped, tag = 'scoped memory for tpu_custom_call.1']
    #allocation5 [shape = 'u8[512]{0}', space=smem, size = 0x200, scoped, tag = 'output window, operand 1, single buffered']
    %22 = vsyncpa [#allocation3], 0
    %23 = vsyncpa [#allocation4], 0
    // Predicated region
    $region2: #{tpu_custom_call.1} parent=1 // pred_check
      _
    $region3: #{tpu_custom_call.1} parent=1 // pred_check_branch
      %25 = sbr.rel (0) target = $region5
    $region4: #{tpu_custom_call.1} parent=1 // pred_region
      _
    $region5: #{tpu_custom_call.1} parent=1 // pred_fallthru
      _
    // Predicated region
    $region6: #{tpu_custom_call.1} parent=1 // pred_check
      _
    $region7: #{tpu_custom_call.1} parent=1 // pred_check_branch
      %27 = sbr.rel (0) target = $region9
    $region8: #{tpu_custom_call.1} parent=1 // pred_region
      _
    $region9: #{tpu_custom_call.1} parent=1 // pred_fallthru
      _
    // Predicated region
    $region10: #{tpu_custom_call.1} parent=1 // pred_check
      _
    $region11: #{tpu_custom_call.1} parent=1 // pred_check_branch
      %29 = sbr.rel (0) target = $region13
    $region12: #{tpu_custom_call.1} parent=1 // pred_region
      _
    $region13: #{tpu_custom_call.1} parent=1 // pred_fallthru
      _
    // Predicated region
    $region14: #{tpu_custom_call.1} parent=1 // pred_check
      _
    $region15: #{tpu_custom_call.1} parent=1 // pred_check_branch
      %31 = sbr.rel (0) target = $region17
    $region16: #{tpu_custom_call.1} parent=1 // pred_region
      _
    $region17: #{tpu_custom_call.1} parent=1 // pred_fallthru
      _
    // Predicated region
    $region18: #{tpu_custom_call.1} parent=1 // pred_check
      _
    $region19: #{tpu_custom_call.1} parent=1 // pred_check_branch
      %33 = sbr.rel (0) target = $region21
    $region20: #{tpu_custom_call.1} parent=1 // pred_region
      _
    $region21: #{tpu_custom_call.1} parent=1 // pred_fallthru
      _
    // Predicated region
    $region22: #{tpu_custom_call.1} parent=1 // pred_check
      _
    $region23: #{tpu_custom_call.1} parent=1 // pred_check_branch
      %35 = sbr.rel (0) target = $region25
    $region24: #{tpu_custom_call.1} parent=1 // pred_region
      _
    $region25: #{tpu_custom_call.1} parent=1 // pred_fallthru
      _
    // Predicated region
    $region26: #{tpu_custom_call.1} parent=1 // pred_check
      _
    $region27: #{tpu_custom_call.1} parent=1 // pred_check_branch
      %37 = sbr.rel (0) target = $region29
    $region28: #{tpu_custom_call.1} parent=1 // pred_region
      _
    $region29: #{tpu_custom_call.1} parent=1 // pred_fallthru
      _
    // Predicated region
    $region30: #{tpu_custom_call.1} parent=1 // pred_check
      _
    $region31: #{tpu_custom_call.1} parent=1 // pred_check_branch
      %39 = sbr.rel (0) target = $region33
    $region32: #{tpu_custom_call.1} parent=1 // pred_region
      _
    $region33: #{tpu_custom_call.1} parent=1 // pred_fallthru
      _
    // Predicated region
    $region34: #{tpu_custom_call.1} parent=1 // pred_check
      _
    $region35: #{tpu_custom_call.1} parent=1 // pred_check_branch
      %41 = sbr.rel (0) target = $region37
    $region36: #{tpu_custom_call.1} parent=1 // pred_region
      _
    $region37: #{tpu_custom_call.1} parent=1 // pred_fallthru
      _
    // Predicated region
    $region38: #{tpu_custom_call.1} parent=1 // pred_check
      _
    $region39: #{tpu_custom_call.1} parent=1 // pred_check_branch
      %43 = sbr.rel (0) target = $region41
    $region40: #{tpu_custom_call.1} parent=1 // pred_region
      _
    $region41: #{tpu_custom_call.1} parent=1 // pred_fallthru
      _
    // Predicated region
    $region42: #{tpu_custom_call.1} parent=1 // pred_check
      _
    $region43: #{tpu_custom_call.1} parent=1 // pred_check_branch
      %45 = sbr.rel (0) target = $region45
    $region44: #{tpu_custom_call.1} parent=1 // pred_region
      _
    $region45: #{tpu_custom_call.1} parent=1 // pred_fallthru
      _
    // Predicated region
    $region46: #{tpu_custom_call.1} parent=1 // pred_check
      _
    $region47: #{tpu_custom_call.1} parent=1 // pred_check_branch
      %47 = sbr.rel (0) target = $region49
    $region48: #{tpu_custom_call.1} parent=1 // pred_region
      _
    $region49: #{tpu_custom_call.1} parent=1 // pred_fallthru
      _
    // Predicated region
    $region50: #{tpu_custom_call.1} parent=1 // pred_check
      _
    $region51: #{tpu_custom_call.1} parent=1 // pred_check_branch
      %49 = sbr.rel (0) target = $region53
    $region52: #{tpu_custom_call.1} parent=1 // pred_region
      _
    $region53: #{tpu_custom_call.1} parent=1 // pred_fallthru
      _
    // Predicated region
    $region54: #{tpu_custom_call.1} parent=1 // pred_check
      _
    $region55: #{tpu_custom_call.1} parent=1 // pred_check_branch
      %51 = sbr.rel (0) target = $region57
    $region56: #{tpu_custom_call.1} parent=1 // pred_region
      _
    $region57: #{tpu_custom_call.1} parent=1 // pred_fallthru
      _
    // Predicated region
    $region58: #{tpu_custom_call.1} parent=1 // pred_check
      _
    $region59: #{tpu_custom_call.1} parent=1 // pred_check_branch
      %53 = sbr.rel (0) target = $region61
    $region60: #{tpu_custom_call.1} parent=1 // pred_region
      _
    $region61: #{tpu_custom_call.1} parent=1 // pred_fallthru
      _
    %v55 = vld [vmem:[%s0] sm:$0xff]
    %v56 = vld [vmem:[%s0 + $0x8] sm:$0xff]
    %v57 = vlaneseq
    %v58 = vand.u32 %v57, 127
    %59 = vset.pattern.permute.xlu0 0
    %60 = vperm.xlu0 %59, %v55
    %v61 = vpop.permute.xlu0 %60
    %62 = vset.pattern.permute.xlu0 0
    %63 = vperm.xlu0 %62, %v56
    %v64 = vpop.permute.xlu0 %63
    %vm65 = vcmp.eq.s32.totalorder %v61, %v58
    %vm66 = vcmp.eq.s32.totalorder %v64, %v58
    %v67 = vsel %vm65, 1, 0
    %v68 = vsel %vm66, 1, 0
    %v69 = vcvt.s32.f32 %v67
    %v70 = vcvt.s32.f32 %v68
    %v71 = vpack.c.bf16 %v70, %v69
    %v72 = vld [vmem:[%s2] sm:$0xf]
    %v73 = vld [vmem:[%s2 + $0x4] sm:$0xf]
    %v74 = vld [vmem:[%s2 + $0x8] sm:$0xf]
    %v75 = vld [vmem:[%s2 + $0xc] sm:$0xf]
    %v76 = vld [vmem:[%s2 + $0x10] sm:$0xf]
    %v77 = vld [vmem:[%s2 + $0x14] sm:$0xf]
    %v78 = vld [vmem:[%s2 + $0x18] sm:$0x1]
    %v79 = vld [vmem:[%s3] sm:$0xff]
    %v80 = vld [vmem:[%s3 + $0x8] sm:$0xff]
    %v88 = vunpack.c.l.b16 %v72
    %v89 = vunpack.c.l.b16 %v73
    %v90 = vunpack.c.l.b16 %v74
    %v91 = vunpack.c.l.b16 %v75
    %v92 = vunpack.c.l.b16 %v76
    %v93 = vunpack.c.l.b16 %v77
    %v94 = vunpack.c.l.b16 %v78
    %v95 = vpack.c.b16 %v89, %v88
    %v96 = vpack.c.b16 %v91, %v90
    %v97 = vpack.c.b16 %v93, %v92
    %v98 = vpack.c.b16 %v94, %v94
    %vm102 = vcmask 408576
    %v104 = vsel %vm102, %v71, 0
    %vm106 = vcmask 1040384
    %v108 = vsel %vm106, %v98, 0
    %110 = vmatprep.subr.bf16.mxu0 0
    %111 = vmatpush1.bf16.msra.mxu0 %v95
    %112 = vmatprep.subr.bf16.mxu0 0
    %113 = vmatpush1.bf16.msra.mxu0 %v96
    %114 = vmatprep.subr.bf16.mxu0 0
    %115 = vmatpush1.bf16.msra.mxu0 %v97
    %116 = vmatprep.subr.bf16.mxu0 0
    %117 = vmatpush1.bf16.msra.mxu0 %v108
    %118 = vmatprep.subr.bf16.mxu0 0
    %119 = vmatpush1.bf16.msra.mxu0 0
    %120 = vmatprep.subr.bf16.mxu0 0
    %121 = vmatpush1.bf16.msra.mxu0 0
    %122 = vmatprep.subr.bf16.mxu0 0
    %123 = vmatpush1.bf16.msra.mxu0 0
    %124 = vmatprep.subr.bf16.mxu0 0
    %125 = vmatpush1.bf16.msra.mxu0 0
    %126 = vmatprep.subr.bf16.mxu0 0
    %127 = vmatpush1.bf16.msra.mxu0 0
    %128 = vmatprep.subr.bf16.mxu0 0
    %129 = vmatpush1.bf16.msra.mxu0 0
    %130 = vmatprep.subr.bf16.mxu0 0
    %131 = vmatpush1.bf16.msra.mxu0 0
    %132 = vmatprep.subr.bf16.mxu0 0
    %133 = vmatpush1.bf16.msra.mxu0 0
    %134 = vmatprep.subr.bf16.mxu0 0
    %135 = vmatpush1.bf16.msra.mxu0 0
    %136 = vmatprep.subr.bf16.mxu0 0
    %137 = vmatpush1.bf16.msra.mxu0 0
    %138 = vmatprep.subr.bf16.mxu0 0
    %139 = vmatpush1.bf16.msra.mxu0 0
    %140 = vmatprep.subr.bf16.mxu0 0
    %141 = vmatpush1.bf16.msra.mxu0 0
    %142 = vmatprep.mubr.bf16.mxu0 0
    %143 = vmatmul.mubr.bf16.gmra.mrb[0].mxu0 %v104
    %v144 = vpop.f32.mrb[0].mxu0
    %v145 = vadd.f32 %v79, %v144
    %v146 = vpop.f32.mrb[0].mxu0
    %v147 = vpop.f32.mrb[0].mxu0
    %v148 = vadd.f32 %v80, %v147
    %v149 = vpop.f32.mrb[0].mxu0
    %150 = vdwg.mxu0
    %v151 = vld [vmem:[%s5] sm:$0x1]
    %s152 = scalar_lea.vmem %s5, 1
    %v153 = vld [vmem:[%s152] sm:$0x1]
    %vm154 = vcmask 261120
    %v155 = vsel %vm154, %v145, 0.0
    %156 = vadd.xlane.f32.xlu0 %v155
    %v157 = vpop.xlane.xlu0 %156
    %v158 = vsel %vm154, %v148, 0.0
    %159 = vadd.xlane.f32.xlu0 %v158
    %v160 = vpop.xlane.xlu0 %159
    %v161 = vrcp.pop 32.0
    %v162 = vmul.f32 %v157, %v161
    %v163 = vmul.f32 %v160, %v161
    %v164 = vmul.f32 %v145, %v145
    %v165 = vmul.f32 %v148, %v148
    %v166 = vsel %vm154, %v164, 0.0
    %167 = vadd.xlane.f32.xlu0 %v166
    %v168 = vpop.xlane.xlu0 %167
    %v169 = vsel %vm154, %v165, 0.0
    %170 = vadd.xlane.f32.xlu0 %v169
    %v171 = vpop.xlane.xlu0 %170
    %v172 = vmul.f32 %v168, %v161
    %v173 = vmul.f32 %v171, %v161
    %v174 = vmul.f32 %v162, %v162
    %v175 = vmul.f32 %v163, %v163
    %v176 = vsub.f32 %v172, %v174
    %v177 = vsub.f32 %v173, %v175
    %v178 = vmax.f32 %v176, 0.0
    %v179 = vmax.f32 %v177, 0.0
    %v180 = vsub.f32 %v145, %v162
    %v181 = vsub.f32 %v148, %v163
    %v182 = vadd.f32 %v178, 1e-12
    %v183 = vadd.f32 %v179, 1e-12
    %v184 = vrsqrt.pop %v182
    %v185 = vrsqrt.pop %v183
    %v186 = vmul.f32 %v180, %v184
    %v187 = vmul.f32 %v181, %v185
    %v189 = vlaneseq
    %v190 = vshrl.u32 %v189, 7
    %v191 = vsub.s32 0, %v190
    %v192 = vrot.slane %v151, %v191
    %v194 = vmul.f32 %v186, %v192
    %v195 = vmul.f32 %v187, %v192
    %v197 = vlaneseq
    %v198 = vshrl.u32 %v197, 7
    %v199 = vsub.s32 0, %v198
    %v200 = vrot.slane %v153, %v199
    %v202 = vadd.f32 %v194, %v200
    %v203 = vadd.f32 %v195, %v200
    %v204 = vld [vmem:[%s4] sm:$0xff]
    %v205 = vld [vmem:[%s4 + $0x8] sm:$0xff]
    %v206 = vpack.c.bf16 %v203, %v202
    %v207 = vld [vmem:[%s6] sm:$0xf]
    %v208 = vld [vmem:[%s6 + $0x4] sm:$0xf]
    %v209 = vld [vmem:[%s6 + $0x8] sm:$0xf]
    %v210 = vld [vmem:[%s6 + $0xc] sm:$0xf]
    %v211 = vld [vmem:[%s7] sm:$0x1]
    %v213 = vlaneseq
    %v214 = vshrl.u32 %v213, 7
    %v215 = vsub.s32 0, %v214
    %v216 = vrot.slane %v211, %v215
    %v222 = vunpack.c.l.b16 %v207
    %v223 = vunpack.c.l.b16 %v208
    %v224 = vunpack.c.l.b16 %v209
    %v225 = vunpack.c.l.b16 %v210
    %v226 = vpack.c.b16 %v223, %v222
    %v227 = vpack.c.b16 %v225, %v224
    %v231 = vsel %vm154, %v206, 0
    %233 = vmatprep.subr.bf16.mxu0 0
    %234 = vmatpush1.bf16.msra.mxu0 %v226
    %235 = vmatprep.subr.bf16.mxu0 0
    %236 = vmatpush1.bf16.msra.mxu0 %v227
    %237 = vmatprep.subr.bf16.mxu0 0
    %238 = vmatpush1.bf16.msra.mxu0 0
    %239 = vmatprep.subr.bf16.mxu0 0
    %240 = vmatpush1.bf16.msra.mxu0 0
    %241 = vmatprep.subr.bf16.mxu0 0
    %242 = vmatpush1.bf16.msra.mxu0 0
    %243 = vmatprep.subr.bf16.mxu0 0
    %244 = vmatpush1.bf16.msra.mxu0 0
    %245 = vmatprep.subr.bf16.mxu0 0
    %246 = vmatpush1.bf16.msra.mxu0 0
    %247 = vmatprep.subr.bf16.mxu0 0
    %248 = vmatpush1.bf16.msra.mxu0 0
    %249 = vmatprep.subr.bf16.mxu0 0
    %250 = vmatpush1.bf16.msra.mxu0 0
    %251 = vmatprep.subr.bf16.mxu0 0
    %252 = vmatpush1.bf16.msra.mxu0 0
    %253 = vmatprep.subr.bf16.mxu0 0
    %254 = vmatpush1.bf16.msra.mxu0 0
    %255 = vmatprep.subr.bf16.mxu0 0
    %256 = vmatpush1.bf16.msra.mxu0 0
    %257 = vmatprep.subr.bf16.mxu0 0
    %258 = vmatpush1.bf16.msra.mxu0 0
    %259 = vmatprep.subr.bf16.mxu0 0
    %260 = vmatpush1.bf16.msra.mxu0 0
    %261 = vmatprep.subr.bf16.mxu0 0
    %262 = vmatpush1.bf16.msra.mxu0 0
    %263 = vmatprep.subr.bf16.mxu0 0
    %264 = vmatpush1.bf16.msra.mxu0 0
    %265 = vmatprep.mubr.bf16.mxu0 0
    %266 = vmatmul.mubr.bf16.gmra.mrb[0].mxu0 %v231
    %v267 = vpop.f32.mrb[0].mxu0
    %v268 = vadd.f32 %v216, %v267
    %v269 = vpop.f32.mrb[0].mxu0
    %v270 = vpop.f32.mrb[0].mxu0
    %v271 = vadd.f32 %v216, %v270
    %v272 = vpop.f32.mrb[0].mxu0
    %273 = vdwg.mxu0
    %s274 = scalar_lea.vmem %s6, 32
    %v275 = vld [vmem:[%s274] sm:$0xf]
    %v276 = vld [vmem:[%s274 + $0x4] sm:$0xf]
    %v277 = vld [vmem:[%s274 + $0x8] sm:$0xf]
    %v278 = vld [vmem:[%s274 + $0xc] sm:$0xf]
    %s279 = scalar_lea.vmem %s7, 2
    %v280 = vld [vmem:[%s279] sm:$0x1]
    %v282 = vlaneseq
    %v283 = vshrl.u32 %v282, 7
    %v284 = vsub.s32 0, %v283
    %v285 = vrot.slane %v280, %v284
    %v291 = vunpack.c.l.b16 %v275
    %v292 = vunpack.c.l.b16 %v276
    %v293 = vunpack.c.l.b16 %v277
    %v294 = vunpack.c.l.b16 %v278
    %v295 = vpack.c.b16 %v292, %v291
    %v296 = vpack.c.b16 %v294, %v293
    %299 = vmatprep.subr.bf16.mxu0 0
    %300 = vmatpush1.bf16.msra.mxu0 %v295
    %301 = vmatprep.subr.bf16.mxu0 0
    %302 = vmatpush1.bf16.msra.mxu0 %v296
    %303 = vmatprep.subr.bf16.mxu0 0
    %304 = vmatpush1.bf16.msra.mxu0 0
    %305 = vmatprep.subr.bf16.mxu0 0
    %306 = vmatpush1.bf16.msra.mxu0 0
    %307 = vmatprep.subr.bf16.mxu0 0
    %308 = vmatpush1.bf16.msra.mxu0 0
    %309 = vmatprep.subr.bf16.mxu0 0
    %310 = vmatpush1.bf16.msra.mxu0 0
    %311 = vmatprep.subr.bf16.mxu0 0
    %312 = vmatpush1.bf16.msra.mxu0 0
    %313 = vmatprep.subr.bf16.mxu0 0
    %314 = vmatpush1.bf16.msra.mxu0 0
    %315 = vmatprep.subr.bf16.mxu0 0
    %316 = vmatpush1.bf16.msra.mxu0 0
    %317 = vmatprep.subr.bf16.mxu0 0
    %318 = vmatpush1.bf16.msra.mxu0 0
    %319 = vmatprep.subr.bf16.mxu0 0
    %320 = vmatpush1.bf16.msra.mxu0 0
    %321 = vmatprep.subr.bf16.mxu0 0
    %322 = vmatpush1.bf16.msra.mxu0 0
    %323 = vmatprep.subr.bf16.mxu0 0
    %324 = vmatpush1.bf16.msra.mxu0 0
    %325 = vmatprep.subr.bf16.mxu0 0
    %326 = vmatpush1.bf16.msra.mxu0 0
    %327 = vmatprep.subr.bf16.mxu0 0
    %328 = vmatpush1.bf16.msra.mxu0 0
    %329 = vmatprep.subr.bf16.mxu0 0
    %330 = vmatpush1.bf16.msra.mxu0 0
    %331 = vmatprep.mubr.bf16.mxu0 0
    %332 = vmatmul.mubr.bf16.gmra.mrb[0].mxu0 %v231
    %v333 = vpop.f32.mrb[0].mxu0
    %v334 = vadd.f32 %v285, %v333
    %v335 = vpop.f32.mrb[0].mxu0
    %v336 = vpop.f32.mrb[0].mxu0
    %v337 = vadd.f32 %v285, %v336
    %v338 = vpop.f32.mrb[0].mxu0
    %339 = vdwg.mxu0
    %s340 = scalar_lea.vmem %s6, 64
    %v341 = vld [vmem:[%s340] sm:$0xf]
    %v342 = vld [vmem:[%s340 + $0x4] sm:$0xf]
    %v343 = vld [vmem:[%s340 + $0x8] sm:$0xf]
    %v344 = vld [vmem:[%s340 + $0xc] sm:$0xf]
    %s345 = scalar_lea.vmem %s7, 4
    %v346 = vld [vmem:[%s345] sm:$0x1]
    %v348 = vlaneseq
    %v349 = vshrl.u32 %v348, 7
    %v350 = vsub.s32 0, %v349
    %v351 = vrot.slane %v346, %v350
    %v357 = vunpack.c.l.b16 %v341
    %v358 = vunpack.c.l.b16 %v342
    %v359 = vunpack.c.l.b16 %v343
    %v360 = vunpack.c.l.b16 %v344
    %v361 = vpack.c.b16 %v358, %v357
    %v362 = vpack.c.b16 %v360, %v359
    %365 = vmatprep.subr.bf16.mxu0 0
    %366 = vmatpush1.bf16.msra.mxu0 %v361
    %367 = vmatprep.subr.bf16.mxu0 0
    %368 = vmatpush1.bf16.msra.mxu0 %v362
    %369 = vmatprep.subr.bf16.mxu0 0
    %370 = vmatpush1.bf16.msra.mxu0 0
    %371 = vmatprep.subr.bf16.mxu0 0
    %372 = vmatpush1.bf16.msra.mxu0 0
    %373 = vmatprep.subr.bf16.mxu0 0
    %374 = vmatpush1.bf16.msra.mxu0 0
    %375 = vmatprep.subr.bf16.mxu0 0
    %376 = vmatpush1.bf16.msra.mxu0 0
    %377 = vmatprep.subr.bf16.mxu0 0
    %378 = vmatpush1.bf16.msra.mxu0 0
    %379 = vmatprep.subr.bf16.mxu0 0
    %380 = vmatpush1.bf16.msra.mxu0 0
    %381 = vmatprep.subr.bf16.mxu0 0
    %382 = vmatpush1.bf16.msra.mxu0 0
    %383 = vmatprep.subr.bf16.mxu0 0
    %384 = vmatpush1.bf16.msra.mxu0 0
    %385 = vmatprep.subr.bf16.mxu0 0
    %386 = vmatpush1.bf16.msra.mxu0 0
    %387 = vmatprep.subr.bf16.mxu0 0
    %388 = vmatpush1.bf16.msra.mxu0 0
    %389 = vmatprep.subr.bf16.mxu0 0
    %390 = vmatpush1.bf16.msra.mxu0 0
    %391 = vmatprep.subr.bf16.mxu0 0
    %392 = vmatpush1.bf16.msra.mxu0 0
    %393 = vmatprep.subr.bf16.mxu0 0
    %394 = vmatpush1.bf16.msra.mxu0 0
    %395 = vmatprep.subr.bf16.mxu0 0
    %396 = vmatpush1.bf16.msra.mxu0 0
    %397 = vmatprep.mubr.bf16.mxu0 0
    %398 = vmatmul.mubr.bf16.gmra.mrb[0].mxu0 %v231
    %v399 = vpop.f32.mrb[0].mxu0
    %v400 = vadd.f32 %v351, %v399
    %v401 = vpop.f32.mrb[0].mxu0
    %v402 = vpop.f32.mrb[0].mxu0
    %v403 = vadd.f32 %v351, %v402
    %v404 = vpop.f32.mrb[0].mxu0
    %405 = vdwg.mxu0
    %v406 = vpack.c.bf16 %v271, %v268
    %v407 = vpack.c.bf16 %v337, %v334
    %vm408 = vcmask 130048
    %v410 = vsel %vm408, %v406, 0
    %v413 = vsel %vm408, %v407, 0
    %415 = vmatprep.subr.bf16.mxu0 0
    %416 = vmatpush1.bf16.xpose.msra.mxu0 %v413
    %417 = vmatprep.subr.bf16.mxu0 0
    %418 = vmatpush1.bf16.xpose.msra.mxu0 0
    %419 = vmatprep.subr.bf16.mxu0 0
    %420 = vmatpush1.bf16.xpose.msra.mxu0 0
    %421 = vmatprep.subr.bf16.mxu0 0
    %422 = vmatpush1.bf16.xpose.msra.mxu0 0
    %423 = vmatprep.subr.bf16.mxu0 0
    %424 = vmatpush1.bf16.xpose.msra.mxu0 0
    %425 = vmatprep.subr.bf16.mxu0 0
    %426 = vmatpush1.bf16.xpose.msra.mxu0 0
    %427 = vmatprep.subr.bf16.mxu0 0
    %428 = vmatpush1.bf16.xpose.msra.mxu0 0
    %429 = vmatprep.subr.bf16.mxu0 0
    %430 = vmatpush1.bf16.xpose.msra.mxu0 0
    %431 = vmatprep.subr.bf16.mxu0 0
    %432 = vmatpush1.bf16.xpose.msra.mxu0 0
    %433 = vmatprep.subr.bf16.mxu0 0
    %434 = vmatpush1.bf16.xpose.msra.mxu0 0
    %435 = vmatprep.subr.bf16.mxu0 0
    %436 = vmatpush1.bf16.xpose.msra.mxu0 0
    %437 = vmatprep.subr.bf16.mxu0 0
    %438 = vmatpush1.bf16.xpose.msra.mxu0 0
    %439 = vmatprep.subr.bf16.mxu0 0
    %440 = vmatpush1.bf16.xpose.msra.mxu0 0
    %441 = vmatprep.subr.bf16.mxu0 0
    %442 = vmatpush1.bf16.xpose.msra.mxu0 0
    %443 = vmatprep.subr.bf16.mxu0 0
    %444 = vmatpush1.bf16.xpose.msra.mxu0 0
    %445 = vmatprep.subr.bf16.mxu0 0
    %446 = vmatpush1.bf16.xpose.msra.mxu0 0
    %447 = vmatprep.mubr.bf16.mxu0 0
    %448 = vmatmul.mubr.bf16.gmra.mrb[0].mxu0 %v410
    %v449 = vpop.f32.mrb[0].mxu0
    %v450 = vadd.f32 0.0, %v449
    %v451 = vpop.f32.mrb[0].mxu0
    %v452 = vpop.f32.mrb[0].mxu0
    %v453 = vadd.f32 0.0, %v452
    %v454 = vpop.f32.mrb[0].mxu0
    %455 = vdwg.mxu0
    %v456 = vmul.f32 %v450, 0.25
    %v457 = vmul.f32 %v453, 0.25
    %v458 = vadd.f32 %v456, %v204
    %v459 = vadd.f32 %v457, %v205
    %v460 = vsel %vm408, %v458, -inf
    %461 = vmax.xlane.f32.xlu0 %v460
    %v462 = vpop.xlane.xlu0 %461
    %v463 = vsel %vm408, %v459, -inf
    %464 = vmax.xlane.f32.xlu0 %v463
    %v465 = vpop.xlane.xlu0 %464
    %v466 = vsub.f32 %v458, %v462
    %v467 = vsub.f32 %v459, %v465
    %v468 = vmul.f32 %v466, 1.442695
    %v469 = vpow.pop %v468
    %v470 = vmul.f32 %v467, 1.442695
    %v471 = vpow.pop %v470
    %v472 = vsel %vm408, %v469, 0.0
    %473 = vadd.xlane.f32.xlu0 %v472
    %v474 = vpop.xlane.xlu0 %473
    %v475 = vsel %vm408, %v471, 0.0
    %476 = vadd.xlane.f32.xlu0 %v475
    %v477 = vpop.xlane.xlu0 %476
    %v478 = vrcp.pop %v474
    %v479 = vrcp.pop %v477
    %v480 = vmul.f32 %v469, %v478
    %v481 = vmul.f32 %v471, %v479
    %v482 = vpack.c.bf16 %v481, %v480
    %v483 = vpack.c.bf16 %v403, %v400
    %v485 = vsel %vm408, %v482, 0
    %487 = vmatprep.subr.bf16.mxu0 0
    %488 = vmatpush1.bf16.msra.mxu0 %v483
    %489 = vmatprep.subr.bf16.mxu0 0
    %490 = vmatpush1.bf16.msra.mxu0 0
    %491 = vmatprep.subr.bf16.mxu0 0
    %492 = vmatpush1.bf16.msra.mxu0 0
    %493 = vmatprep.subr.bf16.mxu0 0
    %494 = vmatpush1.bf16.msra.mxu0 0
    %495 = vmatprep.subr.bf16.mxu0 0
    %496 = vmatpush1.bf16.msra.mxu0 0
    %497 = vmatprep.subr.bf16.mxu0 0
    %498 = vmatpush1.bf16.msra.mxu0 0
    %499 = vmatprep.subr.bf16.mxu0 0
    %500 = vmatpush1.bf16.msra.mxu0 0
    %501 = vmatprep.subr.bf16.mxu0 0
    %502 = vmatpush1.bf16.msra.mxu0 0
    %503 = vmatprep.subr.bf16.mxu0 0
    %504 = vmatpush1.bf16.msra.mxu0 0
    %505 = vmatprep.subr.bf16.mxu0 0
    %506 = vmatpush1.bf16.msra.mxu0 0
    %507 = vmatprep.subr.bf16.mxu0 0
    %508 = vmatpush1.bf16.msra.mxu0 0
    %509 = vmatprep.subr.bf16.mxu0 0
    %510 = vmatpush1.bf16.msra.mxu0 0
    %511 = vmatprep.subr.bf16.mxu0 0
    %512 = vmatpush1.bf16.msra.mxu0 0
    %513 = vmatprep.subr.bf16.mxu0 0
    %514 = vmatpush1.bf16.msra.mxu0 0
    %515 = vmatprep.subr.bf16.mxu0 0
    %516 = vmatpush1.bf16.msra.mxu0 0
    %517 = vmatprep.subr.bf16.mxu0 0
    %518 = vmatpush1.bf16.msra.mxu0 0
    %519 = vmatprep.mubr.bf16.mxu0 0
    %520 = vmatmul.mubr.bf16.gmra.mrb[0].mxu0 %v485
    %v521 = vpop.f32.mrb[0].mxu0
    %v522 = vadd.f32 0.0, %v521
    %v523 = vpop.f32.mrb[0].mxu0
    %v524 = vpop.f32.mrb[0].mxu0
    %v525 = vadd.f32 0.0, %v524
    %v526 = vpop.f32.mrb[0].mxu0
    %527 = vdwg.mxu0
    %v528 = vpack.c.bf16 %v525, %v522
    %v529 = vld [vmem:[%s8] sm:$0xf]
    %v530 = vld [vmem:[%s8 + $0x4] sm:$0xf]
    %s531 = scalar_lea.vmem %s6, 16
    %v532 = vld [vmem:[%s531] sm:$0xf]
    %v533 = vld [vmem:[%s531 + $0x4] sm:$0xf]
    %v534 = vld [vmem:[%s531 + $0x8] sm:$0xf]
    %v535 = vld [vmem:[%s531 + $0xc] sm:$0xf]
    %s536 = scalar_lea.vmem %s7, 1
    %v537 = vld [vmem:[%s536] sm:$0x1]
    %v539 = vlaneseq
    %v540 = vshrl.u32 %v539, 7
    %v541 = vsub.s32 0, %v540
    %v542 = vrot.slane %v537, %v541
    %v548 = vunpack.c.l.b16 %v532
    %v549 = vunpack.c.l.b16 %v533
    %v550 = vunpack.c.l.b16 %v534
    %v551 = vunpack.c.l.b16 %v535
    %v552 = vpack.c.b16 %v549, %v548
    %v553 = vpack.c.b16 %v551, %v550
    %556 = vmatprep.subr.bf16.mxu0 0
    %557 = vmatpush1.bf16.msra.mxu0 %v552
    %558 = vmatprep.subr.bf16.mxu0 0
    %559 = vmatpush1.bf16.msra.mxu0 %v553
    %560 = vmatprep.subr.bf16.mxu0 0
    %561 = vmatpush1.bf16.msra.mxu0 0
    %562 = vmatprep.subr.bf16.mxu0 0
    %563 = vmatpush1.bf16.msra.mxu0 0
    %564 = vmatprep.subr.bf16.mxu0 0
    %565 = vmatpush1.bf16.msra.mxu0 0
    %566 = vmatprep.subr.bf16.mxu0 0
    %567 = vmatpush1.bf16.msra.mxu0 0
    %568 = vmatprep.subr.bf16.mxu0 0
    %569 = vmatpush1.bf16.msra.mxu0 0
    %570 = vmatprep.subr.bf16.mxu0 0
    %571 = vmatpush1.bf16.msra.mxu0 0
    %572 = vmatprep.subr.bf16.mxu0 0
    %573 = vmatpush1.bf16.msra.mxu0 0
    %574 = vmatprep.subr.bf16.mxu0 0
    %575 = vmatpush1.bf16.msra.mxu0 0
    %576 = vmatprep.subr.bf16.mxu0 0
    %577 = vmatpush1.bf16.msra.mxu0 0
    %578 = vmatprep.subr.bf16.mxu0 0
    %579 = vmatpush1.bf16.msra.mxu0 0
    %580 = vmatprep.subr.bf16.mxu0 0
    %581 = vmatpush1.bf16.msra.mxu0 0
    %582 = vmatprep.subr.bf16.mxu0 0
    %583 = vmatpush1.bf16.msra.mxu0 0
    %584 = vmatprep.subr.bf16.mxu0 0
    %585 = vmatpush1.bf16.msra.mxu0 0
    %586 = vmatprep.subr.bf16.mxu0 0
    %587 = vmatpush1.bf16.msra.mxu0 0
    %588 = vmatprep.mubr.bf16.mxu0 0
    %589 = vmatmul.mubr.bf16.gmra.mrb[0].mxu0 %v231
    %v590 = vpop.f32.mrb[0].mxu0
    %v591 = vadd.f32 %v542, %v590
    %v592 = vpop.f32.mrb[0].mxu0
    %v593 = vpop.f32.mrb[0].mxu0
    %v594 = vadd.f32 %v542, %v593
    %v595 = vpop.f32.mrb[0].mxu0
    %596 = vdwg.mxu0
    %s597 = scalar_lea.vmem %s6, 48
    %v598 = vld [vmem:[%s597] sm:$0xf]
    %v599 = vld [vmem:[%s597 + $0x4] sm:$0xf]
    %v600 = vld [vmem:[%s597 + $0x8] sm:$0xf]
    %v601 = vld [vmem:[%s597 + $0xc] sm:$0xf]
    %s602 = scalar_lea.vmem %s7, 3
    %v603 = vld [vmem:[%s602] sm:$0x1]
    %v605 = vlaneseq
    %v606 = vshrl.u32 %v605, 7
    %v607 = vsub.s32 0, %v606
    %v608 = vrot.slane %v603, %v607
    %v614 = vunpack.c.l.b16 %v598
    %v615 = vunpack.c.l.b16 %v599
    %v616 = vunpack.c.l.b16 %v600
    %v617 = vunpack.c.l.b16 %v601
    %v618 = vpack.c.b16 %v615, %v614
    %v619 = vpack.c.b16 %v617, %v616
    %622 = vmatprep.subr.bf16.mxu0 0
    %623 = vmatpush1.bf16.msra.mxu0 %v618
    %624 = vmatprep.subr.bf16.mxu0 0
    %625 = vmatpush1.bf16.msra.mxu0 %v619
    %626 = vmatprep.subr.bf16.mxu0 0
    %627 = vmatpush1.bf16.msra.mxu0 0
    %628 = vmatprep.subr.bf16.mxu0 0
    %629 = vmatpush1.bf16.msra.mxu0 0
    %630 = vmatprep.subr.bf16.mxu0 0
    %631 = vmatpush1.bf16.msra.mxu0 0
    %632 = vmatprep.subr.bf16.mxu0 0
    %633 = vmatpush1.bf16.msra.mxu0 0
    %634 = vmatprep.subr.bf16.mxu0 0
    %635 = vmatpush1.bf16.msra.mxu0 0
    %636 = vmatprep.subr.bf16.mxu0 0
    %637 = vmatpush1.bf16.msra.mxu0 0
    %638 = vmatprep.subr.bf16.mxu0 0
    %639 = vmatpush1.bf16.msra.mxu0 0
    %640 = vmatprep.subr.bf16.mxu0 0
    %641 = vmatpush1.bf16.msra.mxu0 0
    %642 = vmatprep.subr.bf16.mxu0 0
    %643 = vmatpush1.bf16.msra.mxu0 0
    %644 = vmatprep.subr.bf16.mxu0 0
    %645 = vmatpush1.bf16.msra.mxu0 0
    %646 = vmatprep.subr.bf16.mxu0 0
    %647 = vmatpush1.bf16.msra.mxu0 0
    %648 = vmatprep.subr.bf16.mxu0 0
    %649 = vmatpush1.bf16.msra.mxu0 0
    %650 = vmatprep.subr.bf16.mxu0 0
    %651 = vmatpush1.bf16.msra.mxu0 0
    %652 = vmatprep.subr.bf16.mxu0 0
    %653 = vmatpush1.bf16.msra.mxu0 0
    %654 = vmatprep.mubr.bf16.mxu0 0
    %655 = vmatmul.mubr.bf16.gmra.mrb[0].mxu0 %v231
    %v656 = vpop.f32.mrb[0].mxu0
    %v657 = vadd.f32 %v608, %v656
    %v658 = vpop.f32.mrb[0].mxu0
    %v659 = vpop.f32.mrb[0].mxu0
    %v660 = vadd.f32 %v608, %v659
    %v661 = vpop.f32.mrb[0].mxu0
    %662 = vdwg.mxu0
    %s663 = scalar_lea.vmem %s6, 80
    %v664 = vld [vmem:[%s663] sm:$0xf]
    %v665 = vld [vmem:[%s663 + $0x4] sm:$0xf]
    %v666 = vld [vmem:[%s663 + $0x8] sm:$0xf]
    %v667 = vld [vmem:[%s663 + $0xc] sm:$0xf]
    %s668 = scalar_lea.vmem %s7, 5
    %v669 = vld [vmem:[%s668] sm:$0x1]
    %v671 = vlaneseq
    %v672 = vshrl.u32 %v671, 7
    %v673 = vsub.s32 0, %v672
    %v674 = vrot.slane %v669, %v673
    %v680 = vunpack.c.l.b16 %v664
    %v681 = vunpack.c.l.b16 %v665
    %v682 = vunpack.c.l.b16 %v666
    %v683 = vunpack.c.l.b16 %v667
    %v684 = vpack.c.b16 %v681, %v680
    %v685 = vpack.c.b16 %v683, %v682
    %688 = vmatprep.subr.bf16.mxu0 0
    %689 = vmatpush1.bf16.msra.mxu0 %v684
    %690 = vmatprep.subr.bf16.mxu0 0
    %691 = vmatpush1.bf16.msra.mxu0 %v685
    %692 = vmatprep.subr.bf16.mxu0 0
    %693 = vmatpush1.bf16.msra.mxu0 0
    %694 = vmatprep.subr.bf16.mxu0 0
    %695 = vmatpush1.bf16.msra.mxu0 0
    %696 = vmatprep.subr.bf16.mxu0 0
    %697 = vmatpush1.bf16.msra.mxu0 0
    %698 = vmatprep.subr.bf16.mxu0 0
    %699 = vmatpush1.bf16.msra.mxu0 0
    %700 = vmatprep.subr.bf16.mxu0 0
    %701 = vmatpush1.bf16.msra.mxu0 0
    %702 = vmatprep.subr.bf16.mxu0 0
    %703 = vmatpush1.bf16.msra.mxu0 0
    %704 = vmatprep.subr.bf16.mxu0 0
    %705 = vmatpush1.bf16.msra.mxu0 0
    %706 = vmatprep.subr.bf16.mxu0 0
    %707 = vmatpush1.bf16.msra.mxu0 0
    %708 = vmatprep.subr.bf16.mxu0 0
    %709 = vmatpush1.bf16.msra.mxu0 0
    %710 = vmatprep.subr.bf16.mxu0 0
    %711 = vmatpush1.bf16.msra.mxu0 0
    %712 = vmatprep.subr.bf16.mxu0 0
    %713 = vmatpush1.bf16.msra.mxu0 0
    %714 = vmatprep.subr.bf16.mxu0 0
    %715 = vmatpush1.bf16.msra.mxu0 0
    %716 = vmatprep.subr.bf16.mxu0 0
    %717 = vmatpush1.bf16.msra.mxu0 0
    %718 = vmatprep.subr.bf16.mxu0 0
    %719 = vmatpush1.bf16.msra.mxu0 0
    %720 = vmatprep.mubr.bf16.mxu0 0
    %721 = vmatmul.mubr.bf16.gmra.mrb[0].mxu0 %v231
    %v722 = vpop.f32.mrb[0].mxu0
    %v723 = vadd.f32 %v674, %v722
    %v724 = vpop.f32.mrb[0].mxu0
    %v725 = vpop.f32.mrb[0].mxu0
    %v726 = vadd.f32 %v674, %v725
    %v727 = vpop.f32.mrb[0].mxu0
    %728 = vdwg.mxu0
    %v729 = vpack.c.bf16 %v594, %v591
    %v730 = vpack.c.bf16 %v660, %v657
    %v732 = vsel %vm408, %v729, 0
    %v735 = vsel %vm408, %v730, 0
    %737 = vmatprep.subr.bf16.mxu0 0
    %738 = vmatpush1.bf16.xpose.msra.mxu0 %v735
    %739 = vmatprep.subr.bf16.mxu0 0
    %740 = vmatpush1.bf16.xpose.msra.mxu0 0
    %741 = vmatprep.subr.bf16.mxu0 0
    %742 = vmatpush1.bf16.xpose.msra.mxu0 0
    %743 = vmatprep.subr.bf16.mxu0 0
    %744 = vmatpush1.bf16.xpose.msra.mxu0 0
    %745 = vmatprep.subr.bf16.mxu0 0
    %746 = vmatpush1.bf16.xpose.msra.mxu0 0
    %747 = vmatprep.subr.bf16.mxu0 0
    %748 = vmatpush1.bf16.xpose.msra.mxu0 0
    %749 = vmatprep.subr.bf16.mxu0 0
    %750 = vmatpush1.bf16.xpose.msra.mxu0 0
    %751 = vmatprep.subr.bf16.mxu0 0
    %752 = vmatpush1.bf16.xpose.msra.mxu0 0
    %753 = vmatprep.subr.bf16.mxu0 0
    %754 = vmatpush1.bf16.xpose.msra.mxu0 0
    %755 = vmatprep.subr.bf16.mxu0 0
    %756 = vmatpush1.bf16.xpose.msra.mxu0 0
    %757 = vmatprep.subr.bf16.mxu0 0
    %758 = vmatpush1.bf16.xpose.msra.mxu0 0
    %759 = vmatprep.subr.bf16.mxu0 0
    %760 = vmatpush1.bf16.xpose.msra.mxu0 0
    %761 = vmatprep.subr.bf16.mxu0 0
    %762 = vmatpush1.bf16.xpose.msra.mxu0 0
    %763 = vmatprep.subr.bf16.mxu0 0
    %764 = vmatpush1.bf16.xpose.msra.mxu0 0
    %765 = vmatprep.subr.bf16.mxu0 0
    %766 = vmatpush1.bf16.xpose.msra.mxu0 0
    %767 = vmatprep.subr.bf16.mxu0 0
    %768 = vmatpush1.bf16.xpose.msra.mxu0 0
    %769 = vmatprep.mubr.bf16.mxu0 0
    %770 = vmatmul.mubr.bf16.gmra.mrb[0].mxu0 %v732
    %v771 = vpop.f32.mrb[0].mxu0
    %v772 = vadd.f32 0.0, %v771
    %v773 = vpop.f32.mrb[0].mxu0
    %v774 = vpop.f32.mrb[0].mxu0
    %v775 = vadd.f32 0.0, %v774
    %v776 = vpop.f32.mrb[0].mxu0
    %777 = vdwg.mxu0
    %v778 = vmul.f32 %v772, 0.25
    %v779 = vmul.f32 %v775, 0.25
    %v780 = vadd.f32 %v778, %v204
    %v781 = vadd.f32 %v779, %v205
    %v782 = vsel %vm408, %v780, -inf
    %783 = vmax.xlane.f32.xlu0 %v782
    %v784 = vpop.xlane.xlu0 %783
    %v785 = vsel %vm408, %v781, -inf
    %786 = vmax.xlane.f32.xlu0 %v785
    %v787 = vpop.xlane.xlu0 %786
    %v788 = vsub.f32 %v780, %v784
    %v789 = vsub.f32 %v781, %v787
    %v790 = vmul.f32 %v788, 1.442695
    %v791 = vpow.pop %v790
    %v792 = vmul.f32 %v789, 1.442695
    %v793 = vpow.pop %v792
    %v794 = vsel %vm408, %v791, 0.0
    %795 = vadd.xlane.f32.xlu0 %v794
    %v796 = vpop.xlane.xlu0 %795
    %v797 = vsel %vm408, %v793, 0.0
    %798 = vadd.xlane.f32.xlu0 %v797
    %v799 = vpop.xlane.xlu0 %798
    %v800 = vrcp.pop %v796
    %v801 = vrcp.pop %v799
    %v802 = vmul.f32 %v791, %v800
    %v803 = vmul.f32 %v793, %v801
    %v804 = vpack.c.bf16 %v803, %v802
    %v805 = vpack.c.bf16 %v726, %v723
    %v807 = vsel %vm408, %v804, 0
    %809 = vmatprep.subr.bf16.mxu0 0
    %810 = vmatpush1.bf16.msra.mxu0 %v805
    %811 = vmatprep.subr.bf16.mxu0 0
    %812 = vmatpush1.bf16.msra.mxu0 0
    %813 = vmatprep.subr.bf16.mxu0 0
    %814 = vmatpush1.bf16.msra.mxu0 0
    %815 = vmatprep.subr.bf16.mxu0 0
    %816 = vmatpush1.bf16.msra.mxu0 0
    %817 = vmatprep.subr.bf16.mxu0 0
    %818 = vmatpush1.bf16.msra.mxu0 0
    %819 = vmatprep.subr.bf16.mxu0 0
    %820 = vmatpush1.bf16.msra.mxu0 0
    %821 = vmatprep.subr.bf16.mxu0 0
    %822 = vmatpush1.bf16.msra.mxu0 0
    %823 = vmatprep.subr.bf16.mxu0 0
    %824 = vmatpush1.bf16.msra.mxu0 0
    %825 = vmatprep.subr.bf16.mxu0 0
    %826 = vmatpush1.bf16.msra.mxu0 0
    %827 = vmatprep.subr.bf16.mxu0 0
    %828 = vmatpush1.bf16.msra.mxu0 0
    %829 = vmatprep.subr.bf16.mxu0 0
    %830 = vmatpush1.bf16.msra.mxu0 0
    %831 = vmatprep.subr.bf16.mxu0 0
    %832 = vmatpush1.bf16.msra.mxu0 0
    %833 = vmatprep.subr.bf16.mxu0 0
    %834 = vmatpush1.bf16.msra.mxu0 0
    %835 = vmatprep.subr.bf16.mxu0 0
    %836 = vmatpush1.bf16.msra.mxu0 0
    %837 = vmatprep.subr.bf16.mxu0 0
    %838 = vmatpush1.bf16.msra.mxu0 0
    %839 = vmatprep.subr.bf16.mxu0 0
    %840 = vmatpush1.bf16.msra.mxu0 0
    %841 = vmatprep.mubr.bf16.mxu0 0
    %842 = vmatmul.mubr.bf16.gmra.mrb[0].mxu0 %v807
    %v843 = vpop.f32.mrb[0].mxu0
    %v844 = vadd.f32 0.0, %v843
    %v845 = vpop.f32.mrb[0].mxu0
    %v846 = vpop.f32.mrb[0].mxu0
    %v847 = vadd.f32 0.0, %v846
    %v848 = vpop.f32.mrb[0].mxu0
    %849 = vdwg.mxu0
    %v850 = vpack.c.bf16 %v847, %v844
    %s851 = scalar_lea.vmem %s8, 8
    %v852 = vld [vmem:[%s851] sm:$0xf]
    %v853 = vld [vmem:[%s851 + $0x4] sm:$0xf]
    %v856 = vunpack.c.l.b16 %v852
    %v857 = vunpack.c.l.b16 %v853
    %v858 = vpack.c.b16 %v857, %v856
    %v861 = vsel %vm408, %v850, 0
    %863 = vmatprep.subr.bf16.mxu0 0
    %864 = vmatpush1.bf16.msra.mxu0 %v858
    %865 = vmatprep.subr.bf16.mxu0 0
    %866 = vmatpush1.bf16.msra.mxu0 0
    %867 = vmatprep.subr.bf16.mxu0 0
    %868 = vmatpush1.bf16.msra.mxu0 0
    %869 = vmatprep.subr.bf16.mxu0 0
    %870 = vmatpush1.bf16.msra.mxu0 0
    %871 = vmatprep.subr.bf16.mxu0 0
    %872 = vmatpush1.bf16.msra.mxu0 0
    %873 = vmatprep.subr.bf16.mxu0 0
    %874 = vmatpush1.bf16.msra.mxu0 0
    %875 = vmatprep.subr.bf16.mxu0 0
    %876 = vmatpush1.bf16.msra.mxu0 0
    %877 = vmatprep.subr.bf16.mxu0 0
    %878 = vmatpush1.bf16.msra.mxu0 0
    %879 = vmatprep.subr.bf16.mxu0 0
    %880 = vmatpush1.bf16.msra.mxu0 0
    %881 = vmatprep.subr.bf16.mxu0 0
    %882 = vmatpush1.bf16.msra.mxu0 0
    %883 = vmatprep.subr.bf16.mxu0 0
    %884 = vmatpush1.bf16.msra.mxu0 0
    %885 = vmatprep.subr.bf16.mxu0 0
    %886 = vmatpush1.bf16.msra.mxu0 0
    %887 = vmatprep.subr.bf16.mxu0 0
    %888 = vmatpush1.bf16.msra.mxu0 0
    %889 = vmatprep.subr.bf16.mxu0 0
    %890 = vmatpush1.bf16.msra.mxu0 0
    %891 = vmatprep.subr.bf16.mxu0 0
    %892 = vmatpush1.bf16.msra.mxu0 0
    %893 = vmatprep.subr.bf16.mxu0 0
    %894 = vmatpush1.bf16.msra.mxu0 0
    %895 = vmatprep.mubr.bf16.mxu0 0
    %896 = vmatmul.mubr.bf16.gmra.mrb[0].mxu0 %v861
    %v897 = vpop.f32.mrb[0].mxu0
    %v898 = vadd.f32 0.0, %v897
    %v899 = vpop.f32.mrb[0].mxu0
    %v900 = vpop.f32.mrb[0].mxu0
    %v901 = vadd.f32 0.0, %v900
    %v902 = vpop.f32.mrb[0].mxu0
    %903 = vdwg.mxu0
    %v906 = vunpack.c.l.b16 %v529
    %v907 = vunpack.c.l.b16 %v530
    %v908 = vpack.c.b16 %v907, %v906
    %v911 = vsel %vm408, %v528, 0
    %913 = vmatprep.subr.bf16.mxu0 0
    %914 = vmatpush1.bf16.msra.mxu0 %v908
    %915 = vmatprep.subr.bf16.mxu0 0
    %916 = vmatpush1.bf16.msra.mxu0 0
    %917 = vmatprep.subr.bf16.mxu0 0
    %918 = vmatpush1.bf16.msra.mxu0 0
    %919 = vmatprep.subr.bf16.mxu0 0
    %920 = vmatpush1.bf16.msra.mxu0 0
    %921 = vmatprep.subr.bf16.mxu0 0
    %922 = vmatpush1.bf16.msra.mxu0 0
    %923 = vmatprep.subr.bf16.mxu0 0
    %924 = vmatpush1.bf16.msra.mxu0 0
    %925 = vmatprep.subr.bf16.mxu0 0
    %926 = vmatpush1.bf16.msra.mxu0 0
    %927 = vmatprep.subr.bf16.mxu0 0
    %928 = vmatpush1.bf16.msra.mxu0 0
    %929 = vmatprep.subr.bf16.mxu0 0
    %930 = vmatpush1.bf16.msra.mxu0 0
    %931 = vmatprep.subr.bf16.mxu0 0
    %932 = vmatpush1.bf16.msra.mxu0 0
    %933 = vmatprep.subr.bf16.mxu0 0
    %934 = vmatpush1.bf16.msra.mxu0 0
    %935 = vmatprep.subr.bf16.mxu0 0
    %936 = vmatpush1.bf16.msra.mxu0 0
    %937 = vmatprep.subr.bf16.mxu0 0
    %938 = vmatpush1.bf16.msra.mxu0 0
    %939 = vmatprep.subr.bf16.mxu0 0
    %940 = vmatpush1.bf16.msra.mxu0 0
    %941 = vmatprep.subr.bf16.mxu0 0
    %942 = vmatpush1.bf16.msra.mxu0 0
    %943 = vmatprep.subr.bf16.mxu0 0
    %944 = vmatpush1.bf16.msra.mxu0 0
    %945 = vmatprep.mubr.bf16.mxu0 0
    %946 = vmatmul.mubr.bf16.gmra.mrb[0].mxu0 %v911
    %v947 = vpop.f32.mrb[0].mxu0
    %v948 = vadd.f32 %v898, %v947
    %v949 = vpop.f32.mrb[0].mxu0
    %v950 = vpop.f32.mrb[0].mxu0
    %v951 = vadd.f32 %v901, %v950
    %v952 = vpop.f32.mrb[0].mxu0
    %953 = vdwg.mxu0
    %v954 = vld [vmem:[%s9] sm:$0x1]
    %v956 = vlaneseq
    %v957 = vshrl.u32 %v956, 7
    %v958 = vsub.s32 0, %v957
    %v959 = vrot.slane %v954, %v958
    %v961 = vadd.f32 %v948, %v959
    %v962 = vadd.f32 %v951, %v959
    %v963 = vadd.f32 %v961, %v202
    %v964 = vadd.f32 %v962, %v203
    %s965 = scalar_lea.vmem %s9, 1
    %v966 = vld [vmem:[%s965] sm:$0x1]
    %s967 = scalar_lea.vmem %s9, 2
    %v968 = vld [vmem:[%s967] sm:$0x1]
    %v969 = vsel %vm154, %v963, 0.0
    %970 = vadd.xlane.f32.xlu0 %v969
    %v971 = vpop.xlane.xlu0 %970
    %v972 = vsel %vm154, %v964, 0.0
    %973 = vadd.xlane.f32.xlu0 %v972
    %v974 = vpop.xlane.xlu0 %973
    %v975 = vmul.f32 %v971, %v161
    %v976 = vmul.f32 %v974, %v161
    %v977 = vmul.f32 %v963, %v963
    %v978 = vmul.f32 %v964, %v964
    %v979 = vsel %vm154, %v977, 0.0
    %980 = vadd.xlane.f32.xlu0 %v979
    %v981 = vpop.xlane.xlu0 %980
    %v982 = vsel %vm154, %v978, 0.0
    %983 = vadd.xlane.f32.xlu0 %v982
    %v984 = vpop.xlane.xlu0 %983
    %v985 = vmul.f32 %v981, %v161
    %v986 = vmul.f32 %v984, %v161
    %v987 = vmul.f32 %v975, %v975
    %v988 = vmul.f32 %v976, %v976
    %v989 = vsub.f32 %v985, %v987
    %v990 = vsub.f32 %v986, %v988
    %v991 = vmax.f32 %v989, 0.0
    %v992 = vmax.f32 %v990, 0.0
    %v993 = vsub.f32 %v963, %v975
    %v994 = vsub.f32 %v964, %v976
    %v995 = vadd.f32 %v991, 1e-12
    %v996 = vadd.f32 %v992, 1e-12
    %v997 = vrsqrt.pop %v995
    %v998 = vrsqrt.pop %v996
    %v999 = vmul.f32 %v993, %v997
    %v1000 = vmul.f32 %v994, %v998
    %v1002 = vlaneseq
    %v1003 = vshrl.u32 %v1002, 7
    %v1004 = vsub.s32 0, %v1003
    %v1005 = vrot.slane %v966, %v1004
    %v1007 = vmul.f32 %v999, %v1005
    %v1008 = vmul.f32 %v1000, %v1005
    %v1010 = vlaneseq
    %v1011 = vshrl.u32 %v1010, 7
    %v1012 = vsub.s32 0, %v1011
    %v1013 = vrot.slane %v968, %v1012
    %v1015 = vadd.f32 %v1007, %v1013
    %v1016 = vadd.f32 %v1008, %v1013
    %v1017 = vpack.c.bf16 %v1016, %v1015
    %v1018 = vld [vmem:[%s10] sm:$0xf]
    %v1019 = vld [vmem:[%s10 + $0x4] sm:$0xf]
    %v1020 = vld [vmem:[%s10 + $0x8] sm:$0xf]
    %v1021 = vld [vmem:[%s10 + $0xc] sm:$0xf]
    %v1022 = vld [vmem:[%s11] sm:$0x1]
    %v1024 = vlaneseq
    %v1025 = vshrl.u32 %v1024, 7
    %v1026 = vsub.s32 0, %v1025
    %v1027 = vrot.slane %v1022, %v1026
    %v1033 = vunpack.c.l.b16 %v1018
    %v1034 = vunpack.c.l.b16 %v1019
    %v1035 = vunpack.c.l.b16 %v1020
    %v1036 = vunpack.c.l.b16 %v1021
    %v1037 = vpack.c.b16 %v1034, %v1033
    %v1038 = vpack.c.b16 %v1036, %v1035
    %v1042 = vsel %vm154, %v1017, 0
    %1044 = vmatprep.subr.bf16.mxu0 0
    %1045 = vmatpush1.bf16.msra.mxu0 %v1037
    %1046 = vmatprep.subr.bf16.mxu0 0
    %1047 = vmatpush1.bf16.msra.mxu0 %v1038
    %1048 = vmatprep.subr.bf16.mxu0 0
    %1049 = vmatpush1.bf16.msra.mxu0 0
    %1050 = vmatprep.subr.bf16.mxu0 0
    %1051 = vmatpush1.bf16.msra.mxu0 0
    %1052 = vmatprep.subr.bf16.mxu0 0
    %1053 = vmatpush1.bf16.msra.mxu0 0
    %1054 = vmatprep.subr.bf16.mxu0 0
    %1055 = vmatpush1.bf16.msra.mxu0 0
    %1056 = vmatprep.subr.bf16.mxu0 0
    %1057 = vmatpush1.bf16.msra.mxu0 0
    %1058 = vmatprep.subr.bf16.mxu0 0
    %1059 = vmatpush1.bf16.msra.mxu0 0
    %1060 = vmatprep.subr.bf16.mxu0 0
    %1061 = vmatpush1.bf16.msra.mxu0 0
    %1062 = vmatprep.subr.bf16.mxu0 0
    %1063 = vmatpush1.bf16.msra.mxu0 0
    %1064 = vmatprep.subr.bf16.mxu0 0
    %1065 = vmatpush1.bf16.msra.mxu0 0
    %1066 = vmatprep.subr.bf16.mxu0 0
    %1067 = vmatpush1.bf16.msra.mxu0 0
    %1068 = vmatprep.subr.bf16.mxu0 0
    %1069 = vmatpush1.bf16.msra.mxu0 0
    %1070 = vmatprep.subr.bf16.mxu0 0
    %1071 = vmatpush1.bf16.msra.mxu0 0
    %1072 = vmatprep.subr.bf16.mxu0 0
    %1073 = vmatpush1.bf16.msra.mxu0 0
    %1074 = vmatprep.subr.bf16.mxu0 0
    %1075 = vmatpush1.bf16.msra.mxu0 0
    %1076 = vmatprep.mubr.bf16.mxu0 0
    %1077 = vmatmul.mubr.bf16.gmra.mrb[0].mxu0 %v1042
    %v1078 = vpop.f32.mrb[0].mxu0
    %v1079 = vadd.f32 %v1027, %v1078
    %v1080 = vpop.f32.mrb[0].mxu0
    %v1081 = vpop.f32.mrb[0].mxu0
    %v1082 = vadd.f32 %v1027, %v1081
    %v1083 = vpop.f32.mrb[0].mxu0
    %1084 = vdwg.mxu0
    %v1085 = vmul.f32 %v1079, %v1079
    %v1086 = vmul.f32 %v1082, %v1082
    %v1087 = vmul.f32 %v1079, %v1085
    %v1088 = vmul.f32 %v1082, %v1086
    %v1089 = vmul.f32 %v1087, 0.044715
    %v1090 = vmul.f32 %v1088, 0.044715
    %v1091 = vadd.f32 %v1079, %v1089
    %v1092 = vadd.f32 %v1082, %v1090
    %v1093 = vmul.f32 %v1091, 0.7978846
    %v1094 = vmul.f32 %v1092, 0.7978846
    %v1095 = vtanh.pop %v1093
    %v1096 = vtanh.pop %v1094
    %v1097 = vadd.f32 %v1095, 1.0
    %v1098 = vadd.f32 %v1096, 1.0
    %v1099 = vmul.f32 %v1097, 0.5
    %v1100 = vmul.f32 %v1098, 0.5
    %v1101 = vmul.f32 %v1079, %v1099
    %v1102 = vmul.f32 %v1082, %v1100
    %v1103 = vpack.c.bf16 %v1102, %v1101
    %v1104 = vld [vmem:[%s12] sm:$0xf]
    %v1105 = vld [vmem:[%s12 + $0x4] sm:$0xf]
    %v1106 = vld [vmem:[%s12 + $0x8] sm:$0xf]
    %v1107 = vld [vmem:[%s12 + $0xc] sm:$0xf]
    %v1108 = vld [vmem:[%s12 + $0x10] sm:$0xf]
    %v1109 = vld [vmem:[%s12 + $0x14] sm:$0xf]
    %v1110 = vld [vmem:[%s12 + $0x18] sm:$0xf]
    %v1111 = vld [vmem:[%s12 + $0x1c] sm:$0xf]
    %s1112 = scalar_lea.vmem %s9, 3
    %v1113 = vld [vmem:[%s1112] sm:$0x1]
    %v1115 = vlaneseq
    %v1116 = vshrl.u32 %v1115, 7
    %v1117 = vsub.s32 0, %v1116
    %v1118 = vrot.slane %v1113, %v1117
    %v1128 = vunpack.c.l.b16 %v1104
    %v1129 = vunpack.c.l.b16 %v1105
    %v1130 = vunpack.c.l.b16 %v1106
    %v1131 = vunpack.c.l.b16 %v1107
    %v1132 = vunpack.c.l.b16 %v1108
    %v1133 = vunpack.c.l.b16 %v1109
    %v1134 = vunpack.c.l.b16 %v1110
    %v1135 = vunpack.c.l.b16 %v1111
    %v1136 = vpack.c.b16 %v1129, %v1128
    %v1137 = vpack.c.b16 %v1131, %v1130
    %v1138 = vpack.c.b16 %v1133, %v1132
    %v1139 = vpack.c.b16 %v1135, %v1134
    %vm1144 = vcmask 523264
    %v1146 = vsel %vm1144, %v1103, 0
    %1148 = vmatprep.subr.bf16.mxu0 0
    %1149 = vmatpush1.bf16.msra.mxu0 %v1136
    %1150 = vmatprep.subr.bf16.mxu0 0
    %1151 = vmatpush1.bf16.msra.mxu0 %v1137
    %1152 = vmatprep.subr.bf16.mxu0 0
    %1153 = vmatpush1.bf16.msra.mxu0 %v1138
    %1154 = vmatprep.subr.bf16.mxu0 0
    %1155 = vmatpush1.bf16.msra.mxu0 %v1139
    %1156 = vmatprep.subr.bf16.mxu0 0
    %1157 = vmatpush1.bf16.msra.mxu0 0
    %1158 = vmatprep.subr.bf16.mxu0 0
    %1159 = vmatpush1.bf16.msra.mxu0 0
    %1160 = vmatprep.subr.bf16.mxu0 0
    %1161 = vmatpush1.bf16.msra.mxu0 0
    %1162 = vmatprep.subr.bf16.mxu0 0
    %1163 = vmatpush1.bf16.msra.mxu0 0
    %1164 = vmatprep.subr.bf16.mxu0 0
    %1165 = vmatpush1.bf16.msra.mxu0 0
    %1166 = vmatprep.subr.bf16.mxu0 0
    %1167 = vmatpush1.bf16.msra.mxu0 0
    %1168 = vmatprep.subr.bf16.mxu0 0
    %1169 = vmatpush1.bf16.msra.mxu0 0
    %1170 = vmatprep.subr.bf16.mxu0 0
    %1171 = vmatpush1.bf16.msra.mxu0 0
    %1172 = vmatprep.subr.bf16.mxu0 0
    %1173 = vmatpush1.bf16.msra.mxu0 0
    %1174 = vmatprep.subr.bf16.mxu0 0
    %1175 = vmatpush1.bf16.msra.mxu0 0
    %1176 = vmatprep.subr.bf16.mxu0 0
    %1177 = vmatpush1.bf16.msra.mxu0 0
    %1178 = vmatprep.subr.bf16.mxu0 0
    %1179 = vmatpush1.bf16.msra.mxu0 0
    %1180 = vmatprep.mubr.bf16.mxu0 0
    %1181 = vmatmul.mubr.bf16.gmra.mrb[0].mxu0 %v1146
    %v1182 = vpop.f32.mrb[0].mxu0
    %v1183 = vadd.f32 %v1118, %v1182
    %v1184 = vpop.f32.mrb[0].mxu0
    %v1185 = vpop.f32.mrb[0].mxu0
    %v1186 = vadd.f32 %v1118, %v1185
    %v1187 = vpop.f32.mrb[0].mxu0
    %1188 = vdwg.mxu0
    %v1189 = vadd.f32 %v1183, %v1015
    %v1190 = vadd.f32 %v1186, %v1016
    %s1191 = scalar_lea.vmem %s9, 4
    %v1192 = vld [vmem:[%s1191] sm:$0x1]
    %s1193 = scalar_lea.vmem %s9, 5
    %v1194 = vld [vmem:[%s1193] sm:$0x1]
    %v1195 = vsel %vm154, %v1189, 0.0
    %1196 = vadd.xlane.f32.xlu0 %v1195
    %v1197 = vpop.xlane.xlu0 %1196
    %v1198 = vsel %vm154, %v1190, 0.0
    %1199 = vadd.xlane.f32.xlu0 %v1198
    %v1200 = vpop.xlane.xlu0 %1199
    %v1201 = vmul.f32 %v1197, %v161
    %v1202 = vmul.f32 %v1200, %v161
    %v1203 = vmul.f32 %v1189, %v1189
    %v1204 = vmul.f32 %v1190, %v1190
    %v1205 = vsel %vm154, %v1203, 0.0
    %1206 = vadd.xlane.f32.xlu0 %v1205
    %v1207 = vpop.xlane.xlu0 %1206
    %v1208 = vsel %vm154, %v1204, 0.0
    %1209 = vadd.xlane.f32.xlu0 %v1208
    %v1210 = vpop.xlane.xlu0 %1209
    %v1211 = vmul.f32 %v1207, %v161
    %v1212 = vmul.f32 %v1210, %v161
    %v1213 = vmul.f32 %v1201, %v1201
    %v1214 = vmul.f32 %v1202, %v1202
    %v1215 = vsub.f32 %v1211, %v1213
    %v1216 = vsub.f32 %v1212, %v1214
    %v1217 = vmax.f32 %v1215, 0.0
    %v1218 = vmax.f32 %v1216, 0.0
    %v1219 = vsub.f32 %v1189, %v1201
    %v1220 = vsub.f32 %v1190, %v1202
    %v1221 = vadd.f32 %v1217, 1e-12
    %v1222 = vadd.f32 %v1218, 1e-12
    %v1223 = vrsqrt.pop %v1221
    %v1224 = vrsqrt.pop %v1222
    %v1225 = vmul.f32 %v1219, %v1223
    %v1226 = vmul.f32 %v1220, %v1224
    %v1228 = vlaneseq
    %v1229 = vshrl.u32 %v1228, 7
    %v1230 = vsub.s32 0, %v1229
    %v1231 = vrot.slane %v1192, %v1230
    %v1233 = vmul.f32 %v1225, %v1231
    %v1234 = vmul.f32 %v1226, %v1231
    %v1236 = vlaneseq
    %v1237 = vshrl.u32 %v1236, 7
    %v1238 = vsub.s32 0, %v1237
    %v1239 = vrot.slane %v1194, %v1238
    %v1241 = vadd.f32 %v1233, %v1239
    %v1242 = vadd.f32 %v1234, %v1239
    %v1243 = vpack.c.bf16 %v1242, %v1241
    %s1244 = scalar_lea.vmem %s6, 96
    %v1245 = vld [vmem:[%s1244] sm:$0xf]
    %v1246 = vld [vmem:[%s1244 + $0x4] sm:$0xf]
    %v1247 = vld [vmem:[%s1244 + $0x8] sm:$0xf]
    %v1248 = vld [vmem:[%s1244 + $0xc] sm:$0xf]
    %s1249 = scalar_lea.vmem %s7, 6
    %v1250 = vld [vmem:[%s1249] sm:$0x1]
    %v1252 = vlaneseq
    %v1253 = vshrl.u32 %v1252, 7
    %v1254 = vsub.s32 0, %v1253
    %v1255 = vrot.slane %v1250, %v1254
    %v1261 = vunpack.c.l.b16 %v1245
    %v1262 = vunpack.c.l.b16 %v1246
    %v1263 = vunpack.c.l.b16 %v1247
    %v1264 = vunpack.c.l.b16 %v1248
    %v1265 = vpack.c.b16 %v1262, %v1261
    %v1266 = vpack.c.b16 %v1264, %v1263
    %v1270 = vsel %vm154, %v1243, 0
    %1272 = vmatprep.subr.bf16.mxu0 0
    %1273 = vmatpush1.bf16.msra.mxu0 %v1265
    %1274 = vmatprep.subr.bf16.mxu0 0
    %1275 = vmatpush1.bf16.msra.mxu0 %v1266
    %1276 = vmatprep.subr.bf16.mxu0 0
    %1277 = vmatpush1.bf16.msra.mxu0 0
    %1278 = vmatprep.subr.bf16.mxu0 0
    %1279 = vmatpush1.bf16.msra.mxu0 0
    %1280 = vmatprep.subr.bf16.mxu0 0
    %1281 = vmatpush1.bf16.msra.mxu0 0
    %1282 = vmatprep.subr.bf16.mxu0 0
    %1283 = vmatpush1.bf16.msra.mxu0 0
    %1284 = vmatprep.subr.bf16.mxu0 0
    %1285 = vmatpush1.bf16.msra.mxu0 0
    %1286 = vmatprep.subr.bf16.mxu0 0
    %1287 = vmatpush1.bf16.msra.mxu0 0
    %1288 = vmatprep.subr.bf16.mxu0 0
    %1289 = vmatpush1.bf16.msra.mxu0 0
    %1290 = vmatprep.subr.bf16.mxu0 0
    %1291 = vmatpush1.bf16.msra.mxu0 0
    %1292 = vmatprep.subr.bf16.mxu0 0
    %1293 = vmatpush1.bf16.msra.mxu0 0
    %1294 = vmatprep.subr.bf16.mxu0 0
    %1295 = vmatpush1.bf16.msra.mxu0 0
    %1296 = vmatprep.subr.bf16.mxu0 0
    %1297 = vmatpush1.bf16.msra.mxu0 0
    %1298 = vmatprep.subr.bf16.mxu0 0
    %1299 = vmatpush1.bf16.msra.mxu0 0
    %1300 = vmatprep.subr.bf16.mxu0 0
    %1301 = vmatpush1.bf16.msra.mxu0 0
    %1302 = vmatprep.subr.bf16.mxu0 0
    %1303 = vmatpush1.bf16.msra.mxu0 0
    %1304 = vmatprep.mubr.bf16.mxu0 0
    %1305 = vmatmul.mubr.bf16.gmra.mrb[0].mxu0 %v1270
    %v1306 = vpop.f32.mrb[0].mxu0
    %v1307 = vadd.f32 %v1255, %v1306
    %v1308 = vpop.f32.mrb[0].mxu0
    %v1309 = vpop.f32.mrb[0].mxu0
    %v1310 = vadd.f32 %v1255, %v1309
    %v1311 = vpop.f32.mrb[0].mxu0
    %1312 = vdwg.mxu0
    %s1313 = scalar_lea.vmem %s6, 128
    %v1314 = vld [vmem:[%s1313] sm:$0xf]
    %v1315 = vld [vmem:[%s1313 + $0x4] sm:$0xf]
    %v1316 = vld [vmem:[%s1313 + $0x8] sm:$0xf]
    %v1317 = vld [vmem:[%s1313 + $0xc] sm:$0xf]
    %s1318 = scalar_lea.vmem %s7, 8
    %v1319 = vld [vmem:[%s1318] sm:$0x1]
    %v1321 = vlaneseq
    %v1322 = vshrl.u32 %v1321, 7
    %v1323 = vsub.s32 0, %v1322
    %v1324 = vrot.slane %v1319, %v1323
    %v1330 = vunpack.c.l.b16 %v1314
    %v1331 = vunpack.c.l.b16 %v1315
    %v1332 = vunpack.c.l.b16 %v1316
    %v1333 = vunpack.c.l.b16 %v1317
    %v1334 = vpack.c.b16 %v1331, %v1330
    %v1335 = vpack.c.b16 %v1333, %v1332
    %1338 = vmatprep.subr.bf16.mxu0 0
    %1339 = vmatpush1.bf16.msra.mxu0 %v1334
    %1340 = vmatprep.subr.bf16.mxu0 0
    %1341 = vmatpush1.bf16.msra.mxu0 %v1335
    %1342 = vmatprep.subr.bf16.mxu0 0
    %1343 = vmatpush1.bf16.msra.mxu0 0
    %1344 = vmatprep.subr.bf16.mxu0 0
    %1345 = vmatpush1.bf16.msra.mxu0 0
    %1346 = vmatprep.subr.bf16.mxu0 0
    %1347 = vmatpush1.bf16.msra.mxu0 0
    %1348 = vmatprep.subr.bf16.mxu0 0
    %1349 = vmatpush1.bf16.msra.mxu0 0
    %1350 = vmatprep.subr.bf16.mxu0 0
    %1351 = vmatpush1.bf16.msra.mxu0 0
    %1352 = vmatprep.subr.bf16.mxu0 0
    %1353 = vmatpush1.bf16.msra.mxu0 0
    %1354 = vmatprep.subr.bf16.mxu0 0
    %1355 = vmatpush1.bf16.msra.mxu0 0
    %1356 = vmatprep.subr.bf16.mxu0 0
    %1357 = vmatpush1.bf16.msra.mxu0 0
    %1358 = vmatprep.subr.bf16.mxu0 0
    %1359 = vmatpush1.bf16.msra.mxu0 0
    %1360 = vmatprep.subr.bf16.mxu0 0
    %1361 = vmatpush1.bf16.msra.mxu0 0
    %1362 = vmatprep.subr.bf16.mxu0 0
    %1363 = vmatpush1.bf16.msra.mxu0 0
    %1364 = vmatprep.subr.bf16.mxu0 0
    %1365 = vmatpush1.bf16.msra.mxu0 0
    %1366 = vmatprep.subr.bf16.mxu0 0
    %1367 = vmatpush1.bf16.msra.mxu0 0
    %1368 = vmatprep.subr.bf16.mxu0 0
    %1369 = vmatpush1.bf16.msra.mxu0 0
    %1370 = vmatprep.mubr.bf16.mxu0 0
    %1371 = vmatmul.mubr.bf16.gmra.mrb[0].mxu0 %v1270
    %v1372 = vpop.f32.mrb[0].mxu0
    %v1373 = vadd.f32 %v1324, %v1372
    %v1374 = vpop.f32.mrb[0].mxu0
    %v1375 = vpop.f32.mrb[0].mxu0
    %v1376 = vadd.f32 %v1324, %v1375
    %v1377 = vpop.f32.mrb[0].mxu0
    %1378 = vdwg.mxu0
    %s1379 = scalar_lea.vmem %s6, 160
    %v1380 = vld [vmem:[%s1379] sm:$0xf]
    %v1381 = vld [vmem:[%s1379 + $0x4] sm:$0xf]
    %v1382 = vld [vmem:[%s1379 + $0x8] sm:$0xf]
    %v1383 = vld [vmem:[%s1379 + $0xc] sm:$0xf]
    %s1384 = scalar_lea.vmem %s7, 10
    %v1385 = vld [vmem:[%s1384] sm:$0x1]
    %v1387 = vlaneseq
    %v1388 = vshrl.u32 %v1387, 7
    %v1389 = vsub.s32 0, %v1388
    %v1390 = vrot.slane %v1385, %v1389
    %v1396 = vunpack.c.l.b16 %v1380
    %v1397 = vunpack.c.l.b16 %v1381
    %v1398 = vunpack.c.l.b16 %v1382
    %v1399 = vunpack.c.l.b16 %v1383
    %v1400 = vpack.c.b16 %v1397, %v1396
    %v1401 = vpack.c.b16 %v1399, %v1398
    %1404 = vmatprep.subr.bf16.mxu0 0
    %1405 = vmatpush1.bf16.msra.mxu0 %v1400
    %1406 = vmatprep.subr.bf16.mxu0 0
    %1407 = vmatpush1.bf16.msra.mxu0 %v1401
    %1408 = vmatprep.subr.bf16.mxu0 0
    %1409 = vmatpush1.bf16.msra.mxu0 0
    %1410 = vmatprep.subr.bf16.mxu0 0
    %1411 = vmatpush1.bf16.msra.mxu0 0
    %1412 = vmatprep.subr.bf16.mxu0 0
    %1413 = vmatpush1.bf16.msra.mxu0 0
    %1414 = vmatprep.subr.bf16.mxu0 0
    %1415 = vmatpush1.bf16.msra.mxu0 0
    %1416 = vmatprep.subr.bf16.mxu0 0
    %1417 = vmatpush1.bf16.msra.mxu0 0
    %1418 = vmatprep.subr.bf16.mxu0 0
    %1419 = vmatpush1.bf16.msra.mxu0 0
    %1420 = vmatprep.subr.bf16.mxu0 0
    %1421 = vmatpush1.bf16.msra.mxu0 0
    %1422 = vmatprep.subr.bf16.mxu0 0
    %1423 = vmatpush1.bf16.msra.mxu0 0
    %1424 = vmatprep.subr.bf16.mxu0 0
    %1425 = vmatpush1.bf16.msra.mxu0 0
    %1426 = vmatprep.subr.bf16.mxu0 0
    %1427 = vmatpush1.bf16.msra.mxu0 0
    %1428 = vmatprep.subr.bf16.mxu0 0
    %1429 = vmatpush1.bf16.msra.mxu0 0
    %1430 = vmatprep.subr.bf16.mxu0 0
    %1431 = vmatpush1.bf16.msra.mxu0 0
    %1432 = vmatprep.subr.bf16.mxu0 0
    %1433 = vmatpush1.bf16.msra.mxu0 0
    %1434 = vmatprep.subr.bf16.mxu0 0
    %1435 = vmatpush1.bf16.msra.mxu0 0
    %1436 = vmatprep.mubr.bf16.mxu0 0
    %1437 = vmatmul.mubr.bf16.gmra.mrb[0].mxu0 %v1270
    %v1438 = vpop.f32.mrb[0].mxu0
    %v1439 = vadd.f32 %v1390, %v1438
    %v1440 = vpop.f32.mrb[0].mxu0
    %v1441 = vpop.f32.mrb[0].mxu0
    %v1442 = vadd.f32 %v1390, %v1441
    %v1443 = vpop.f32.mrb[0].mxu0
    %1444 = vdwg.mxu0
    %v1445 = vpack.c.bf16 %v1310, %v1307
    %v1446 = vpack.c.bf16 %v1376, %v1373
    %v1448 = vsel %vm408, %v1445, 0
    %v1451 = vsel %vm408, %v1446, 0
    %1453 = vmatprep.subr.bf16.mxu0 0
    %1454 = vmatpush1.bf16.xpose.msra.mxu0 %v1451
    %1455 = vmatprep.subr.bf16.mxu0 0
    %1456 = vmatpush1.bf16.xpose.msra.mxu0 0
    %1457 = vmatprep.subr.bf16.mxu0 0
    %1458 = vmatpush1.bf16.xpose.msra.mxu0 0
    %1459 = vmatprep.subr.bf16.mxu0 0
    %1460 = vmatpush1.bf16.xpose.msra.mxu0 0
    %1461 = vmatprep.subr.bf16.mxu0 0
    %1462 = vmatpush1.bf16.xpose.msra.mxu0 0
    %1463 = vmatprep.subr.bf16.mxu0 0
    %1464 = vmatpush1.bf16.xpose.msra.mxu0 0
    %1465 = vmatprep.subr.bf16.mxu0 0
    %1466 = vmatpush1.bf16.xpose.msra.mxu0 0
    %1467 = vmatprep.subr.bf16.mxu0 0
    %1468 = vmatpush1.bf16.xpose.msra.mxu0 0
    %1469 = vmatprep.subr.bf16.mxu0 0
    %1470 = vmatpush1.bf16.xpose.msra.mxu0 0
    %1471 = vmatprep.subr.bf16.mxu0 0
    %1472 = vmatpush1.bf16.xpose.msra.mxu0 0
    %1473 = vmatprep.subr.bf16.mxu0 0
    %1474 = vmatpush1.bf16.xpose.msra.mxu0 0
    %1475 = vmatprep.subr.bf16.mxu0 0
    %1476 = vmatpush1.bf16.xpose.msra.mxu0 0
    %1477 = vmatprep.subr.bf16.mxu0 0
    %1478 = vmatpush1.bf16.xpose.msra.mxu0 0
    %1479 = vmatprep.subr.bf16.mxu0 0
    %1480 = vmatpush1.bf16.xpose.msra.mxu0 0
    %1481 = vmatprep.subr.bf16.mxu0 0
    %1482 = vmatpush1.bf16.xpose.msra.mxu0 0
    %1483 = vmatprep.subr.bf16.mxu0 0
    %1484 = vmatpush1.bf16.xpose.msra.mxu0 0
    %1485 = vmatprep.mubr.bf16.mxu0 0
    %1486 = vmatmul.mubr.bf16.gmra.mrb[0].mxu0 %v1448
    %v1487 = vpop.f32.mrb[0].mxu0
    %v1488 = vadd.f32 0.0, %v1487
    %v1489 = vpop.f32.mrb[0].mxu0
    %v1490 = vpop.f32.mrb[0].mxu0
    %v1491 = vadd.f32 0.0, %v1490
    %v1492 = vpop.f32.mrb[0].mxu0
    %1493 = vdwg.mxu0
    %v1494 = vmul.f32 %v1488, 0.25
    %v1495 = vmul.f32 %v1491, 0.25
    %v1496 = vadd.f32 %v1494, %v204
    %v1497 = vadd.f32 %v1495, %v205
    %v1498 = vsel %vm408, %v1496, -inf
    %1499 = vmax.xlane.f32.xlu0 %v1498
    %v1500 = vpop.xlane.xlu0 %1499
    %v1501 = vsel %vm408, %v1497, -inf
    %1502 = vmax.xlane.f32.xlu0 %v1501
    %v1503 = vpop.xlane.xlu0 %1502
    %v1504 = vsub.f32 %v1496, %v1500
    %v1505 = vsub.f32 %v1497, %v1503
    %v1506 = vmul.f32 %v1504, 1.442695
    %v1507 = vpow.pop %v1506
    %v1508 = vmul.f32 %v1505, 1.442695
    %v1509 = vpow.pop %v1508
    %v1510 = vsel %vm408, %v1507, 0.0
    %1511 = vadd.xlane.f32.xlu0 %v1510
    %v1512 = vpop.xlane.xlu0 %1511
    %v1513 = vsel %vm408, %v1509, 0.0
    %1514 = vadd.xlane.f32.xlu0 %v1513
    %v1515 = vpop.xlane.xlu0 %1514
    %v1516 = vrcp.pop %v1512
    %v1517 = vrcp.pop %v1515
    %v1518 = vmul.f32 %v1507, %v1516
    %v1519 = vmul.f32 %v1509, %v1517
    %v1520 = vpack.c.bf16 %v1519, %v1518
    %v1521 = vpack.c.bf16 %v1442, %v1439
    %v1523 = vsel %vm408, %v1520, 0
    %1525 = vmatprep.subr.bf16.mxu0 0
    %1526 = vmatpush1.bf16.msra.mxu0 %v1521
    %1527 = vmatprep.subr.bf16.mxu0 0
    %1528 = vmatpush1.bf16.msra.mxu0 0
    %1529 = vmatprep.subr.bf16.mxu0 0
    %1530 = vmatpush1.bf16.msra.mxu0 0
    %1531 = vmatprep.subr.bf16.mxu0 0
    %1532 = vmatpush1.bf16.msra.mxu0 0
    %1533 = vmatprep.subr.bf16.mxu0 0
    %1534 = vmatpush1.bf16.msra.mxu0 0
    %1535 = vmatprep.subr.bf16.mxu0 0
    %1536 = vmatpush1.bf16.msra.mxu0 0
    %1537 = vmatprep.subr.bf16.mxu0 0
    %1538 = vmatpush1.bf16.msra.mxu0 0
    %1539 = vmatprep.subr.bf16.mxu0 0
    %1540 = vmatpush1.bf16.msra.mxu0 0
    %1541 = vmatprep.subr.bf16.mxu0 0
    %1542 = vmatpush1.bf16.msra.mxu0 0
    %1543 = vmatprep.subr.bf16.mxu0 0
    %1544 = vmatpush1.bf16.msra.mxu0 0
    %1545 = vmatprep.subr.bf16.mxu0 0
    %1546 = vmatpush1.bf16.msra.mxu0 0
    %1547 = vmatprep.subr.bf16.mxu0 0
    %1548 = vmatpush1.bf16.msra.mxu0 0
    %1549 = vmatprep.subr.bf16.mxu0 0
    %1550 = vmatpush1.bf16.msra.mxu0 0
    %1551 = vmatprep.subr.bf16.mxu0 0
    %1552 = vmatpush1.bf16.msra.mxu0 0
    %1553 = vmatprep.subr.bf16.mxu0 0
    %1554 = vmatpush1.bf16.msra.mxu0 0
    %1555 = vmatprep.subr.bf16.mxu0 0
    %1556 = vmatpush1.bf16.msra.mxu0 0
    %1557 = vmatprep.mubr.bf16.mxu0 0
    %1558 = vmatmul.mubr.bf16.gmra.mrb[0].mxu0 %v1523
    %v1559 = vpop.f32.mrb[0].mxu0
    %v1560 = vadd.f32 0.0, %v1559
    %v1561 = vpop.f32.mrb[0].mxu0
    %v1562 = vpop.f32.mrb[0].mxu0
    %v1563 = vadd.f32 0.0, %v1562
    %v1564 = vpop.f32.mrb[0].mxu0
    %1565 = vdwg.mxu0
    %v1566 = vpack.c.bf16 %v1563, %v1560
    %s1567 = scalar_lea.vmem %s8, 16
    %v1568 = vld [vmem:[%s1567] sm:$0xf]
    %v1569 = vld [vmem:[%s1567 + $0x4] sm:$0xf]
    %s1570 = scalar_lea.vmem %s6, 112
    %v1571 = vld [vmem:[%s1570] sm:$0xf]
    %v1572 = vld [vmem:[%s1570 + $0x4] sm:$0xf]
    %v1573 = vld [vmem:[%s1570 + $0x8] sm:$0xf]
    %v1574 = vld [vmem:[%s1570 + $0xc] sm:$0xf]
    %s1575 = scalar_lea.vmem %s7, 7
    %v1576 = vld [vmem:[%s1575] sm:$0x1]
    %v1578 = vlaneseq
    %v1579 = vshrl.u32 %v1578, 7
    %v1580 = vsub.s32 0, %v1579
    %v1581 = vrot.slane %v1576, %v1580
    %v1587 = vunpack.c.l.b16 %v1571
    %v1588 = vunpack.c.l.b16 %v1572
    %v1589 = vunpack.c.l.b16 %v1573
    %v1590 = vunpack.c.l.b16 %v1574
    %v1591 = vpack.c.b16 %v1588, %v1587
    %v1592 = vpack.c.b16 %v1590, %v1589
    %1595 = vmatprep.subr.bf16.mxu0 0
    %1596 = vmatpush1.bf16.msra.mxu0 %v1591
    %1597 = vmatprep.subr.bf16.mxu0 0
    %1598 = vmatpush1.bf16.msra.mxu0 %v1592
    %1599 = vmatprep.subr.bf16.mxu0 0
    %1600 = vmatpush1.bf16.msra.mxu0 0
    %1601 = vmatprep.subr.bf16.mxu0 0
    %1602 = vmatpush1.bf16.msra.mxu0 0
    %1603 = vmatprep.subr.bf16.mxu0 0
    %1604 = vmatpush1.bf16.msra.mxu0 0
    %1605 = vmatprep.subr.bf16.mxu0 0
    %1606 = vmatpush1.bf16.msra.mxu0 0
    %1607 = vmatprep.subr.bf16.mxu0 0
    %1608 = vmatpush1.bf16.msra.mxu0 0
    %1609 = vmatprep.subr.bf16.mxu0 0
    %1610 = vmatpush1.bf16.msra.mxu0 0
    %1611 = vmatprep.subr.bf16.mxu0 0
    %1612 = vmatpush1.bf16.msra.mxu0 0
    %1613 = vmatprep.subr.bf16.mxu0 0
    %1614 = vmatpush1.bf16.msra.mxu0 0
    %1615 = vmatprep.subr.bf16.mxu0 0
    %1616 = vmatpush1.bf16.msra.mxu0 0
    %1617 = vmatprep.subr.bf16.mxu0 0
    %1618 = vmatpush1.bf16.msra.mxu0 0
    %1619 = vmatprep.subr.bf16.mxu0 0
    %1620 = vmatpush1.bf16.msra.mxu0 0
    %1621 = vmatprep.subr.bf16.mxu0 0
    %1622 = vmatpush1.bf16.msra.mxu0 0
    %1623 = vmatprep.subr.bf16.mxu0 0
    %1624 = vmatpush1.bf16.msra.mxu0 0
    %1625 = vmatprep.subr.bf16.mxu0 0
    %1626 = vmatpush1.bf16.msra.mxu0 0
    %1627 = vmatprep.mubr.bf16.mxu0 0
    %1628 = vmatmul.mubr.bf16.gmra.mrb[0].mxu0 %v1270
    %v1629 = vpop.f32.mrb[0].mxu0
    %v1630 = vadd.f32 %v1581, %v1629
    %v1631 = vpop.f32.mrb[0].mxu0
    %v1632 = vpop.f32.mrb[0].mxu0
    %v1633 = vadd.f32 %v1581, %v1632
    %v1634 = vpop.f32.mrb[0].mxu0
    %1635 = vdwg.mxu0
    %s1636 = scalar_lea.vmem %s6, 144
    %v1637 = vld [vmem:[%s1636] sm:$0xf]
    %v1638 = vld [vmem:[%s1636 + $0x4] sm:$0xf]
    %v1639 = vld [vmem:[%s1636 + $0x8] sm:$0xf]
    %v1640 = vld [vmem:[%s1636 + $0xc] sm:$0xf]
    %s1641 = scalar_lea.vmem %s7, 9
    %v1642 = vld [vmem:[%s1641] sm:$0x1]
    %v1644 = vlaneseq
    %v1645 = vshrl.u32 %v1644, 7
    %v1646 = vsub.s32 0, %v1645
    %v1647 = vrot.slane %v1642, %v1646
    %v1653 = vunpack.c.l.b16 %v1637
    %v1654 = vunpack.c.l.b16 %v1638
    %v1655 = vunpack.c.l.b16 %v1639
    %v1656 = vunpack.c.l.b16 %v1640
    %v1657 = vpack.c.b16 %v1654, %v1653
    %v1658 = vpack.c.b16 %v1656, %v1655
    %1661 = vmatprep.subr.bf16.mxu0 0
    %1662 = vmatpush1.bf16.msra.mxu0 %v1657
    %1663 = vmatprep.subr.bf16.mxu0 0
    %1664 = vmatpush1.bf16.msra.mxu0 %v1658
    %1665 = vmatprep.subr.bf16.mxu0 0
    %1666 = vmatpush1.bf16.msra.mxu0 0
    %1667 = vmatprep.subr.bf16.mxu0 0
    %1668 = vmatpush1.bf16.msra.mxu0 0
    %1669 = vmatprep.subr.bf16.mxu0 0
    %1670 = vmatpush1.bf16.msra.mxu0 0
    %1671 = vmatprep.subr.bf16.mxu0 0
    %1672 = vmatpush1.bf16.msra.mxu0 0
    %1673 = vmatprep.subr.bf16.mxu0 0
    %1674 = vmatpush1.bf16.msra.mxu0 0
    %1675 = vmatprep.subr.bf16.mxu0 0
    %1676 = vmatpush1.bf16.msra.mxu0 0
    %1677 = vmatprep.subr.bf16.mxu0 0
    %1678 = vmatpush1.bf16.msra.mxu0 0
    %1679 = vmatprep.subr.bf16.mxu0 0
    %1680 = vmatpush1.bf16.msra.mxu0 0
    %1681 = vmatprep.subr.bf16.mxu0 0
    %1682 = vmatpush1.bf16.msra.mxu0 0
    %1683 = vmatprep.subr.bf16.mxu0 0
    %1684 = vmatpush1.bf16.msra.mxu0 0
    %1685 = vmatprep.subr.bf16.mxu0 0
    %1686 = vmatpush1.bf16.msra.mxu0 0
    %1687 = vmatprep.subr.bf16.mxu0 0
    %1688 = vmatpush1.bf16.msra.mxu0 0
    %1689 = vmatprep.subr.bf16.mxu0 0
    %1690 = vmatpush1.bf16.msra.mxu0 0
    %1691 = vmatprep.subr.bf16.mxu0 0
    %1692 = vmatpush1.bf16.msra.mxu0 0
    %1693 = vmatprep.mubr.bf16.mxu0 0
    %1694 = vmatmul.mubr.bf16.gmra.mrb[0].mxu0 %v1270
    %v1695 = vpop.f32.mrb[0].mxu0
    %v1696 = vadd.f32 %v1647, %v1695
    %v1697 = vpop.f32.mrb[0].mxu0
    %v1698 = vpop.f32.mrb[0].mxu0
    %v1699 = vadd.f32 %v1647, %v1698
    %v1700 = vpop.f32.mrb[0].mxu0
    %1701 = vdwg.mxu0
    %s1702 = scalar_lea.vmem %s6, 176
    %v1703 = vld [vmem:[%s1702] sm:$0xf]
    %v1704 = vld [vmem:[%s1702 + $0x4] sm:$0xf]
    %v1705 = vld [vmem:[%s1702 + $0x8] sm:$0xf]
    %v1706 = vld [vmem:[%s1702 + $0xc] sm:$0xf]
    %s1707 = scalar_lea.vmem %s7, 11
    %v1708 = vld [vmem:[%s1707] sm:$0x1]
    %v1710 = vlaneseq
    %v1711 = vshrl.u32 %v1710, 7
    %v1712 = vsub.s32 0, %v1711
    %v1713 = vrot.slane %v1708, %v1712
    %v1719 = vunpack.c.l.b16 %v1703
    %v1720 = vunpack.c.l.b16 %v1704
    %v1721 = vunpack.c.l.b16 %v1705
    %v1722 = vunpack.c.l.b16 %v1706
    %v1723 = vpack.c.b16 %v1720, %v1719
    %v1724 = vpack.c.b16 %v1722, %v1721
    %1727 = vmatprep.subr.bf16.mxu0 0
    %1728 = vmatpush1.bf16.msra.mxu0 %v1723
    %1729 = vmatprep.subr.bf16.mxu0 0
    %1730 = vmatpush1.bf16.msra.mxu0 %v1724
    %1731 = vmatprep.subr.bf16.mxu0 0
    %1732 = vmatpush1.bf16.msra.mxu0 0
    %1733 = vmatprep.subr.bf16.mxu0 0
    %1734 = vmatpush1.bf16.msra.mxu0 0
    %1735 = vmatprep.subr.bf16.mxu0 0
    %1736 = vmatpush1.bf16.msra.mxu0 0
    %1737 = vmatprep.subr.bf16.mxu0 0
    %1738 = vmatpush1.bf16.msra.mxu0 0
    %1739 = vmatprep.subr.bf16.mxu0 0
    %1740 = vmatpush1.bf16.msra.mxu0 0
    %1741 = vmatprep.subr.bf16.mxu0 0
    %1742 = vmatpush1.bf16.msra.mxu0 0
    %1743 = vmatprep.subr.bf16.mxu0 0
    %1744 = vmatpush1.bf16.msra.mxu0 0
    %1745 = vmatprep.subr.bf16.mxu0 0
    %1746 = vmatpush1.bf16.msra.mxu0 0
    %1747 = vmatprep.subr.bf16.mxu0 0
    %1748 = vmatpush1.bf16.msra.mxu0 0
    %1749 = vmatprep.subr.bf16.mxu0 0
    %1750 = vmatpush1.bf16.msra.mxu0 0
    %1751 = vmatprep.subr.bf16.mxu0 0
    %1752 = vmatpush1.bf16.msra.mxu0 0
    %1753 = vmatprep.subr.bf16.mxu0 0
    %1754 = vmatpush1.bf16.msra.mxu0 0
    %1755 = vmatprep.subr.bf16.mxu0 0
    %1756 = vmatpush1.bf16.msra.mxu0 0
    %1757 = vmatprep.subr.bf16.mxu0 0
    %1758 = vmatpush1.bf16.msra.mxu0 0
    %1759 = vmatprep.mubr.bf16.mxu0 0
    %1760 = vmatmul.mubr.bf16.gmra.mrb[0].mxu0 %v1270
    %v1761 = vpop.f32.mrb[0].mxu0
    %v1762 = vadd.f32 %v1713, %v1761
    %v1763 = vpop.f32.mrb[0].mxu0
    %v1764 = vpop.f32.mrb[0].mxu0
    %v1765 = vadd.f32 %v1713, %v1764
    %v1766 = vpop.f32.mrb[0].mxu0
    %1767 = vdwg.mxu0
    %v1768 = vpack.c.bf16 %v1633, %v1630
    %v1769 = vpack.c.bf16 %v1699, %v1696
    %v1771 = vsel %vm408, %v1768, 0
    %v1774 = vsel %vm408, %v1769, 0
    %1776 = vmatprep.subr.bf16.mxu0 0
    %1777 = vmatpush1.bf16.xpose.msra.mxu0 %v1774
    %1778 = vmatprep.subr.bf16.mxu0 0
    %1779 = vmatpush1.bf16.xpose.msra.mxu0 0
    %1780 = vmatprep.subr.bf16.mxu0 0
    %1781 = vmatpush1.bf16.xpose.msra.mxu0 0
    %1782 = vmatprep.subr.bf16.mxu0 0
    %1783 = vmatpush1.bf16.xpose.msra.mxu0 0
    %1784 = vmatprep.subr.bf16.mxu0 0
    %1785 = vmatpush1.bf16.xpose.msra.mxu0 0
    %1786 = vmatprep.subr.bf16.mxu0 0
    %1787 = vmatpush1.bf16.xpose.msra.mxu0 0
    %1788 = vmatprep.subr.bf16.mxu0 0
    %1789 = vmatpush1.bf16.xpose.msra.mxu0 0
    %1790 = vmatprep.subr.bf16.mxu0 0
    %1791 = vmatpush1.bf16.xpose.msra.mxu0 0
    %1792 = vmatprep.subr.bf16.mxu0 0
    %1793 = vmatpush1.bf16.xpose.msra.mxu0 0
    %1794 = vmatprep.subr.bf16.mxu0 0
    %1795 = vmatpush1.bf16.xpose.msra.mxu0 0
    %1796 = vmatprep.subr.bf16.mxu0 0
    %1797 = vmatpush1.bf16.xpose.msra.mxu0 0
    %1798 = vmatprep.subr.bf16.mxu0 0
    %1799 = vmatpush1.bf16.xpose.msra.mxu0 0
    %1800 = vmatprep.subr.bf16.mxu0 0
    %1801 = vmatpush1.bf16.xpose.msra.mxu0 0
    %1802 = vmatprep.subr.bf16.mxu0 0
    %1803 = vmatpush1.bf16.xpose.msra.mxu0 0
    %1804 = vmatprep.subr.bf16.mxu0 0
    %1805 = vmatpush1.bf16.xpose.msra.mxu0 0
    %1806 = vmatprep.subr.bf16.mxu0 0
    %1807 = vmatpush1.bf16.xpose.msra.mxu0 0
    %1808 = vmatprep.mubr.bf16.mxu0 0
    %1809 = vmatmul.mubr.bf16.gmra.mrb[0].mxu0 %v1771
    %v1810 = vpop.f32.mrb[0].mxu0
    %v1811 = vadd.f32 0.0, %v1810
    %v1812 = vpop.f32.mrb[0].mxu0
    %v1813 = vpop.f32.mrb[0].mxu0
    %v1814 = vadd.f32 0.0, %v1813
    %v1815 = vpop.f32.mrb[0].mxu0
    %1816 = vdwg.mxu0
    %v1817 = vmul.f32 %v1811, 0.25
    %v1818 = vmul.f32 %v1814, 0.25
    %v1819 = vadd.f32 %v1817, %v204
    %v1820 = vadd.f32 %v1818, %v205
    %v1821 = vsel %vm408, %v1819, -inf
    %1822 = vmax.xlane.f32.xlu0 %v1821
    %v1823 = vpop.xlane.xlu0 %1822
    %v1824 = vsel %vm408, %v1820, -inf
    %1825 = vmax.xlane.f32.xlu0 %v1824
    %v1826 = vpop.xlane.xlu0 %1825
    %v1827 = vsub.f32 %v1819, %v1823
    %v1828 = vsub.f32 %v1820, %v1826
    %v1829 = vmul.f32 %v1827, 1.442695
    %v1830 = vpow.pop %v1829
    %v1831 = vmul.f32 %v1828, 1.442695
    %v1832 = vpow.pop %v1831
    %v1833 = vsel %vm408, %v1830, 0.0
    %1834 = vadd.xlane.f32.xlu0 %v1833
    %v1835 = vpop.xlane.xlu0 %1834
    %v1836 = vsel %vm408, %v1832, 0.0
    %1837 = vadd.xlane.f32.xlu0 %v1836
    %v1838 = vpop.xlane.xlu0 %1837
    %v1839 = vrcp.pop %v1835
    %v1840 = vrcp.pop %v1838
    %v1841 = vmul.f32 %v1830, %v1839
    %v1842 = vmul.f32 %v1832, %v1840
    %v1843 = vpack.c.bf16 %v1842, %v1841
    %v1844 = vpack.c.bf16 %v1765, %v1762
    %v1846 = vsel %vm408, %v1843, 0
    %1848 = vmatprep.subr.bf16.mxu0 0
    %1849 = vmatpush1.bf16.msra.mxu0 %v1844
    %1850 = vmatprep.subr.bf16.mxu0 0
    %1851 = vmatpush1.bf16.msra.mxu0 0
    %1852 = vmatprep.subr.bf16.mxu0 0
    %1853 = vmatpush1.bf16.msra.mxu0 0
    %1854 = vmatprep.subr.bf16.mxu0 0
    %1855 = vmatpush1.bf16.msra.mxu0 0
    %1856 = vmatprep.subr.bf16.mxu0 0
    %1857 = vmatpush1.bf16.msra.mxu0 0
    %1858 = vmatprep.subr.bf16.mxu0 0
    %1859 = vmatpush1.bf16.msra.mxu0 0
    %1860 = vmatprep.subr.bf16.mxu0 0
    %1861 = vmatpush1.bf16.msra.mxu0 0
    %1862 = vmatprep.subr.bf16.mxu0 0
    %1863 = vmatpush1.bf16.msra.mxu0 0
    %1864 = vmatprep.subr.bf16.mxu0 0
    %1865 = vmatpush1.bf16.msra.mxu0 0
    %1866 = vmatprep.subr.bf16.mxu0 0
    %1867 = vmatpush1.bf16.msra.mxu0 0
    %1868 = vmatprep.subr.bf16.mxu0 0
    %1869 = vmatpush1.bf16.msra.mxu0 0
    %1870 = vmatprep.subr.bf16.mxu0 0
    %1871 = vmatpush1.bf16.msra.mxu0 0
    %1872 = vmatprep.subr.bf16.mxu0 0
    %1873 = vmatpush1.bf16.msra.mxu0 0
    %1874 = vmatprep.subr.bf16.mxu0 0
    %1875 = vmatpush1.bf16.msra.mxu0 0
    %1876 = vmatprep.subr.bf16.mxu0 0
    %1877 = vmatpush1.bf16.msra.mxu0 0
    %1878 = vmatprep.subr.bf16.mxu0 0
    %1879 = vmatpush1.bf16.msra.mxu0 0
    %1880 = vmatprep.mubr.bf16.mxu0 0
    %1881 = vmatmul.mubr.bf16.gmra.mrb[0].mxu0 %v1846
    %v1882 = vpop.f32.mrb[0].mxu0
    %v1883 = vadd.f32 0.0, %v1882
    %v1884 = vpop.f32.mrb[0].mxu0
    %v1885 = vpop.f32.mrb[0].mxu0
    %v1886 = vadd.f32 0.0, %v1885
    %v1887 = vpop.f32.mrb[0].mxu0
    %1888 = vdwg.mxu0
    %v1889 = vpack.c.bf16 %v1886, %v1883
    %s1890 = scalar_lea.vmem %s8, 24
    %v1891 = vld [vmem:[%s1890] sm:$0xf]
    %v1892 = vld [vmem:[%s1890 + $0x4] sm:$0xf]
    %v1895 = vunpack.c.l.b16 %v1891
    %v1896 = vunpack.c.l.b16 %v1892
    %v1897 = vpack.c.b16 %v1896, %v1895
    %v1900 = vsel %vm408, %v1889, 0
    %1902 = vmatprep.subr.bf16.mxu0 0
    %1903 = vmatpush1.bf16.msra.mxu0 %v1897
    %1904 = vmatprep.subr.bf16.mxu0 0
    %1905 = vmatpush1.bf16.msra.mxu0 0
    %1906 = vmatprep.subr.bf16.mxu0 0
    %1907 = vmatpush1.bf16.msra.mxu0 0
    %1908 = vmatprep.subr.bf16.mxu0 0
    %1909 = vmatpush1.bf16.msra.mxu0 0
    %1910 = vmatprep.subr.bf16.mxu0 0
    %1911 = vmatpush1.bf16.msra.mxu0 0
    %1912 = vmatprep.subr.bf16.mxu0 0
    %1913 = vmatpush1.bf16.msra.mxu0 0
    %1914 = vmatprep.subr.bf16.mxu0 0
    %1915 = vmatpush1.bf16.msra.mxu0 0
    %1916 = vmatprep.subr.bf16.mxu0 0
    %1917 = vmatpush1.bf16.msra.mxu0 0
    %1918 = vmatprep.subr.bf16.mxu0 0
    %1919 = vmatpush1.bf16.msra.mxu0 0
    %1920 = vmatprep.subr.bf16.mxu0 0
    %1921 = vmatpush1.bf16.msra.mxu0 0
    %1922 = vmatprep.subr.bf16.mxu0 0
    %1923 = vmatpush1.bf16.msra.mxu0 0
    %1924 = vmatprep.subr.bf16.mxu0 0
    %1925 = vmatpush1.bf16.msra.mxu0 0
    %1926 = vmatprep.subr.bf16.mxu0 0
    %1927 = vmatpush1.bf16.msra.mxu0 0
    %1928 = vmatprep.subr.bf16.mxu0 0
    %1929 = vmatpush1.bf16.msra.mxu0 0
    %1930 = vmatprep.subr.bf16.mxu0 0
    %1931 = vmatpush1.bf16.msra.mxu0 0
    %1932 = vmatprep.subr.bf16.mxu0 0
    %1933 = vmatpush1.bf16.msra.mxu0 0
    %1934 = vmatprep.mubr.bf16.mxu0 0
    %1935 = vmatmul.mubr.bf16.gmra.mrb[0].mxu0 %v1900
    %v1936 = vpop.f32.mrb[0].mxu0
    %v1937 = vadd.f32 0.0, %v1936
    %v1938 = vpop.f32.mrb[0].mxu0
    %v1939 = vpop.f32.mrb[0].mxu0
    %v1940 = vadd.f32 0.0, %v1939
    %v1941 = vpop.f32.mrb[0].mxu0
    %1942 = vdwg.mxu0
    %v1945 = vunpack.c.l.b16 %v1568
    %v1946 = vunpack.c.l.b16 %v1569
    %v1947 = vpack.c.b16 %v1946, %v1945
    %v1950 = vsel %vm408, %v1566, 0
    %1952 = vmatprep.subr.bf16.mxu0 0
    %1953 = vmatpush1.bf16.msra.mxu0 %v1947
    %1954 = vmatprep.subr.bf16.mxu0 0
    %1955 = vmatpush1.bf16.msra.mxu0 0
    %1956 = vmatprep.subr.bf16.mxu0 0
    %1957 = vmatpush1.bf16.msra.mxu0 0
    %1958 = vmatprep.subr.bf16.mxu0 0
    %1959 = vmatpush1.bf16.msra.mxu0 0
    %1960 = vmatprep.subr.bf16.mxu0 0
    %1961 = vmatpush1.bf16.msra.mxu0 0
    %1962 = vmatprep.subr.bf16.mxu0 0
    %1963 = vmatpush1.bf16.msra.mxu0 0
    %1964 = vmatprep.subr.bf16.mxu0 0
    %1965 = vmatpush1.bf16.msra.mxu0 0
    %1966 = vmatprep.subr.bf16.mxu0 0
    %1967 = vmatpush1.bf16.msra.mxu0 0
    %1968 = vmatprep.subr.bf16.mxu0 0
    %1969 = vmatpush1.bf16.msra.mxu0 0
    %1970 = vmatprep.subr.bf16.mxu0 0
    %1971 = vmatpush1.bf16.msra.mxu0 0
    %1972 = vmatprep.subr.bf16.mxu0 0
    %1973 = vmatpush1.bf16.msra.mxu0 0
    %1974 = vmatprep.subr.bf16.mxu0 0
    %1975 = vmatpush1.bf16.msra.mxu0 0
    %1976 = vmatprep.subr.bf16.mxu0 0
    %1977 = vmatpush1.bf16.msra.mxu0 0
    %1978 = vmatprep.subr.bf16.mxu0 0
    %1979 = vmatpush1.bf16.msra.mxu0 0
    %1980 = vmatprep.subr.bf16.mxu0 0
    %1981 = vmatpush1.bf16.msra.mxu0 0
    %1982 = vmatprep.subr.bf16.mxu0 0
    %1983 = vmatpush1.bf16.msra.mxu0 0
    %1984 = vmatprep.mubr.bf16.mxu0 0
    %1985 = vmatmul.mubr.bf16.gmra.mrb[0].mxu0 %v1950
    %v1986 = vpop.f32.mrb[0].mxu0
    %v1987 = vadd.f32 %v1937, %v1986
    %v1988 = vpop.f32.mrb[0].mxu0
    %v1989 = vpop.f32.mrb[0].mxu0
    %v1990 = vadd.f32 %v1940, %v1989
    %v1991 = vpop.f32.mrb[0].mxu0
    %1992 = vdwg.mxu0
    %s1993 = scalar_lea.vmem %s9, 6
    %v1994 = vld [vmem:[%s1993] sm:$0x1]
    %v1996 = vlaneseq
    %v1997 = vshrl.u32 %v1996, 7
    %v1998 = vsub.s32 0, %v1997
    %v1999 = vrot.slane %v1994, %v1998
    %v2001 = vadd.f32 %v1987, %v1999
    %v2002 = vadd.f32 %v1990, %v1999
    %v2003 = vadd.f32 %v2001, %v1241
    %v2004 = vadd.f32 %v2002, %v1242
    %s2005 = scalar_lea.vmem %s9, 7
    %v2006 = vld [vmem:[%s2005] sm:$0x1]
    %s2007 = scalar_lea.vmem %s9, 8
    %v2008 = vld [vmem:[%s2007] sm:$0x1]
    %v2009 = vsel %vm154, %v2003, 0.0
    %2010 = vadd.xlane.f32.xlu0 %v2009
    %v2011 = vpop.xlane.xlu0 %2010
    %v2012 = vsel %vm154, %v2004, 0.0
    %2013 = vadd.xlane.f32.xlu0 %v2012
    %v2014 = vpop.xlane.xlu0 %2013
    %v2015 = vmul.f32 %v2011, %v161
    %v2016 = vmul.f32 %v2014, %v161
    %v2017 = vmul.f32 %v2003, %v2003
    %v2018 = vmul.f32 %v2004, %v2004
    %v2019 = vsel %vm154, %v2017, 0.0
    %2020 = vadd.xlane.f32.xlu0 %v2019
    %v2021 = vpop.xlane.xlu0 %2020
    %v2022 = vsel %vm154, %v2018, 0.0
    %2023 = vadd.xlane.f32.xlu0 %v2022
    %v2024 = vpop.xlane.xlu0 %2023
    %v2025 = vmul.f32 %v2021, %v161
    %v2026 = vmul.f32 %v2024, %v161
    %v2027 = vmul.f32 %v2015, %v2015
    %v2028 = vmul.f32 %v2016, %v2016
    %v2029 = vsub.f32 %v2025, %v2027
    %v2030 = vsub.f32 %v2026, %v2028
    %v2031 = vmax.f32 %v2029, 0.0
    %v2032 = vmax.f32 %v2030, 0.0
    %v2033 = vsub.f32 %v2003, %v2015
    %v2034 = vsub.f32 %v2004, %v2016
    %v2035 = vadd.f32 %v2031, 1e-12
    %v2036 = vadd.f32 %v2032, 1e-12
    %v2037 = vrsqrt.pop %v2035
    %v2038 = vrsqrt.pop %v2036
    %v2039 = vmul.f32 %v2033, %v2037
    %v2040 = vmul.f32 %v2034, %v2038
    %v2042 = vlaneseq
    %v2043 = vshrl.u32 %v2042, 7
    %v2044 = vsub.s32 0, %v2043
    %v2045 = vrot.slane %v2006, %v2044
    %v2047 = vmul.f32 %v2039, %v2045
    %v2048 = vmul.f32 %v2040, %v2045
    %v2050 = vlaneseq
    %v2051 = vshrl.u32 %v2050, 7
    %v2052 = vsub.s32 0, %v2051
    %v2053 = vrot.slane %v2008, %v2052
    %v2055 = vadd.f32 %v2047, %v2053
    %v2056 = vadd.f32 %v2048, %v2053
    %v2057 = vpack.c.bf16 %v2056, %v2055
    %s2058 = scalar_lea.vmem %s10, 16
    %v2059 = vld [vmem:[%s2058] sm:$0xf]
    %v2060 = vld [vmem:[%s2058 + $0x4] sm:$0xf]
    %v2061 = vld [vmem:[%s2058 + $0x8] sm:$0xf]
    %v2062 = vld [vmem:[%s2058 + $0xc] sm:$0xf]
    %s2063 = scalar_lea.vmem %s11, 1
    %v2064 = vld [vmem:[%s2063] sm:$0x1]
    %v2066 = vlaneseq
    %v2067 = vshrl.u32 %v2066, 7
    %v2068 = vsub.s32 0, %v2067
    %v2069 = vrot.slane %v2064, %v2068
    %v2075 = vunpack.c.l.b16 %v2059
    %v2076 = vunpack.c.l.b16 %v2060
    %v2077 = vunpack.c.l.b16 %v2061
    %v2078 = vunpack.c.l.b16 %v2062
    %v2079 = vpack.c.b16 %v2076, %v2075
    %v2080 = vpack.c.b16 %v2078, %v2077
    %v2084 = vsel %vm154, %v2057, 0
    %2086 = vmatprep.subr.bf16.mxu0 0
    %2087 = vmatpush1.bf16.msra.mxu0 %v2079
    %2088 = vmatprep.subr.bf16.mxu0 0
    %2089 = vmatpush1.bf16.msra.mxu0 %v2080
    %2090 = vmatprep.subr.bf16.mxu0 0
    %2091 = vmatpush1.bf16.msra.mxu0 0
    %2092 = vmatprep.subr.bf16.mxu0 0
    %2093 = vmatpush1.bf16.msra.mxu0 0
    %2094 = vmatprep.subr.bf16.mxu0 0
    %2095 = vmatpush1.bf16.msra.mxu0 0
    %2096 = vmatprep.subr.bf16.mxu0 0
    %2097 = vmatpush1.bf16.msra.mxu0 0
    %2098 = vmatprep.subr.bf16.mxu0 0
    %2099 = vmatpush1.bf16.msra.mxu0 0
    %2100 = vmatprep.subr.bf16.mxu0 0
    %2101 = vmatpush1.bf16.msra.mxu0 0
    %2102 = vmatprep.subr.bf16.mxu0 0
    %2103 = vmatpush1.bf16.msra.mxu0 0
    %2104 = vmatprep.subr.bf16.mxu0 0
    %2105 = vmatpush1.bf16.msra.mxu0 0
    %2106 = vmatprep.subr.bf16.mxu0 0
    %2107 = vmatpush1.bf16.msra.mxu0 0
    %2108 = vmatprep.subr.bf16.mxu0 0
    %2109 = vmatpush1.bf16.msra.mxu0 0
    %2110 = vmatprep.subr.bf16.mxu0 0
    %2111 = vmatpush1.bf16.msra.mxu0 0
    %2112 = vmatprep.subr.bf16.mxu0 0
    %2113 = vmatpush1.bf16.msra.mxu0 0
    %2114 = vmatprep.subr.bf16.mxu0 0
    %2115 = vmatpush1.bf16.msra.mxu0 0
    %2116 = vmatprep.subr.bf16.mxu0 0
    %2117 = vmatpush1.bf16.msra.mxu0 0
    %2118 = vmatprep.mubr.bf16.mxu0 0
    %2119 = vmatmul.mubr.bf16.gmra.mrb[0].mxu0 %v2084
    %v2120 = vpop.f32.mrb[0].mxu0
    %v2121 = vadd.f32 %v2069, %v2120
    %v2122 = vpop.f32.mrb[0].mxu0
    %v2123 = vpop.f32.mrb[0].mxu0
    %v2124 = vadd.f32 %v2069, %v2123
    %v2125 = vpop.f32.mrb[0].mxu0
    %2126 = vdwg.mxu0
    %v2127 = vmul.f32 %v2121, %v2121
    %v2128 = vmul.f32 %v2124, %v2124
    %v2129 = vmul.f32 %v2121, %v2127
    %v2130 = vmul.f32 %v2124, %v2128
    %v2131 = vmul.f32 %v2129, 0.044715
    %v2132 = vmul.f32 %v2130, 0.044715
    %v2133 = vadd.f32 %v2121, %v2131
    %v2134 = vadd.f32 %v2124, %v2132
    %v2135 = vmul.f32 %v2133, 0.7978846
    %v2136 = vmul.f32 %v2134, 0.7978846
    %v2137 = vtanh.pop %v2135
    %v2138 = vtanh.pop %v2136
    %v2139 = vadd.f32 %v2137, 1.0
    %v2140 = vadd.f32 %v2138, 1.0
    %v2141 = vmul.f32 %v2139, 0.5
    %v2142 = vmul.f32 %v2140, 0.5
    %v2143 = vmul.f32 %v2121, %v2141
    %v2144 = vmul.f32 %v2124, %v2142
    %v2145 = vpack.c.bf16 %v2144, %v2143
    %s2146 = scalar_lea.vmem %s12, 32
    %v2147 = vld [vmem:[%s2146] sm:$0xf]
    %v2148 = vld [vmem:[%s2146 + $0x4] sm:$0xf]
    %v2149 = vld [vmem:[%s2146 + $0x8] sm:$0xf]
    %v2150 = vld [vmem:[%s2146 + $0xc] sm:$0xf]
    %v2151 = vld [vmem:[%s2146 + $0x10] sm:$0xf]
    %v2152 = vld [vmem:[%s2146 + $0x14] sm:$0xf]
    %v2153 = vld [vmem:[%s2146 + $0x18] sm:$0xf]
    %v2154 = vld [vmem:[%s2146 + $0x1c] sm:$0xf]
    %s2155 = scalar_lea.vmem %s9, 9
    %v2156 = vld [vmem:[%s2155] sm:$0x1]
    %v2158 = vlaneseq
    %v2159 = vshrl.u32 %v2158, 7
    %v2160 = vsub.s32 0, %v2159
    %v2161 = vrot.slane %v2156, %v2160
    %v2171 = vunpack.c.l.b16 %v2147
    %v2172 = vunpack.c.l.b16 %v2148
    %v2173 = vunpack.c.l.b16 %v2149
    %v2174 = vunpack.c.l.b16 %v2150
    %v2175 = vunpack.c.l.b16 %v2151
    %v2176 = vunpack.c.l.b16 %v2152
    %v2177 = vunpack.c.l.b16 %v2153
    %v2178 = vunpack.c.l.b16 %v2154
    %v2179 = vpack.c.b16 %v2172, %v2171
    %v2180 = vpack.c.b16 %v2174, %v2173
    %v2181 = vpack.c.b16 %v2176, %v2175
    %v2182 = vpack.c.b16 %v2178, %v2177
    %v2188 = vsel %vm1144, %v2145, 0
    %2190 = vmatprep.subr.bf16.mxu0 0
    %2191 = vmatpush1.bf16.msra.mxu0 %v2179
    %2192 = vmatprep.subr.bf16.mxu0 0
    %2193 = vmatpush1.bf16.msra.mxu0 %v2180
    %2194 = vmatprep.subr.bf16.mxu0 0
    %2195 = vmatpush1.bf16.msra.mxu0 %v2181
    %2196 = vmatprep.subr.bf16.mxu0 0
    %2197 = vmatpush1.bf16.msra.mxu0 %v2182
    %2198 = vmatprep.subr.bf16.mxu0 0
    %2199 = vmatpush1.bf16.msra.mxu0 0
    %2200 = vmatprep.subr.bf16.mxu0 0
    %2201 = vmatpush1.bf16.msra.mxu0 0
    %2202 = vmatprep.subr.bf16.mxu0 0
    %2203 = vmatpush1.bf16.msra.mxu0 0
    %2204 = vmatprep.subr.bf16.mxu0 0
    %2205 = vmatpush1.bf16.msra.mxu0 0
    %2206 = vmatprep.subr.bf16.mxu0 0
    %2207 = vmatpush1.bf16.msra.mxu0 0
    %2208 = vmatprep.subr.bf16.mxu0 0
    %2209 = vmatpush1.bf16.msra.mxu0 0
    %2210 = vmatprep.subr.bf16.mxu0 0
    %2211 = vmatpush1.bf16.msra.mxu0 0
    %2212 = vmatprep.subr.bf16.mxu0 0
    %2213 = vmatpush1.bf16.msra.mxu0 0
    %2214 = vmatprep.subr.bf16.mxu0 0
    %2215 = vmatpush1.bf16.msra.mxu0 0
    %2216 = vmatprep.subr.bf16.mxu0 0
    %2217 = vmatpush1.bf16.msra.mxu0 0
    %2218 = vmatprep.subr.bf16.mxu0 0
    %2219 = vmatpush1.bf16.msra.mxu0 0
    %2220 = vmatprep.subr.bf16.mxu0 0
    %2221 = vmatpush1.bf16.msra.mxu0 0
    %2222 = vmatprep.mubr.bf16.mxu0 0
    %2223 = vmatmul.mubr.bf16.gmra.mrb[0].mxu0 %v2188
    %v2224 = vpop.f32.mrb[0].mxu0
    %v2225 = vadd.f32 %v2161, %v2224
    %v2226 = vpop.f32.mrb[0].mxu0
    %v2227 = vpop.f32.mrb[0].mxu0
    %v2228 = vadd.f32 %v2161, %v2227
    %v2229 = vpop.f32.mrb[0].mxu0
    %2230 = vdwg.mxu0
    %v2231 = vadd.f32 %v2225, %v2055
    %v2232 = vadd.f32 %v2228, %v2056
    %s2233 = scalar_lea.vmem %s9, 10
    %v2234 = vld [vmem:[%s2233] sm:$0x1]
    %s2235 = scalar_lea.vmem %s9, 11
    %v2236 = vld [vmem:[%s2235] sm:$0x1]
    %v2237 = vsel %vm154, %v2231, 0.0
    %2238 = vadd.xlane.f32.xlu0 %v2237
    %v2239 = vpop.xlane.xlu0 %2238
    %v2240 = vsel %vm154, %v2232, 0.0
    %2241 = vadd.xlane.f32.xlu0 %v2240
    %v2242 = vpop.xlane.xlu0 %2241
    %v2243 = vmul.f32 %v2239, %v161
    %v2244 = vmul.f32 %v2242, %v161
    %v2245 = vmul.f32 %v2231, %v2231
    %v2246 = vmul.f32 %v2232, %v2232
    %v2247 = vsel %vm154, %v2245, 0.0
    %2248 = vadd.xlane.f32.xlu0 %v2247
    %v2249 = vpop.xlane.xlu0 %2248
    %v2250 = vsel %vm154, %v2246, 0.0
    %2251 = vadd.xlane.f32.xlu0 %v2250
    %v2252 = vpop.xlane.xlu0 %2251
    %v2253 = vmul.f32 %v2249, %v161
    %v2254 = vmul.f32 %v2252, %v161
    %v2255 = vmul.f32 %v2243, %v2243
    %v2256 = vmul.f32 %v2244, %v2244
    %v2257 = vsub.f32 %v2253, %v2255
    %v2258 = vsub.f32 %v2254, %v2256
    %v2259 = vmax.f32 %v2257, 0.0
    %v2260 = vmax.f32 %v2258, 0.0
    %v2261 = vsub.f32 %v2231, %v2243
    %v2262 = vsub.f32 %v2232, %v2244
    %v2263 = vadd.f32 %v2259, 1e-12
    %v2264 = vadd.f32 %v2260, 1e-12
    %v2265 = vrsqrt.pop %v2263
    %v2266 = vrsqrt.pop %v2264
    %v2267 = vmul.f32 %v2261, %v2265
    %v2268 = vmul.f32 %v2262, %v2266
    %v2270 = vlaneseq
    %v2271 = vshrl.u32 %v2270, 7
    %v2272 = vsub.s32 0, %v2271
    %v2273 = vrot.slane %v2234, %v2272
    %v2275 = vmul.f32 %v2267, %v2273
    %v2276 = vmul.f32 %v2268, %v2273
    %v2278 = vlaneseq
    %v2279 = vshrl.u32 %v2278, 7
    %v2280 = vsub.s32 0, %v2279
    %v2281 = vrot.slane %v2236, %v2280
    %v2283 = vadd.f32 %v2275, %v2281
    %v2284 = vadd.f32 %v2276, %v2281
    %v2285 = vpack.c.bf16 %v2284, %v2283
    %v2286 = vld [vmem:[%s13] sm:$0xf]
    %v2287 = vld [vmem:[%s13 + $0x4] sm:$0xf]
    %v2288 = vld [vmem:[%s13 + $0x8] sm:$0xf]
    %v2289 = vld [vmem:[%s13 + $0xc] sm:$0xf]
    %v2290 = vld [vmem:[%s14] sm:$0x1]
    %v2292 = vlaneseq
    %v2293 = vshrl.u32 %v2292, 7
    %v2294 = vsub.s32 0, %v2293
    %v2295 = vrot.slane %v2290, %v2294
    %v2301 = vunpack.c.l.b16 %v2286
    %v2302 = vunpack.c.l.b16 %v2287
    %v2303 = vunpack.c.l.b16 %v2288
    %v2304 = vunpack.c.l.b16 %v2289
    %v2305 = vpack.c.b16 %v2302, %v2301
    %v2306 = vpack.c.b16 %v2304, %v2303
    %v2310 = vsel %vm154, %v2285, 0
    %2312 = vmatprep.subr.bf16.mxu0 0
    %2313 = vmatpush1.bf16.msra.mxu0 %v2305
    %2314 = vmatprep.subr.bf16.mxu0 0
    %2315 = vmatpush1.bf16.msra.mxu0 %v2306
    %2316 = vmatprep.subr.bf16.mxu0 0
    %2317 = vmatpush1.bf16.msra.mxu0 0
    %2318 = vmatprep.subr.bf16.mxu0 0
    %2319 = vmatpush1.bf16.msra.mxu0 0
    %2320 = vmatprep.subr.bf16.mxu0 0
    %2321 = vmatpush1.bf16.msra.mxu0 0
    %2322 = vmatprep.subr.bf16.mxu0 0
    %2323 = vmatpush1.bf16.msra.mxu0 0
    %2324 = vmatprep.subr.bf16.mxu0 0
    %2325 = vmatpush1.bf16.msra.mxu0 0
    %2326 = vmatprep.subr.bf16.mxu0 0
    %2327 = vmatpush1.bf16.msra.mxu0 0
    %2328 = vmatprep.subr.bf16.mxu0 0
    %2329 = vmatpush1.bf16.msra.mxu0 0
    %2330 = vmatprep.subr.bf16.mxu0 0
    %2331 = vmatpush1.bf16.msra.mxu0 0
    %2332 = vmatprep.subr.bf16.mxu0 0
    %2333 = vmatpush1.bf16.msra.mxu0 0
    %2334 = vmatprep.subr.bf16.mxu0 0
    %2335 = vmatpush1.bf16.msra.mxu0 0
    %2336 = vmatprep.subr.bf16.mxu0 0
    %2337 = vmatpush1.bf16.msra.mxu0 0
    %2338 = vmatprep.subr.bf16.mxu0 0
    %2339 = vmatpush1.bf16.msra.mxu0 0
    %2340 = vmatprep.subr.bf16.mxu0 0
    %2341 = vmatpush1.bf16.msra.mxu0 0
    %2342 = vmatprep.subr.bf16.mxu0 0
    %2343 = vmatpush1.bf16.msra.mxu0 0
    %2344 = vmatprep.mubr.bf16.mxu0 0
    %2345 = vmatmul.mubr.bf16.gmra.mrb[0].mxu0 %v2310
    %v2346 = vpop.f32.mrb[0].mxu0
    %v2347 = vadd.f32 %v2295, %v2346
    %v2348 = vpop.f32.mrb[0].mxu0
    %v2349 = vpop.f32.mrb[0].mxu0
    %v2350 = vadd.f32 %v2295, %v2349
    %v2351 = vpop.f32.mrb[0].mxu0
    %2352 = vdwg.mxu0
    %vm2353 = vcmp.lt.s32.totalorder %v58, 5
    %v2354 = vsel %vm2353, %v2347, -1e+30
    %v2355 = vsel %vm2353, %v2350, -1e+30
    %2356 = vmax.xlane.f32.xlu0 %v2354
    %v2357 = vpop.xlane.xlu0 %2356
    %2358 = vmax.xlane.f32.xlu0 %v2355
    %v2359 = vpop.xlane.xlu0 %2358
    %v2360 = vsub.f32 %v2354, %v2357
    %v2361 = vsub.f32 %v2355, %v2359
    %v2362 = vmul.f32 %v2360, 1.442695
    %v2363 = vpow.pop %v2362
    %v2364 = vmul.f32 %v2361, 1.442695
    %v2365 = vpow.pop %v2364
    %2366 = vadd.xlane.f32.xlu0 %v2363
    %v2367 = vpop.xlane.xlu0 %2366
    %2368 = vadd.xlane.f32.xlu0 %v2365
    %v2369 = vpop.xlane.xlu0 %2368
    %v2370 = vrcp.pop %v2367
    %v2371 = vrcp.pop %v2369
    %v2372 = vmul.f32 %v2363, %v2370
    %v2373 = vmul.f32 %v2365, %v2371
    %2374 = vst [vmem:[#allocation2] sm:$0xff] %v2372
    %2375 = vst [vmem:[#allocation2 + $0x8] sm:$0xff] %v2373
    %v2376 = vld [vmem:[%s1] sm:$0xff]
    %v2377 = vld [vmem:[%s1 + $0x8] sm:$0xff]
    %2378 = vset.pattern.permute.xlu0 0
    %2379 = vperm.xlu0 %2378, %v2376
    %v2380 = vpop.permute.xlu0 %2379
    %2381 = vset.pattern.permute.xlu0 0
    %2382 = vperm.xlu0 %2381, %v2377
    %v2383 = vpop.permute.xlu0 %2382
    %vm2384 = vcmp.eq.s32.totalorder %v2380, %v58
    %vm2385 = vcmp.eq.s32.totalorder %v2383, %v58
    %v2386 = vsel %vm2384, 1, 0
    %v2387 = vsel %vm2385, 1, 0
    %v2388 = vcvt.s32.f32 %v2386
    %v2389 = vcvt.s32.f32 %v2387
    %v2390 = vlog2.pop %v2367
    %v2391 = vmul.f32 %v2390, 0.6931472
    %v2392 = vlog2.pop %v2369
    %v2393 = vmul.f32 %v2392, 0.6931472
    %v2394 = vsub.f32 %v2360, %v2391
    %v2395 = vsub.f32 %v2361, %v2393
    %v2396 = vmul.f32 %v2388, %v2394
    %v2397 = vmul.f32 %v2389, %v2395
    %2398 = vadd.xlane.f32.xlu0 %v2396
    %v2399 = vpop.xlane.xlu0 %2398
    %2400 = vadd.xlane.f32.xlu0 %v2397
    %v2401 = vpop.xlane.xlu0 %2400
    %v2402 = vsub.f32 0.0, %v2399
    %v2403 = vsub.f32 0.0, %v2401
    %vm2404 = vcmask 7168
    %v2405 = vsel %vm2404, %v2402, 0.0
    %v2406 = vsel %vm2404, %v2403, 0.0
    %v2407 = vadd.f32 %v2405, %v2406
    %2408 = vadd.xlane.f32.xlu0 %v2407
    %v2409 = vpop.xlane.xlu0 %2408
    %v2410 = vrot.slane %v2409, 4
    %v2411 = vadd.f32 %v2409, %v2410
    %v2412 = vrot.slane %v2411, 2
    %v2413 = vadd.f32 %v2411, %v2412
    %v2414 = vrot.slane %v2413, 1
    %v2415 = vadd.f32 %v2413, %v2414
    %s2416 = vtos %v2415
    %s2417 = smul.f32 %s2416, 0.0625
    %s2418 = scalar_lea.smem [#allocation5], 0
    %2419 = sst [smem:[%s2418]] %s2417
    // Predicated region
    $region62: #{tpu_custom_call.1} parent=1 // pred_check
      _
    $region63: #{tpu_custom_call.1} parent=1 // pred_check_branch
      %2421 = sbr.rel (0) target = $region65
    $region64: #{tpu_custom_call.1} parent=1 // pred_region
      %s2423 = ssub.s32 256, 256
      %2424 = vsyncadd [#allocation3], %s2423
      %s2425 = sshll.u32 [#allocation2], 4
      %s2426 = int_to_ptr.vmem [resolvable:$true] %s2425
      %2431 = dma.vmem_to_hbm [thread:$0]  %s2426, 256, %s15, [#allocation3], 128, 128, 8
    $region65: #{tpu_custom_call.1} parent=1 // pred_fallthru
      _
    // Predicated region
    $region66: #{tpu_custom_call.1} parent=1 // pred_check
      _
    $region67: #{tpu_custom_call.1} parent=1 // pred_check_branch
      %2433 = sbr.rel (0) target = $region69
    $region68: #{tpu_custom_call.1} parent=1 // pred_region
      %s2435 = ssub.s32 16, 16
      %2436 = vsyncadd [#allocation4], %s2435
      %2439 = dma.smem_to_hbm [#allocation5], 16, %s16, [#allocation4]
    $region69: #{tpu_custom_call.1} parent=1 // pred_fallthru
      _
    // Predicated region
    $region70: #{tpu_custom_call.1} parent=1 // pred_check
      _
    $region71: #{tpu_custom_call.1} parent=1 // pred_check_branch
      %2441 = sbr.rel (0) target = $region73
    $region72: #{tpu_custom_call.1} parent=1 // pred_region
      %2442 = dma.done [#allocation3], 256
    $region73: #{tpu_custom_call.1} parent=1 // pred_fallthru
      _
    // Predicated region
    $region74: #{tpu_custom_call.1} parent=1 // pred_check
      _
    $region75: #{tpu_custom_call.1} parent=1 // pred_check_branch
      %2444 = sbr.rel (0) target = $region77
    $region76: #{tpu_custom_call.1} parent=1 // pred_region
      %2445 = dma.done [#allocation4], 16
    $region77: #{tpu_custom_call.1} parent=1 // pred_fallthru
      _
    %2446 = sfence
    %2447 = vsyncpa [#allocation3], 1
    %2448 = vsyncpa [#allocation4], 1

</llo_original>
